<compile_context>
chip_gen: v7x
topology: tpu7x:2x2x1
jax: 0.10.0
libtpu: 0.0.40
codegen_flags: <defaults>
</compile_context>

<pallas_src>
import math

import jax
import jax.numpy as jnp
from jax.experimental import pallas as pl
from jax.experimental.pallas import tpu as pltpu


# ~4 MiB of f32 per block.  Live VMEM = 2x double-buffered input + 2x output
# + scale row ~= 17-20 MiB, well under the explicit 48 MiB limit below.
_TILE_BUDGET_ELEMS = 1024 * 1024
# Explicit scoped-VMEM limit: above v5e's 16 MiB default, below v7x's 64 MiB
# physical, far under v5e/v6e's 128 MiB physical.
_VMEM_LIMIT_BYTES = 48 * 1024 * 1024
# Below this size the pallas_call dispatch + single grid step dominates.
_PALLAS_MIN_ELEMS = 64 * 1024


# ---------------------------------------------------------------------------
# Pallas kernel: tanh (EUP) + broadcast multiply by a resident (1, L) row (VPU)
# ---------------------------------------------------------------------------
def _gdn_scale_kernel(x_ref, s_ref, o_ref):
    # x_ref/o_ref: (TILE_R, TILE_L);  s_ref: (1, TILE_L) scale row, constant
    # along the row-grid axis so it is fetched once per lane block.  The
    # divide (non-inverse path) was folded into this multiply in the wrapper,
    # so the EUP only carries tanh and the multiply rides the VPU slot.
    o_ref[...] = jnp.tanh(x_ref[...]) * s_ref[...]


# ---------------------------------------------------------------------------
# Hardware detection (conservative: only positive multi-core detection flips)
# ---------------------------------------------------------------------------
_MULTI_TC_CACHE = None


def _has_multiple_tensorcores():
    """True only if we can positively confirm >1 TensorCore per chip (v7x)."""
    global _MULTI_TC_CACHE
    if _MULTI_TC_CACHE is None:
        flag = False
        try:
            info = pltpu.get_tpu_info()
            for attr in ("num_cores", "core_count", "num_tensorcores",
                         "tensorcores_per_chip", "cores_per_chip"):
                v = getattr(info, attr, None)
                if isinstance(v, int) and v > 1:
                    flag = True
                    break
        except Exception:
            flag = False
        _MULTI_TC_CACHE = flag
    return _MULTI_TC_CACHE


# ---------------------------------------------------------------------------
# Layout / tiling helpers
# ---------------------------------------------------------------------------
def _choose_layout(shape):
    """Lane-dense 2-D flattening of a contiguous NCHW array.

    Returns (rows, lane) with rows * lane == N*C*H*W and `lane` a product of
    trailing dims (pure reshape, W stays innermost) so the per-W beta pattern
    tiles exactly along the lane axis.  Prefers the smallest lane that is a
    multiple of 128 (unmasked full-lane stores), then the smallest lane >=128,
    then a full flatten for tiny arrays.
    """
    n, c, h, w = shape
    candidates = [(n * c * h, w), (n * c, h * w), (n, c * h * w),
                  (1, n * c * h * w)]
    for rows, lane in candidates:            # lane-dense, unmasked vst
        if lane % 128 == 0:
            return rows, lane
    for rows, lane in candidates:            # fallback: some masked lanes
        if lane >= 128:
            return rows, lane
    return candidates[-1]                    # tiny array: full flatten


def _choose_tiles(rows, lane):
    """(tile_r, tile_l): ~4 MiB f32 blocks, (8,128)-aligned or full-extent."""
    budget = _TILE_BUDGET_ELEMS
    # Lane tile: keep the full lane unless even 8 sublanes would blow the
    # budget (huge lane) -- then split the lane axis into 128-aligned chunks
    # handled by a second grid dimension.
    if lane <= 128 or 8 * lane <= budget:
        tile_l = lane
    else:
        tile_l = max(128, ((budget // 8) // 128) * 128)
    # Row tile: as many rows as fit in the budget, sublane-aligned.
    tr = max(1, budget // tile_l)
    if tr >= rows:
        tile_r = rows                        # single block covers all rows
    else:
        tile_r = max(8, (tr // 8) * 8)       # multiple of 8 rows
    return tile_r, tile_l


# ---------------------------------------------------------------------------
# One octave branch: tanh + beta scaling broadcast over the LAST axis (W)
# ---------------------------------------------------------------------------
def _octave_gdn_branch(x, beta_slice, inverse):
    """x: (N, C, H, W) f32.  beta_slice: (L,) with L == W or L == 1
    (replicates the PyTorch forward's last-axis broadcast)."""
    n, c, h, w = x.shape
    lb = beta_slice.shape[0]
    assert lb in (1, w), (
        f"PyTorch forward broadcasts the beta slice (len={lb}) against the "
        f"last axis W={w}; shapes must be broadcast-compatible."
    )

    # Tiny branch: skip the kernel launch, XLA fused elementwise is optimal.
    if x.size < _PALLAS_MIN_ELEMS:
        b = beta_slice.astype(x.dtype)
        return jnp.tanh(x) * b if inverse else jnp.tanh(x) / b

    # Per-W scale factor; fold the divide into a multiply (1/beta computed
    # once on a length-W vector instead of per element inside the kernel).
    scale_w = jnp.broadcast_to(beta_slice.astype(x.dtype), (w,))
    if not inverse:
        scale_w = (1.0 / scale_w).astype(x.dtype)

    rows, lane = _choose_layout(x.shape)
    tile_r, tile_l = _choose_tiles(rows, lane)

    x2 = x.reshape(rows, lane)                                  # free reshape
    scale_row = jnp.tile(scale_w, lane // w).reshape(1, lane)   # (1, lane)

    grid = (pl.cdiv(rows, tile_r), pl.cdiv(lane, tile_l))
    if _has_multiple_tensorcores():
        # v7x: actually shard the row grid across the two TensorCores.
        dims = (pltpu.CORE_PARALLEL, pltpu.ARBITRARY)
    else:
        dims = (pltpu.PARALLEL, pltpu.ARBITRARY)

    out = pl.pallas_call(
        _gdn_scale_kernel,
        out_shape=jax.ShapeDtypeStruct((rows, lane), x.dtype),
        grid=grid,
        in_specs=[
            # activation block: row x lane tiled, software-pipelined
            pl.BlockSpec((tile_r, tile_l), lambda i, j: (i, j)),
            # scale row: constant along the row axis -> resident per lane block
            pl.BlockSpec((1, tile_l), lambda i, j: (0, j)),
        ],
        out_specs=pl.BlockSpec((tile_r, tile_l), lambda i, j: (i, j)),
        compiler_params=pltpu.CompilerParams(
            dimension_semantics=dims,
            vmem_limit_bytes=_VMEM_LIMIT_BYTES,
        ),
    )(x2, scale_row)
    return out.reshape(n, c, h, w)


# ---------------------------------------------------------------------------
# OctaveGDN module (parameters built deterministically like the PyTorch code)
# ---------------------------------------------------------------------------
class OctaveGDN:
    def __init__(self, ch, inverse=False, beta_min=1e-06, gamma_init=0.1,
                 reparam_offset=2 ** (-18),
                 alpha_in=(0, 0.25, 1), alpha_out=(0, 0.25, 1)):
        self.inverse = inverse
        self.beta_min = beta_min
        self.gamma_init = gamma_init
        self.reparam_offset = reparam_offset
        self.pedestal = reparam_offset ** 2
        self.beta_bound = math.sqrt(beta_min + reparam_offset ** 2 + self.pedestal)
        self.gamma_bound = reparam_offset

        # beta = sqrt(ones(ch) + pedestal)  -- same init as the PyTorch build()
        self.beta = jnp.sqrt(jnp.ones((ch,), jnp.float32) + self.pedestal)
        # gamma = sqrt(gamma_init * eye(ch) + pedestal)  (unused in forward)
        self.gamma = jnp.sqrt(gamma_init * jnp.eye(ch, dtype=jnp.float32)
                              + self.pedestal)
        self.alpha_in = list(alpha_in)
        self.alpha_out = list(alpha_out)
        self.in_branch = len(self.alpha_in) - 1
        self.out_branch = len(self.alpha_out) - 1
        # `bals` is an uninitialized nn.Parameter in PyTorch, never used in
        # forward; give it deterministic zeros here.
        self.bals = jnp.zeros((self.out_branch, ch), jnp.float32)

    def __call__(self, x):
        x_h, x_l = x
        ch1 = x_h.shape[1]
        beta_h = self.beta[:ch1]      # shape (ch1,)
        beta_l = self.beta[ch1:-1]    # shape (ch - ch1 - 1,)  (exact PyTorch slice)
        y_h = _octave_gdn_branch(x_h, beta_h, self.inverse)
        y_l = _octave_gdn_branch(x_l, beta_l, self.inverse)
        return (y_h, y_l)


# ---------------------------------------------------------------------------
# Pure-JAX reference (mirrors the PyTorch forward op-for-op)
# ---------------------------------------------------------------------------
def _reference_forward(x, beta, inverse):
    x_h, x_l = x
    x_h = jnp.tanh(x_h)
    x_l = jnp.tanh(x_l)
    ch1 = x_h.shape[1]
    b_h = beta[:ch1]
    b_l = beta[ch1:-1]
    if inverse:
        return x_h * b_h, x_l * b_l
    return x_h / b_h, x_l / b_l


if __name__ == "__main__":
    # Shapes chosen so the PyTorch last-axis broadcast is valid:
    #   high branch: W_h == ch1           (beta[:ch1]   has len ch1)
    #   low  branch: W_l == ch - ch1 - 1  (beta[ch1:-1] has len ch-ch1-1)
    ch = 13
    ch1 = 8
    N, H, W = 2, 8, 8                # x_h : (2, 8, 8, 8)
    ch_l, H_l, W_l = ch - ch1, 4, 4  # x_l : (2, 5, 4, 4)

    key = jax.random.PRNGKey(0)
    k1, k2, k3, k4 = jax.random.split(key, 4)
    x_h = jax.random.normal(k1, (N, ch1, H, W), dtype=jnp.float32)
    x_l = jax.random.normal(k2, (N, ch_l, H_l, W_l), dtype=jnp.float32)

    # --- forward (divisive) path -------------------------------------------
    mod = OctaveGDN(ch, inverse=False)
    y_h, y_l = mod((x_h, x_l))
    jax.block_until_ready((y_h, y_l))
    r_h, r_l = _reference_forward((x_h, x_l), mod.beta, mod.inverse)
    assert y_h.shape == x_h.shape and y_l.shape == x_l.shape
    assert jnp.allclose(y_h, r_h, atol=1e-5, rtol=1e-5)
    assert jnp.allclose(y_l, r_l, atol=1e-5, rtol=1e-5)

    # --- inverse (multiplicative) path -------------------------------------
    mod_inv = OctaveGDN(ch, inverse=True)
    yi_h, yi_l = mod_inv((x_h, x_l))
    jax.block_until_ready((yi_h, yi_l))
    ri_h, ri_l = _reference_forward((x_h, x_l), mod_inv.beta, True)
    assert jnp.allclose(yi_h, ri_h, atol=1e-5, rtol=1e-5)
    assert jnp.allclose(yi_l, ri_l, atol=1e-5, rtol=1e-5)

    # --- larger branch: Pallas path with a multi-step row grid and a partial
    #     trailing row block (rows=10240, 8192-row / ~4 MiB blocks) ----------
    xb = jax.random.normal(k3, (4, 32, 80, 128), dtype=jnp.float32)
    bb = jnp.sqrt(jnp.ones((128,), jnp.float32) + mod.pedestal) * 1.25
    yb = _octave_gdn_branch(xb, bb, inverse=False)
    jax.block_until_ready(yb)
    rb = jnp.tanh(xb) / bb
    assert jnp.allclose(yb, rb, atol=1e-5, rtol=1e-5)

    # --- huge-lane branch (W >> 128): exercises the lane-axis grid split that
    #     keeps blocks ~4 MiB and the resident scale row within budget -------
    xc = jax.random.normal(k4, (2, 2, 2, 163840), dtype=jnp.float32)
    bc = jnp.full((1,), 1.3, dtype=jnp.float32)
    yc = _octave_gdn_branch(xc, bc, inverse=True)
    jax.block_until_ready(yc)
    rc = jnp.tanh(xc) * bc
    assert jnp.allclose(yc, rc, atol=1e-5, rtol=1e-5)

    print("KERNEL_OK")
</pallas_src>

<mosaic_0001>
module attributes {stable_mosaic.version = 11 : i64} {
  func.func @_gdn_scale_kernel(%arg0: i32, %arg1: i32, %arg2: memref<8192x128xf32, #tpu.memory_space<vmem>>, %arg3: memref<1x128xf32, #tpu.memory_space<vmem>>, %arg4: memref<8192x128xf32, #tpu.memory_space<vmem>>) attributes {dimension_semantics = [#tpu.dimension_semantics<parallel>, #tpu.dimension_semantics<arbitrary>], iteration_bounds = array<i64: 2, 1>, scalar_prefetch = 0 : i64, scratch_operands = 0 : i64, tpu.core_type = #tpu.core_type<tc>, window_params = [{transform_indices = @transform_0, window_bounds = array<i64: 8192, 128>}, {transform_indices = @transform_1, window_bounds = array<i64: 1, 128>}, {transform_indices = @transform_2, window_bounds = array<i64: 8192, 128>}]} {
    %c0 = arith.constant 0 : index
    %c0_0 = arith.constant 0 : index
    %0 = vector.load %arg2[%c0, %c0_0] : memref<8192x128xf32, #tpu.memory_space<vmem>>, vector<8192x128xf32>
    %1 = math.tanh %0 : vector<8192x128xf32>
    %c0_1 = arith.constant 0 : index
    %c0_2 = arith.constant 0 : index
    %2 = vector.load %arg3[%c0_1, %c0_2] : memref<1x128xf32, #tpu.memory_space<vmem>>, vector<1x128xf32>
    %3 = vector.broadcast %2 : vector<1x128xf32> to vector<8192x128xf32>
    %4 = arith.mulf %1, %3 : vector<8192x128xf32>
    %c0_3 = arith.constant 0 : index
    %c0_4 = arith.constant 0 : index
    %5 = vector.load %arg4[%c0_3, %c0_4] : memref<8192x128xf32, #tpu.memory_space<vmem>>, vector<8192x128xf32>
    tpu.vector_store %arg4[%c0_3, %c0_4], %4 {strides = array<i32>} : memref<8192x128xf32, #tpu.memory_space<vmem>>, vector<8192x128xf32>,
    return
  }
  func.func @transform_0(%arg0: i32, %arg1: i32) -> (i32, i32) {
    %c0_i32 = arith.constant 0 : i32
    return %arg0, %arg1 : i32, i32
  }
  func.func @transform_1(%arg0: i32, %arg1: i32) -> (i32, i32) {
    %c0_i32 = arith.constant 0 : i32
    %c0_i32_0 = arith.constant 0 : i32
    return %c0_i32, %arg1 : i32, i32
  }
  func.func @transform_2(%arg0: i32, %arg1: i32) -> (i32, i32) {
    %c0_i32 = arith.constant 0 : i32
    return %arg0, %arg1 : i32, i32
  }
}

</mosaic_0001>

<llo_original>
// kernel: tpu_custom_call.1
$region0: #{tpu_custom_call.1}
  #allocation0 [shape = 'u32[]', space=smem, size = 0x4, offset = 0x4, fixed_abs, tag = 'smem constant byte address 0x4 - core index']
  #allocation1 [shape = 'u32[144,128]{1,0:T(1,128)}', space=vmem, size = 0x12000, scoped, tag = 'internal scratch']
  %s0 = inlined_call_operand.hbm [shape: f32[10240,128], index: 0, kind: input, shape index: {}]
  %s1 = inlined_call_operand.hbm [shape: f32[1,128], index: 1, kind: input, shape index: {}]
  %s2 = inlined_call_operand.hbm [shape: f32[10240,128], index: 2, kind: output, shape index: {}]
  %s3 = sld [smem:[#allocation0]]
  $region49: #{tpu_custom_call.1} parent=0
    _
  %s5 = ssub.s32 1, %s3
  %s6 = scalar_select 0, %s5, %s3
  $region1: #{tpu_custom_call.1} parent=0
    #allocation2 [shape = 'u8[8388608]{0}', space=vmem, size = 0x800000, scoped, tag = 'input window, operand 0']
    #allocation3 [shape = 's32[2]{0}', space=sflag, size = 0x8, scoped, tag = 'scoped memory for tpu_custom_call.1']
    #allocation4 [shape = 's32[2]{0}', space=sflag, size = 0x8, scoped, tag = 'scoped memory for tpu_custom_call.1']
    #allocation5 [shape = 'u8[512]{0}', space=vmem, size = 0x400, scoped, tag = 'input window, operand 1, single buffered']
    #allocation6 [shape = 's32[1]{0}', space=sflag, size = 0x4, scoped, tag = 'scoped memory for tpu_custom_call.1']
    #allocation7 [shape = 'u8[8388608]{0}', space=vmem, size = 0x800000, scoped, tag = 'output window, operand 0']
    %7 = vsyncpa [#allocation3], 0
    %s8 = scalar_lea.sflag [#allocation3], 1
    %9 = vsyncpa %s8, 0
    %10 = vsyncpa [#allocation6], 0
    %11 = vsyncpa [#allocation4], 0
    %s12 = scalar_lea.sflag [#allocation4], 1
    %13 = vsyncpa %s12, 0
    loop: start=0, step=1, limit=4
    $region2: #{tpu_custom_call.1} parent=1 // loop_pre_header
      _
    $region3: #{tpu_custom_call.1} parent=1 // loop_header
      %s15 = sphi 0, %s19
      %p16 = scmp.ge.s32.totalorder %s15, 4
      %s22 = sphi 0, %s34
      %s23 = sphi 0, %s30
      %s24 = sphi 0, %s22
      %s25 = sphi 0, %s23
      %s26 = sphi 0, %s24
      %s27 = sphi 0, %s25
      %s39 = sphi 0, %s41
      %s42 = sphi 0, %s39
      %s43 = sphi 0, %s42
      %s59 = sphi 0, %s43
      %s65 = sphi 0, %s67
      %s68 = sphi 0, %s65
      %s69 = sphi 0, %s68
      %s85 = sphi 0, %s69
      %s93 = sphi 0, %s95
      %s96 = sphi 0, %s93
      %s97 = sphi 0, %s96
      %s113 = sphi 0, %s97
    $region4: #{tpu_custom_call.1} parent=1 // loop_header_branch
      %18 = sbr.rel (%p16) target = $region8
    $region5: #{tpu_custom_call.1} parent=1 // loop_body
      %s20 = ssub.s32 %s15, 1
      %s21 = ssub.s32 %s15, 2
      %s28 = sadd.s32 1, %s23
      %p29 = scmp.ge.s32.totalorder %s28, 1
      %s30 = scalar_select %p29, 0, %s28
      %s31 = sadd.s32 1, %s22
      %s32 = scalar_select %p29, %s31, %s22
      %p33 = scmp.ge.s32.totalorder %s32, 2
      %s34 = scalar_select %p33, 0, %s32
      %s35 = ssub.s32 %s22, %s34
      %s36 = ssub.s32 %s23, %s30
      %s37 = sor.u32 %s35, %s36
      %p38 = scmp.eq.s32.totalorder %s37, 0
      %s40 = sadd.s32 %s39, 1
      %s41 = scalar_select %p38, %s39, %s40
      %p44 = pneg %p38
      %p45 = scmp.eq.s32.totalorder %s15, 1
      %p46 = por %p44, %p45
      %p47 = scmp.ne.s32.totalorder %s39, %s42
      %p48 = scmp.eq.s32.totalorder %s15, 0
      %p49 = por %p47, %p48
      %p50 = scmp.ne.s32.totalorder %s39, %s42
      %p51 = scmp.eq.s32.totalorder %s20, 1
      %p52 = por %p50, %p51
      %p53 = scmp.ne.s32.totalorder %s42, %s43
      %p54 = scmp.eq.s32.totalorder %s20, 0
      %p55 = por %p53, %p54
      %p56 = scmp.ne.s32.totalorder %s42, %s43
      %p57 = scmp.eq.s32.totalorder %s21, 1
      %p58 = por %p56, %p57
      %p60 = scmp.ne.s32.totalorder %s43, %s59
      %p61 = scmp.eq.s32.totalorder %s21, 0
      %p62 = por %p60, %p61
      %s63 = ssub.s32 %s23, %s30
      %p64 = scmp.eq.s32.totalorder %s63, 0
      %s66 = sadd.s32 %s65, 1
      %s67 = scalar_select %p64, %s65, %s66
      %p70 = pneg %p64
      %p71 = scmp.eq.s32.totalorder %s15, 1
      %p72 = por %p70, %p71
      %p73 = scmp.ne.s32.totalorder %s65, %s68
      %p74 = scmp.eq.s32.totalorder %s15, 0
      %p75 = por %p73, %p74
      %p76 = scmp.ne.s32.totalorder %s65, %s68
      %p77 = scmp.eq.s32.totalorder %s20, 1
      %p78 = por %p76, %p77
      %p79 = scmp.ne.s32.totalorder %s68, %s69
      %p80 = scmp.eq.s32.totalorder %s20, 0
      %p81 = por %p79, %p80
      %p82 = scmp.ne.s32.totalorder %s68, %s69
      %p83 = scmp.eq.s32.totalorder %s21, 1
      %p84 = por %p82, %p83
      %p86 = scmp.ne.s32.totalorder %s69, %s85
      %p87 = scmp.eq.s32.totalorder %s21, 0
      %p88 = por %p86, %p87
      %s89 = ssub.s32 %s22, %s34
      %s90 = ssub.s32 %s23, %s30
      %s91 = sor.u32 %s89, %s90
      %p92 = scmp.eq.s32.totalorder %s91, 0
      %s94 = sadd.s32 %s93, 1
      %s95 = scalar_select %p92, %s93, %s94
      %p98 = pneg %p92
      %p99 = scmp.eq.s32.totalorder %s15, 1
      %p100 = por %p98, %p99
      %p101 = scmp.ne.s32.totalorder %s93, %s96
      %p102 = scmp.eq.s32.totalorder %s15, 0
      %p103 = por %p101, %p102
      %p104 = scmp.ne.s32.totalorder %s93, %s96
      %p105 = scmp.eq.s32.totalorder %s20, 1
      %p106 = por %p104, %p105
      %p107 = scmp.ne.s32.totalorder %s96, %s97
      %p108 = scmp.eq.s32.totalorder %s20, 0
      %p109 = por %p107, %p108
      %p110 = scmp.ne.s32.totalorder %s96, %s97
      %p111 = scmp.eq.s32.totalorder %s21, 1
      %p112 = por %p110, %p111
      %p114 = scmp.ne.s32.totalorder %s97, %s113
      %p115 = scmp.eq.s32.totalorder %s21, 0
      %p116 = por %p114, %p115
      %p117 = scmp.le.s32.totalorder 1, %s15
      %p118 = scmp.lt.s32.totalorder %s15, 3
      %p119 = pnand %p117, %p118
      %p120 = pneg %p119
      // Predicated region
      $region9: #{tpu_custom_call.1} parent=5 // pred_check
        _
      $region10: #{tpu_custom_call.1} parent=5 // pred_check_branch
        %122 = sbr.rel (%p119) target = $region12
      $region11: #{tpu_custom_call.1} parent=5 // pred_region
        %s123 = ssub.s32 %s15, 1
        // Predicated region
        $region13: #{tpu_custom_call.1} parent=11 // pred_check
          %p124 = pneg %p81
        $region14: #{tpu_custom_call.1} parent=11 // pred_check_branch
          %126 = sbr.rel (%p124) target = $region16
        $region15: #{tpu_custom_call.1} parent=11 // pred_region
          %s128 = ssub.s32 16, 16
          %129 = vsyncadd [#allocation6], %s128
          %s130 = smul.addr %s25, 16
          %s131 = scalar_lea.hbm %s1, %s130
          %s133 = sshll.u32 [#allocation5], 4
          %s134 = int_to_ptr.vmem [resolvable:$true] %s133
          %136 = dma.hbm_to_vmem [thread:$0]  %s131, 16, %s134, [#allocation6]
        $region16: #{tpu_custom_call.1} parent=11 // pred_fallthru
          _
      $region12: #{tpu_custom_call.1} parent=5 // pred_fallthru
        _
      %p137 = scmp.lt.s32.totalorder %s15, 2
      // Predicated region
      $region17: #{tpu_custom_call.1} parent=5 // pred_check
        %p138 = pneg %p137
      $region18: #{tpu_custom_call.1} parent=5 // pred_check_branch
        %140 = sbr.rel (%p138) target = $region20
      $region19: #{tpu_custom_call.1} parent=5 // pred_region
        // Predicated region
        $region21: #{tpu_custom_call.1} parent=19 // pred_check
          %p141 = pneg %p49
        $region22: #{tpu_custom_call.1} parent=19 // pred_check_branch
          %143 = sbr.rel (%p141) target = $region24
        $region23: #{tpu_custom_call.1} parent=19 // pred_region
          %s144 = sand.u32 %s39, 1
          %s145 = scalar_lea.sflag [#allocation3], %s144
          %s146 = sand.u32 %s39, 1
          %s147 = smul.addr %s146, 8192
          %s148 = scalar_lea.vmem [#allocation2], %s147
          %s149 = smul.u32 1024, %s22
          %s150 = ssub.s32 1280, %s149
          %p151 = scmp.lt.s32.totalorder %s150, 1024
          %s152 = scalar_select %p151, %s150, 1024
          %s153 = smul.u32 128, %s152
          %s155 = ssub.s32 131072, %s153
          %156 = vsyncadd %s145, %s155
          %p157 = scmp.ne.s32.totalorder 0, %s153
          %s158 = sadd.s32 %s23, %s149
          %s159 = smul.addr %s158, 128
          %s160 = scalar_lea.hbm %s0, %s159
          %s161 = smul.u32 8, %s152
          %s162 = sshll.u32 %s148, 4
          %s163 = int_to_ptr.vmem [resolvable:$true] %s162
          %s164 = sshll.u32 %s161, 4
          %168 = dma.hbm_to_vmem [thread:$0]  (%p157), %s160, %s164, %s163, %s145, 128, 128, 8
        $region24: #{tpu_custom_call.1} parent=19 // pred_fallthru
          _
      $region20: #{tpu_custom_call.1} parent=5 // pred_fallthru
        _
      %p169 = scmp.le.s32.totalorder 1, %s15
      %p170 = scmp.lt.s32.totalorder %s15, 3
      %p171 = pnand %p169, %p170
      %p172 = pneg %p171
      // Predicated region
      $region25: #{tpu_custom_call.1} parent=5 // pred_check
        _
      $region26: #{tpu_custom_call.1} parent=5 // pred_check_branch
        %174 = sbr.rel (%p171) target = $region28
      $region27: #{tpu_custom_call.1} parent=5 // pred_region
        %s175 = ssub.s32 %s15, 1
        %s176 = sand.u32 %s42, 1
        %s177 = scalar_lea.sflag [#allocation3], %s176
        %s178 = sand.u32 %s42, 1
        %s179 = smul.addr %s178, 8192
        %s180 = scalar_lea.vmem [#allocation2], %s179
        // Predicated region
        $region29: #{tpu_custom_call.1} parent=27 // pred_check
          %p181 = pneg %p55
        $region30: #{tpu_custom_call.1} parent=27 // pred_check_branch
          %183 = sbr.rel (%p181) target = $region32
        $region31: #{tpu_custom_call.1} parent=27 // pred_region
          %184 = dma.done %s177, 131072
        $region32: #{tpu_custom_call.1} parent=27 // pred_fallthru
          _
        // Predicated region
        $region33: #{tpu_custom_call.1} parent=27 // pred_check
          %p185 = pneg %p81
        $region34: #{tpu_custom_call.1} parent=27 // pred_check_branch
          %187 = sbr.rel (%p185) target = $region36
        $region35: #{tpu_custom_call.1} parent=27 // pred_region
          %188 = dma.done [#allocation6], 16
        $region36: #{tpu_custom_call.1} parent=27 // pred_fallthru
          _
        %s189 = sand.u32 %s42, 1
        %s190 = scalar_lea.sflag [#allocation3], %s189
        %s191 = sand.u32 %s42, 1
        %s192 = smul.addr %s191, 8192
        %s193 = scalar_lea.vmem [#allocation2], %s192
        %p194 = pneg %p55
        %p195 = pneg %p52
        %p196 = pneg %p81
        %p197 = pneg %p78
        %p198 = pneg %p109
        %p199 = pneg %p106
        %s200 = sand.u32 %s96, 1
        %s201 = scalar_lea.sflag [#allocation4], %s200
        %s202 = sand.u32 %s96, 1
        %s203 = smul.addr %s202, 8192
        %s204 = scalar_lea.vmem [#allocation7], %s203
        %s205 = smul.u32 1024, %s24
        %s206 = ssub.s32 1280, %s205
        %p207 = scmp.lt.s32.totalorder %s206, 1024
        %s208 = scalar_select %p207, %s206, 1024
        %s209 = smul.u32 128, %s208
        %s210 = smul.u32 1024, %s24
        %s211 = ssub.s32 1280, %s210
        %p212 = scmp.lt.s32.totalorder %s211, 1024
        %s213 = scalar_select %p212, %s211, 1024
        %s214 = smul.u32 128, %s213
        %v215 = vld [vmem:[%s180] sm:$0xff]
        %v216 = vld [vmem:[%s180 + $0x8] sm:$0xff]
        %v217 = vld [vmem:[%s180 + $0x10] sm:$0xff]
        %v218 = vld [vmem:[%s180 + $0x18] sm:$0xff]
        %v219 = vld [vmem:[%s180 + $0x20] sm:$0xff]
        %v220 = vld [vmem:[%s180 + $0x28] sm:$0xff]
        %v221 = vld [vmem:[%s180 + $0x30] sm:$0xff]
        %v222 = vld [vmem:[%s180 + $0x38] sm:$0xff]
        %v223 = vld [vmem:[%s180 + $0x40] sm:$0xff]
        %v224 = vld [vmem:[%s180 + $0x48] sm:$0xff]
        %v225 = vld [vmem:[%s180 + $0x50] sm:$0xff]
        %v226 = vld [vmem:[%s180 + $0x58] sm:$0xff]
        %v227 = vld [vmem:[%s180 + $0x60] sm:$0xff]
        %v228 = vld [vmem:[%s180 + $0x68] sm:$0xff]
        %v229 = vld [vmem:[%s180 + $0x70] sm:$0xff]
        %v230 = vld [vmem:[%s180 + $0x78] sm:$0xff]
        %v231 = vld [vmem:[%s180 + $0x80] sm:$0xff]
        %v232 = vld [vmem:[%s180 + $0x88] sm:$0xff]
        %v233 = vld [vmem:[%s180 + $0x90] sm:$0xff]
        %v234 = vld [vmem:[%s180 + $0x98] sm:$0xff]
        %v235 = vld [vmem:[%s180 + $0xa0] sm:$0xff]
        %v236 = vld [vmem:[%s180 + $0xa8] sm:$0xff]
        %v237 = vld [vmem:[%s180 + $0xb0] sm:$0xff]
        %v238 = vld [vmem:[%s180 + $0xb8] sm:$0xff]
        %v239 = vld [vmem:[%s180 + $0xc0] sm:$0xff]
        %v240 = vld [vmem:[%s180 + $0xc8] sm:$0xff]
        %v241 = vld [vmem:[%s180 + $0xd0] sm:$0xff]
        %v242 = vld [vmem:[%s180 + $0xd8] sm:$0xff]
        %v243 = vld [vmem:[%s180 + $0xe0] sm:$0xff]
        %v244 = vld [vmem:[%s180 + $0xe8] sm:$0xff]
        %v245 = vld [vmem:[%s180 + $0xf0] sm:$0xff]
        %v246 = vld [vmem:[%s180 + $0xf8] sm:$0xff]
        %v247 = vld [vmem:[%s180 + $0x100] sm:$0xff]
        %v248 = vld [vmem:[%s180 + $0x108] sm:$0xff]
        %v249 = vld [vmem:[%s180 + $0x110] sm:$0xff]
        %v250 = vld [vmem:[%s180 + $0x118] sm:$0xff]
        %v251 = vld [vmem:[%s180 + $0x120] sm:$0xff]
        %v252 = vld [vmem:[%s180 + $0x128] sm:$0xff]
        %v253 = vld [vmem:[%s180 + $0x130] sm:$0xff]
        %v254 = vld [vmem:[%s180 + $0x138] sm:$0xff]
        %v255 = vld [vmem:[%s180 + $0x140] sm:$0xff]
        %v256 = vld [vmem:[%s180 + $0x148] sm:$0xff]
        %v257 = vld [vmem:[%s180 + $0x150] sm:$0xff]
        %v258 = vld [vmem:[%s180 + $0x158] sm:$0xff]
        %v259 = vld [vmem:[%s180 + $0x160] sm:$0xff]
        %v260 = vld [vmem:[%s180 + $0x168] sm:$0xff]
        %v261 = vld [vmem:[%s180 + $0x170] sm:$0xff]
        %v262 = vld [vmem:[%s180 + $0x178] sm:$0xff]
        %v263 = vld [vmem:[%s180 + $0x180] sm:$0xff]
        %v264 = vld [vmem:[%s180 + $0x188] sm:$0xff]
        %v265 = vld [vmem:[%s180 + $0x190] sm:$0xff]
        %v266 = vld [vmem:[%s180 + $0x198] sm:$0xff]
        %v267 = vld [vmem:[%s180 + $0x1a0] sm:$0xff]
        %v268 = vld [vmem:[%s180 + $0x1a8] sm:$0xff]
        %v269 = vld [vmem:[%s180 + $0x1b0] sm:$0xff]
        %v270 = vld [vmem:[%s180 + $0x1b8] sm:$0xff]
        %v271 = vld [vmem:[%s180 + $0x1c0] sm:$0xff]
        %v272 = vld [vmem:[%s180 + $0x1c8] sm:$0xff]
        %v273 = vld [vmem:[%s180 + $0x1d0] sm:$0xff]
        %v274 = vld [vmem:[%s180 + $0x1d8] sm:$0xff]
        %v275 = vld [vmem:[%s180 + $0x1e0] sm:$0xff]
        %v276 = vld [vmem:[%s180 + $0x1e8] sm:$0xff]
        %v277 = vld [vmem:[%s180 + $0x1f0] sm:$0xff]
        %v278 = vld [vmem:[%s180 + $0x1f8] sm:$0xff]
        %v279 = vld [vmem:[%s180 + $0x200] sm:$0xff]
        %v280 = vld [vmem:[%s180 + $0x208] sm:$0xff]
        %v281 = vld [vmem:[%s180 + $0x210] sm:$0xff]
        %v282 = vld [vmem:[%s180 + $0x218] sm:$0xff]
        %v283 = vld [vmem:[%s180 + $0x220] sm:$0xff]
        %v284 = vld [vmem:[%s180 + $0x228] sm:$0xff]
        %v285 = vld [vmem:[%s180 + $0x230] sm:$0xff]
        %v286 = vld [vmem:[%s180 + $0x238] sm:$0xff]
        %v287 = vld [vmem:[%s180 + $0x240] sm:$0xff]
        %v288 = vld [vmem:[%s180 + $0x248] sm:$0xff]
        %v289 = vld [vmem:[%s180 + $0x250] sm:$0xff]
        %v290 = vld [vmem:[%s180 + $0x258] sm:$0xff]
        %v291 = vld [vmem:[%s180 + $0x260] sm:$0xff]
        %v292 = vld [vmem:[%s180 + $0x268] sm:$0xff]
        %v293 = vld [vmem:[%s180 + $0x270] sm:$0xff]
        %v294 = vld [vmem:[%s180 + $0x278] sm:$0xff]
        %v295 = vld [vmem:[%s180 + $0x280] sm:$0xff]
        %v296 = vld [vmem:[%s180 + $0x288] sm:$0xff]
        %v297 = vld [vmem:[%s180 + $0x290] sm:$0xff]
        %v298 = vld [vmem:[%s180 + $0x298] sm:$0xff]
        %v299 = vld [vmem:[%s180 + $0x2a0] sm:$0xff]
        %v300 = vld [vmem:[%s180 + $0x2a8] sm:$0xff]
        %v301 = vld [vmem:[%s180 + $0x2b0] sm:$0xff]
        %v302 = vld [vmem:[%s180 + $0x2b8] sm:$0xff]
        %v303 = vld [vmem:[%s180 + $0x2c0] sm:$0xff]
        %v304 = vld [vmem:[%s180 + $0x2c8] sm:$0xff]
        %v305 = vld [vmem:[%s180 + $0x2d0] sm:$0xff]
        %v306 = vld [vmem:[%s180 + $0x2d8] sm:$0xff]
        %v307 = vld [vmem:[%s180 + $0x2e0] sm:$0xff]
        %v308 = vld [vmem:[%s180 + $0x2e8] sm:$0xff]
        %v309 = vld [vmem:[%s180 + $0x2f0] sm:$0xff]
        %v310 = vld [vmem:[%s180 + $0x2f8] sm:$0xff]
        %v311 = vld [vmem:[%s180 + $0x300] sm:$0xff]
        %v312 = vld [vmem:[%s180 + $0x308] sm:$0xff]
        %v313 = vld [vmem:[%s180 + $0x310] sm:$0xff]
        %v314 = vld [vmem:[%s180 + $0x318] sm:$0xff]
        %v315 = vld [vmem:[%s180 + $0x320] sm:$0xff]
        %v316 = vld [vmem:[%s180 + $0x328] sm:$0xff]
        %v317 = vld [vmem:[%s180 + $0x330] sm:$0xff]
        %v318 = vld [vmem:[%s180 + $0x338] sm:$0xff]
        %v319 = vld [vmem:[%s180 + $0x340] sm:$0xff]
        %v320 = vld [vmem:[%s180 + $0x348] sm:$0xff]
        %v321 = vld [vmem:[%s180 + $0x350] sm:$0xff]
        %v322 = vld [vmem:[%s180 + $0x358] sm:$0xff]
        %v323 = vld [vmem:[%s180 + $0x360] sm:$0xff]
        %v324 = vld [vmem:[%s180 + $0x368] sm:$0xff]
        %v325 = vld [vmem:[%s180 + $0x370] sm:$0xff]
        %v326 = vld [vmem:[%s180 + $0x378] sm:$0xff]
        %v327 = vld [vmem:[%s180 + $0x380] sm:$0xff]
        %v328 = vld [vmem:[%s180 + $0x388] sm:$0xff]
        %v329 = vld [vmem:[%s180 + $0x390] sm:$0xff]
        %v330 = vld [vmem:[%s180 + $0x398] sm:$0xff]
        %v331 = vld [vmem:[%s180 + $0x3a0] sm:$0xff]
        %v332 = vld [vmem:[%s180 + $0x3a8] sm:$0xff]
        %v333 = vld [vmem:[%s180 + $0x3b0] sm:$0xff]
        %v334 = vld [vmem:[%s180 + $0x3b8] sm:$0xff]
        %v335 = vld [vmem:[%s180 + $0x3c0] sm:$0xff]
        %v336 = vld [vmem:[%s180 + $0x3c8] sm:$0xff]
        %v337 = vld [vmem:[%s180 + $0x3d0] sm:$0xff]
        %v338 = vld [vmem:[%s180 + $0x3d8] sm:$0xff]
        %v339 = vld [vmem:[%s180 + $0x3e0] sm:$0xff]
        %v340 = vld [vmem:[%s180 + $0x3e8] sm:$0xff]
        %v341 = vld [vmem:[%s180 + $0x3f0] sm:$0xff]
        %v342 = vld [vmem:[%s180 + $0x3f8] sm:$0xff]
        %v343 = vld [vmem:[%s180 + $0x400] sm:$0xff]
        %v344 = vld [vmem:[%s180 + $0x408] sm:$0xff]
        %v345 = vld [vmem:[%s180 + $0x410] sm:$0xff]
        %v346 = vld [vmem:[%s180 + $0x418] sm:$0xff]
        %v347 = vld [vmem:[%s180 + $0x420] sm:$0xff]
        %v348 = vld [vmem:[%s180 + $0x428] sm:$0xff]
        %v349 = vld [vmem:[%s180 + $0x430] sm:$0xff]
        %v350 = vld [vmem:[%s180 + $0x438] sm:$0xff]
        %v351 = vld [vmem:[%s180 + $0x440] sm:$0xff]
        %v352 = vld [vmem:[%s180 + $0x448] sm:$0xff]
        %v353 = vld [vmem:[%s180 + $0x450] sm:$0xff]
        %v354 = vld [vmem:[%s180 + $0x458] sm:$0xff]
        %v355 = vld [vmem:[%s180 + $0x460] sm:$0xff]
        %v356 = vld [vmem:[%s180 + $0x468] sm:$0xff]
        %v357 = vld [vmem:[%s180 + $0x470] sm:$0xff]
        %v358 = vld [vmem:[%s180 + $0x478] sm:$0xff]
        %v359 = vld [vmem:[%s180 + $0x480] sm:$0xff]
        %v360 = vld [vmem:[%s180 + $0x488] sm:$0xff]
        %v361 = vld [vmem:[%s180 + $0x490] sm:$0xff]
        %v362 = vld [vmem:[%s180 + $0x498] sm:$0xff]
        %v363 = vld [vmem:[%s180 + $0x4a0] sm:$0xff]
        %v364 = vld [vmem:[%s180 + $0x4a8] sm:$0xff]
        %v365 = vld [vmem:[%s180 + $0x4b0] sm:$0xff]
        %v366 = vld [vmem:[%s180 + $0x4b8] sm:$0xff]
        %v367 = vld [vmem:[%s180 + $0x4c0] sm:$0xff]
        %v368 = vld [vmem:[%s180 + $0x4c8] sm:$0xff]
        %v369 = vld [vmem:[%s180 + $0x4d0] sm:$0xff]
        %v370 = vld [vmem:[%s180 + $0x4d8] sm:$0xff]
        %v371 = vld [vmem:[%s180 + $0x4e0] sm:$0xff]
        %v372 = vld [vmem:[%s180 + $0x4e8] sm:$0xff]
        %v373 = vld [vmem:[%s180 + $0x4f0] sm:$0xff]
        %v374 = vld [vmem:[%s180 + $0x4f8] sm:$0xff]
        %v375 = vld [vmem:[%s180 + $0x500] sm:$0xff]
        %v376 = vld [vmem:[%s180 + $0x508] sm:$0xff]
        %v377 = vld [vmem:[%s180 + $0x510] sm:$0xff]
        %v378 = vld [vmem:[%s180 + $0x518] sm:$0xff]
        %v379 = vld [vmem:[%s180 + $0x520] sm:$0xff]
        %v380 = vld [vmem:[%s180 + $0x528] sm:$0xff]
        %v381 = vld [vmem:[%s180 + $0x530] sm:$0xff]
        %v382 = vld [vmem:[%s180 + $0x538] sm:$0xff]
        %v383 = vld [vmem:[%s180 + $0x540] sm:$0xff]
        %v384 = vld [vmem:[%s180 + $0x548] sm:$0xff]
        %v385 = vld [vmem:[%s180 + $0x550] sm:$0xff]
        %v386 = vld [vmem:[%s180 + $0x558] sm:$0xff]
        %v387 = vld [vmem:[%s180 + $0x560] sm:$0xff]
        %v388 = vld [vmem:[%s180 + $0x568] sm:$0xff]
        %v389 = vld [vmem:[%s180 + $0x570] sm:$0xff]
        %v390 = vld [vmem:[%s180 + $0x578] sm:$0xff]
        %v391 = vld [vmem:[%s180 + $0x580] sm:$0xff]
        %v392 = vld [vmem:[%s180 + $0x588] sm:$0xff]
        %v393 = vld [vmem:[%s180 + $0x590] sm:$0xff]
        %v394 = vld [vmem:[%s180 + $0x598] sm:$0xff]
        %v395 = vld [vmem:[%s180 + $0x5a0] sm:$0xff]
        %v396 = vld [vmem:[%s180 + $0x5a8] sm:$0xff]
        %v397 = vld [vmem:[%s180 + $0x5b0] sm:$0xff]
        %v398 = vld [vmem:[%s180 + $0x5b8] sm:$0xff]
        %v399 = vld [vmem:[%s180 + $0x5c0] sm:$0xff]
        %v400 = vld [vmem:[%s180 + $0x5c8] sm:$0xff]
        %v401 = vld [vmem:[%s180 + $0x5d0] sm:$0xff]
        %v402 = vld [vmem:[%s180 + $0x5d8] sm:$0xff]
        %v403 = vld [vmem:[%s180 + $0x5e0] sm:$0xff]
        %v404 = vld [vmem:[%s180 + $0x5e8] sm:$0xff]
        %v405 = vld [vmem:[%s180 + $0x5f0] sm:$0xff]
        %v406 = vld [vmem:[%s180 + $0x5f8] sm:$0xff]
        %v407 = vld [vmem:[%s180 + $0x600] sm:$0xff]
        %v408 = vld [vmem:[%s180 + $0x608] sm:$0xff]
        %v409 = vld [vmem:[%s180 + $0x610] sm:$0xff]
        %v410 = vld [vmem:[%s180 + $0x618] sm:$0xff]
        %v411 = vld [vmem:[%s180 + $0x620] sm:$0xff]
        %v412 = vld [vmem:[%s180 + $0x628] sm:$0xff]
        %v413 = vld [vmem:[%s180 + $0x630] sm:$0xff]
        %v414 = vld [vmem:[%s180 + $0x638] sm:$0xff]
        %v415 = vld [vmem:[%s180 + $0x640] sm:$0xff]
        %v416 = vld [vmem:[%s180 + $0x648] sm:$0xff]
        %v417 = vld [vmem:[%s180 + $0x650] sm:$0xff]
        %v418 = vld [vmem:[%s180 + $0x658] sm:$0xff]
        %v419 = vld [vmem:[%s180 + $0x660] sm:$0xff]
        %v420 = vld [vmem:[%s180 + $0x668] sm:$0xff]
        %v421 = vld [vmem:[%s180 + $0x670] sm:$0xff]
        %v422 = vld [vmem:[%s180 + $0x678] sm:$0xff]
        %v423 = vld [vmem:[%s180 + $0x680] sm:$0xff]
        %v424 = vld [vmem:[%s180 + $0x688] sm:$0xff]
        %v425 = vld [vmem:[%s180 + $0x690] sm:$0xff]
        %v426 = vld [vmem:[%s180 + $0x698] sm:$0xff]
        %v427 = vld [vmem:[%s180 + $0x6a0] sm:$0xff]
        %v428 = vld [vmem:[%s180 + $0x6a8] sm:$0xff]
        %v429 = vld [vmem:[%s180 + $0x6b0] sm:$0xff]
        %v430 = vld [vmem:[%s180 + $0x6b8] sm:$0xff]
        %v431 = vld [vmem:[%s180 + $0x6c0] sm:$0xff]
        %v432 = vld [vmem:[%s180 + $0x6c8] sm:$0xff]
        %v433 = vld [vmem:[%s180 + $0x6d0] sm:$0xff]
        %v434 = vld [vmem:[%s180 + $0x6d8] sm:$0xff]
        %v435 = vld [vmem:[%s180 + $0x6e0] sm:$0xff]
        %v436 = vld [vmem:[%s180 + $0x6e8] sm:$0xff]
        %v437 = vld [vmem:[%s180 + $0x6f0] sm:$0xff]
        %v438 = vld [vmem:[%s180 + $0x6f8] sm:$0xff]
        %v439 = vld [vmem:[%s180 + $0x700] sm:$0xff]
        %v440 = vld [vmem:[%s180 + $0x708] sm:$0xff]
        %v441 = vld [vmem:[%s180 + $0x710] sm:$0xff]
        %v442 = vld [vmem:[%s180 + $0x718] sm:$0xff]
        %v443 = vld [vmem:[%s180 + $0x720] sm:$0xff]
        %v444 = vld [vmem:[%s180 + $0x728] sm:$0xff]
        %v445 = vld [vmem:[%s180 + $0x730] sm:$0xff]
        %v446 = vld [vmem:[%s180 + $0x738] sm:$0xff]
        %v447 = vld [vmem:[%s180 + $0x740] sm:$0xff]
        %v448 = vld [vmem:[%s180 + $0x748] sm:$0xff]
        %v449 = vld [vmem:[%s180 + $0x750] sm:$0xff]
        %v450 = vld [vmem:[%s180 + $0x758] sm:$0xff]
        %v451 = vld [vmem:[%s180 + $0x760] sm:$0xff]
        %v452 = vld [vmem:[%s180 + $0x768] sm:$0xff]
        %v453 = vld [vmem:[%s180 + $0x770] sm:$0xff]
        %v454 = vld [vmem:[%s180 + $0x778] sm:$0xff]
        %v455 = vld [vmem:[%s180 + $0x780] sm:$0xff]
        %v456 = vld [vmem:[%s180 + $0x788] sm:$0xff]
        %v457 = vld [vmem:[%s180 + $0x790] sm:$0xff]
        %v458 = vld [vmem:[%s180 + $0x798] sm:$0xff]
        %v459 = vld [vmem:[%s180 + $0x7a0] sm:$0xff]
        %v460 = vld [vmem:[%s180 + $0x7a8] sm:$0xff]
        %v461 = vld [vmem:[%s180 + $0x7b0] sm:$0xff]
        %v462 = vld [vmem:[%s180 + $0x7b8] sm:$0xff]
        %v463 = vld [vmem:[%s180 + $0x7c0] sm:$0xff]
        %v464 = vld [vmem:[%s180 + $0x7c8] sm:$0xff]
        %v465 = vld [vmem:[%s180 + $0x7d0] sm:$0xff]
        %v466 = vld [vmem:[%s180 + $0x7d8] sm:$0xff]
        %v467 = vld [vmem:[%s180 + $0x7e0] sm:$0xff]
        %v468 = vld [vmem:[%s180 + $0x7e8] sm:$0xff]
        %v469 = vld [vmem:[%s180 + $0x7f0] sm:$0xff]
        %v470 = vld [vmem:[%s180 + $0x7f8] sm:$0xff]
        %v471 = vld [vmem:[%s180 + $0x800] sm:$0xff]
        %v472 = vld [vmem:[%s180 + $0x808] sm:$0xff]
        %v473 = vld [vmem:[%s180 + $0x810] sm:$0xff]
        %v474 = vld [vmem:[%s180 + $0x818] sm:$0xff]
        %v475 = vld [vmem:[%s180 + $0x820] sm:$0xff]
        %v476 = vld [vmem:[%s180 + $0x828] sm:$0xff]
        %v477 = vld [vmem:[%s180 + $0x830] sm:$0xff]
        %v478 = vld [vmem:[%s180 + $0x838] sm:$0xff]
        %v479 = vld [vmem:[%s180 + $0x840] sm:$0xff]
        %v480 = vld [vmem:[%s180 + $0x848] sm:$0xff]
        %v481 = vld [vmem:[%s180 + $0x850] sm:$0xff]
        %v482 = vld [vmem:[%s180 + $0x858] sm:$0xff]
        %v483 = vld [vmem:[%s180 + $0x860] sm:$0xff]
        %v484 = vld [vmem:[%s180 + $0x868] sm:$0xff]
        %v485 = vld [vmem:[%s180 + $0x870] sm:$0xff]
        %v486 = vld [vmem:[%s180 + $0x878] sm:$0xff]
        %v487 = vld [vmem:[%s180 + $0x880] sm:$0xff]
        %v488 = vld [vmem:[%s180 + $0x888] sm:$0xff]
        %v489 = vld [vmem:[%s180 + $0x890] sm:$0xff]
        %v490 = vld [vmem:[%s180 + $0x898] sm:$0xff]
        %v491 = vld [vmem:[%s180 + $0x8a0] sm:$0xff]
        %v492 = vld [vmem:[%s180 + $0x8a8] sm:$0xff]
        %v493 = vld [vmem:[%s180 + $0x8b0] sm:$0xff]
        %v494 = vld [vmem:[%s180 + $0x8b8] sm:$0xff]
        %v495 = vld [vmem:[%s180 + $0x8c0] sm:$0xff]
        %v496 = vld [vmem:[%s180 + $0x8c8] sm:$0xff]
        %v497 = vld [vmem:[%s180 + $0x8d0] sm:$0xff]
        %v498 = vld [vmem:[%s180 + $0x8d8] sm:$0xff]
        %v499 = vld [vmem:[%s180 + $0x8e0] sm:$0xff]
        %v500 = vld [vmem:[%s180 + $0x8e8] sm:$0xff]
        %v501 = vld [vmem:[%s180 + $0x8f0] sm:$0xff]
        %v502 = vld [vmem:[%s180 + $0x8f8] sm:$0xff]
        %v503 = vld [vmem:[%s180 + $0x900] sm:$0xff]
        %v504 = vld [vmem:[%s180 + $0x908] sm:$0xff]
        %v505 = vld [vmem:[%s180 + $0x910] sm:$0xff]
        %v506 = vld [vmem:[%s180 + $0x918] sm:$0xff]
        %v507 = vld [vmem:[%s180 + $0x920] sm:$0xff]
        %v508 = vld [vmem:[%s180 + $0x928] sm:$0xff]
        %v509 = vld [vmem:[%s180 + $0x930] sm:$0xff]
        %v510 = vld [vmem:[%s180 + $0x938] sm:$0xff]
        %v511 = vld [vmem:[%s180 + $0x940] sm:$0xff]
        %v512 = vld [vmem:[%s180 + $0x948] sm:$0xff]
        %v513 = vld [vmem:[%s180 + $0x950] sm:$0xff]
        %v514 = vld [vmem:[%s180 + $0x958] sm:$0xff]
        %v515 = vld [vmem:[%s180 + $0x960] sm:$0xff]
        %v516 = vld [vmem:[%s180 + $0x968] sm:$0xff]
        %v517 = vld [vmem:[%s180 + $0x970] sm:$0xff]
        %v518 = vld [vmem:[%s180 + $0x978] sm:$0xff]
        %v519 = vld [vmem:[%s180 + $0x980] sm:$0xff]
        %v520 = vld [vmem:[%s180 + $0x988] sm:$0xff]
        %v521 = vld [vmem:[%s180 + $0x990] sm:$0xff]
        %v522 = vld [vmem:[%s180 + $0x998] sm:$0xff]
        %v523 = vld [vmem:[%s180 + $0x9a0] sm:$0xff]
        %v524 = vld [vmem:[%s180 + $0x9a8] sm:$0xff]
        %v525 = vld [vmem:[%s180 + $0x9b0] sm:$0xff]
        %v526 = vld [vmem:[%s180 + $0x9b8] sm:$0xff]
        %v527 = vld [vmem:[%s180 + $0x9c0] sm:$0xff]
        %v528 = vld [vmem:[%s180 + $0x9c8] sm:$0xff]
        %v529 = vld [vmem:[%s180 + $0x9d0] sm:$0xff]
        %v530 = vld [vmem:[%s180 + $0x9d8] sm:$0xff]
        %v531 = vld [vmem:[%s180 + $0x9e0] sm:$0xff]
        %v532 = vld [vmem:[%s180 + $0x9e8] sm:$0xff]
        %v533 = vld [vmem:[%s180 + $0x9f0] sm:$0xff]
        %v534 = vld [vmem:[%s180 + $0x9f8] sm:$0xff]
        %v535 = vld [vmem:[%s180 + $0xa00] sm:$0xff]
        %v536 = vld [vmem:[%s180 + $0xa08] sm:$0xff]
        %v537 = vld [vmem:[%s180 + $0xa10] sm:$0xff]
        %v538 = vld [vmem:[%s180 + $0xa18] sm:$0xff]
        %v539 = vld [vmem:[%s180 + $0xa20] sm:$0xff]
        %v540 = vld [vmem:[%s180 + $0xa28] sm:$0xff]
        %v541 = vld [vmem:[%s180 + $0xa30] sm:$0xff]
        %v542 = vld [vmem:[%s180 + $0xa38] sm:$0xff]
        %v543 = vld [vmem:[%s180 + $0xa40] sm:$0xff]
        %v544 = vld [vmem:[%s180 + $0xa48] sm:$0xff]
        %v545 = vld [vmem:[%s180 + $0xa50] sm:$0xff]
        %v546 = vld [vmem:[%s180 + $0xa58] sm:$0xff]
        %v547 = vld [vmem:[%s180 + $0xa60] sm:$0xff]
        %v548 = vld [vmem:[%s180 + $0xa68] sm:$0xff]
        %v549 = vld [vmem:[%s180 + $0xa70] sm:$0xff]
        %v550 = vld [vmem:[%s180 + $0xa78] sm:$0xff]
        %v551 = vld [vmem:[%s180 + $0xa80] sm:$0xff]
        %v552 = vld [vmem:[%s180 + $0xa88] sm:$0xff]
        %v553 = vld [vmem:[%s180 + $0xa90] sm:$0xff]
        %v554 = vld [vmem:[%s180 + $0xa98] sm:$0xff]
        %v555 = vld [vmem:[%s180 + $0xaa0] sm:$0xff]
        %v556 = vld [vmem:[%s180 + $0xaa8] sm:$0xff]
        %v557 = vld [vmem:[%s180 + $0xab0] sm:$0xff]
        %v558 = vld [vmem:[%s180 + $0xab8] sm:$0xff]
        %v559 = vld [vmem:[%s180 + $0xac0] sm:$0xff]
        %v560 = vld [vmem:[%s180 + $0xac8] sm:$0xff]
        %v561 = vld [vmem:[%s180 + $0xad0] sm:$0xff]
        %v562 = vld [vmem:[%s180 + $0xad8] sm:$0xff]
        %v563 = vld [vmem:[%s180 + $0xae0] sm:$0xff]
        %v564 = vld [vmem:[%s180 + $0xae8] sm:$0xff]
        %v565 = vld [vmem:[%s180 + $0xaf0] sm:$0xff]
        %v566 = vld [vmem:[%s180 + $0xaf8] sm:$0xff]
        %v567 = vld [vmem:[%s180 + $0xb00] sm:$0xff]
        %v568 = vld [vmem:[%s180 + $0xb08] sm:$0xff]
        %v569 = vld [vmem:[%s180 + $0xb10] sm:$0xff]
        %v570 = vld [vmem:[%s180 + $0xb18] sm:$0xff]
        %v571 = vld [vmem:[%s180 + $0xb20] sm:$0xff]
        %v572 = vld [vmem:[%s180 + $0xb28] sm:$0xff]
        %v573 = vld [vmem:[%s180 + $0xb30] sm:$0xff]
        %v574 = vld [vmem:[%s180 + $0xb38] sm:$0xff]
        %v575 = vld [vmem:[%s180 + $0xb40] sm:$0xff]
        %v576 = vld [vmem:[%s180 + $0xb48] sm:$0xff]
        %v577 = vld [vmem:[%s180 + $0xb50] sm:$0xff]
        %v578 = vld [vmem:[%s180 + $0xb58] sm:$0xff]
        %v579 = vld [vmem:[%s180 + $0xb60] sm:$0xff]
        %v580 = vld [vmem:[%s180 + $0xb68] sm:$0xff]
        %v581 = vld [vmem:[%s180 + $0xb70] sm:$0xff]
        %v582 = vld [vmem:[%s180 + $0xb78] sm:$0xff]
        %v583 = vld [vmem:[%s180 + $0xb80] sm:$0xff]
        %v584 = vld [vmem:[%s180 + $0xb88] sm:$0xff]
        %v585 = vld [vmem:[%s180 + $0xb90] sm:$0xff]
        %v586 = vld [vmem:[%s180 + $0xb98] sm:$0xff]
        %v587 = vld [vmem:[%s180 + $0xba0] sm:$0xff]
        %v588 = vld [vmem:[%s180 + $0xba8] sm:$0xff]
        %v589 = vld [vmem:[%s180 + $0xbb0] sm:$0xff]
        %v590 = vld [vmem:[%s180 + $0xbb8] sm:$0xff]
        %v591 = vld [vmem:[%s180 + $0xbc0] sm:$0xff]
        %v592 = vld [vmem:[%s180 + $0xbc8] sm:$0xff]
        %v593 = vld [vmem:[%s180 + $0xbd0] sm:$0xff]
        %v594 = vld [vmem:[%s180 + $0xbd8] sm:$0xff]
        %v595 = vld [vmem:[%s180 + $0xbe0] sm:$0xff]
        %v596 = vld [vmem:[%s180 + $0xbe8] sm:$0xff]
        %v597 = vld [vmem:[%s180 + $0xbf0] sm:$0xff]
        %v598 = vld [vmem:[%s180 + $0xbf8] sm:$0xff]
        %v599 = vld [vmem:[%s180 + $0xc00] sm:$0xff]
        %v600 = vld [vmem:[%s180 + $0xc08] sm:$0xff]
        %v601 = vld [vmem:[%s180 + $0xc10] sm:$0xff]
        %v602 = vld [vmem:[%s180 + $0xc18] sm:$0xff]
        %v603 = vld [vmem:[%s180 + $0xc20] sm:$0xff]
        %v604 = vld [vmem:[%s180 + $0xc28] sm:$0xff]
        %v605 = vld [vmem:[%s180 + $0xc30] sm:$0xff]
        %v606 = vld [vmem:[%s180 + $0xc38] sm:$0xff]
        %v607 = vld [vmem:[%s180 + $0xc40] sm:$0xff]
        %v608 = vld [vmem:[%s180 + $0xc48] sm:$0xff]
        %v609 = vld [vmem:[%s180 + $0xc50] sm:$0xff]
        %v610 = vld [vmem:[%s180 + $0xc58] sm:$0xff]
        %v611 = vld [vmem:[%s180 + $0xc60] sm:$0xff]
        %v612 = vld [vmem:[%s180 + $0xc68] sm:$0xff]
        %v613 = vld [vmem:[%s180 + $0xc70] sm:$0xff]
        %v614 = vld [vmem:[%s180 + $0xc78] sm:$0xff]
        %v615 = vld [vmem:[%s180 + $0xc80] sm:$0xff]
        %v616 = vld [vmem:[%s180 + $0xc88] sm:$0xff]
        %v617 = vld [vmem:[%s180 + $0xc90] sm:$0xff]
        %v618 = vld [vmem:[%s180 + $0xc98] sm:$0xff]
        %v619 = vld [vmem:[%s180 + $0xca0] sm:$0xff]
        %v620 = vld [vmem:[%s180 + $0xca8] sm:$0xff]
        %v621 = vld [vmem:[%s180 + $0xcb0] sm:$0xff]
        %v622 = vld [vmem:[%s180 + $0xcb8] sm:$0xff]
        %v623 = vld [vmem:[%s180 + $0xcc0] sm:$0xff]
        %v624 = vld [vmem:[%s180 + $0xcc8] sm:$0xff]
        %v625 = vld [vmem:[%s180 + $0xcd0] sm:$0xff]
        %v626 = vld [vmem:[%s180 + $0xcd8] sm:$0xff]
        %v627 = vld [vmem:[%s180 + $0xce0] sm:$0xff]
        %v628 = vld [vmem:[%s180 + $0xce8] sm:$0xff]
        %v629 = vld [vmem:[%s180 + $0xcf0] sm:$0xff]
        %v630 = vld [vmem:[%s180 + $0xcf8] sm:$0xff]
        %v631 = vld [vmem:[%s180 + $0xd00] sm:$0xff]
        %v632 = vld [vmem:[%s180 + $0xd08] sm:$0xff]
        %v633 = vld [vmem:[%s180 + $0xd10] sm:$0xff]
        %v634 = vld [vmem:[%s180 + $0xd18] sm:$0xff]
        %v635 = vld [vmem:[%s180 + $0xd20] sm:$0xff]
        %v636 = vld [vmem:[%s180 + $0xd28] sm:$0xff]
        %v637 = vld [vmem:[%s180 + $0xd30] sm:$0xff]
        %v638 = vld [vmem:[%s180 + $0xd38] sm:$0xff]
        %v639 = vld [vmem:[%s180 + $0xd40] sm:$0xff]
        %v640 = vld [vmem:[%s180 + $0xd48] sm:$0xff]
        %v641 = vld [vmem:[%s180 + $0xd50] sm:$0xff]
        %v642 = vld [vmem:[%s180 + $0xd58] sm:$0xff]
        %v643 = vld [vmem:[%s180 + $0xd60] sm:$0xff]
        %v644 = vld [vmem:[%s180 + $0xd68] sm:$0xff]
        %v645 = vld [vmem:[%s180 + $0xd70] sm:$0xff]
        %v646 = vld [vmem:[%s180 + $0xd78] sm:$0xff]
        %v647 = vld [vmem:[%s180 + $0xd80] sm:$0xff]
        %v648 = vld [vmem:[%s180 + $0xd88] sm:$0xff]
        %v649 = vld [vmem:[%s180 + $0xd90] sm:$0xff]
        %v650 = vld [vmem:[%s180 + $0xd98] sm:$0xff]
        %v651 = vld [vmem:[%s180 + $0xda0] sm:$0xff]
        %v652 = vld [vmem:[%s180 + $0xda8] sm:$0xff]
        %v653 = vld [vmem:[%s180 + $0xdb0] sm:$0xff]
        %v654 = vld [vmem:[%s180 + $0xdb8] sm:$0xff]
        %v655 = vld [vmem:[%s180 + $0xdc0] sm:$0xff]
        %v656 = vld [vmem:[%s180 + $0xdc8] sm:$0xff]
        %v657 = vld [vmem:[%s180 + $0xdd0] sm:$0xff]
        %v658 = vld [vmem:[%s180 + $0xdd8] sm:$0xff]
        %v659 = vld [vmem:[%s180 + $0xde0] sm:$0xff]
        %v660 = vld [vmem:[%s180 + $0xde8] sm:$0xff]
        %v661 = vld [vmem:[%s180 + $0xdf0] sm:$0xff]
        %v662 = vld [vmem:[%s180 + $0xdf8] sm:$0xff]
        %v663 = vld [vmem:[%s180 + $0xe00] sm:$0xff]
        %v664 = vld [vmem:[%s180 + $0xe08] sm:$0xff]
        %v665 = vld [vmem:[%s180 + $0xe10] sm:$0xff]
        %v666 = vld [vmem:[%s180 + $0xe18] sm:$0xff]
        %v667 = vld [vmem:[%s180 + $0xe20] sm:$0xff]
        %v668 = vld [vmem:[%s180 + $0xe28] sm:$0xff]
        %v669 = vld [vmem:[%s180 + $0xe30] sm:$0xff]
        %v670 = vld [vmem:[%s180 + $0xe38] sm:$0xff]
        %v671 = vld [vmem:[%s180 + $0xe40] sm:$0xff]
        %v672 = vld [vmem:[%s180 + $0xe48] sm:$0xff]
        %v673 = vld [vmem:[%s180 + $0xe50] sm:$0xff]
        %v674 = vld [vmem:[%s180 + $0xe58] sm:$0xff]
        %v675 = vld [vmem:[%s180 + $0xe60] sm:$0xff]
        %v676 = vld [vmem:[%s180 + $0xe68] sm:$0xff]
        %v677 = vld [vmem:[%s180 + $0xe70] sm:$0xff]
        %v678 = vld [vmem:[%s180 + $0xe78] sm:$0xff]
        %v679 = vld [vmem:[%s180 + $0xe80] sm:$0xff]
        %v680 = vld [vmem:[%s180 + $0xe88] sm:$0xff]
        %v681 = vld [vmem:[%s180 + $0xe90] sm:$0xff]
        %v682 = vld [vmem:[%s180 + $0xe98] sm:$0xff]
        %v683 = vld [vmem:[%s180 + $0xea0] sm:$0xff]
        %v684 = vld [vmem:[%s180 + $0xea8] sm:$0xff]
        %v685 = vld [vmem:[%s180 + $0xeb0] sm:$0xff]
        %v686 = vld [vmem:[%s180 + $0xeb8] sm:$0xff]
        %v687 = vld [vmem:[%s180 + $0xec0] sm:$0xff]
        %v688 = vld [vmem:[%s180 + $0xec8] sm:$0xff]
        %v689 = vld [vmem:[%s180 + $0xed0] sm:$0xff]
        %v690 = vld [vmem:[%s180 + $0xed8] sm:$0xff]
        %v691 = vld [vmem:[%s180 + $0xee0] sm:$0xff]
        %v692 = vld [vmem:[%s180 + $0xee8] sm:$0xff]
        %v693 = vld [vmem:[%s180 + $0xef0] sm:$0xff]
        %v694 = vld [vmem:[%s180 + $0xef8] sm:$0xff]
        %v695 = vld [vmem:[%s180 + $0xf00] sm:$0xff]
        %v696 = vld [vmem:[%s180 + $0xf08] sm:$0xff]
        %v697 = vld [vmem:[%s180 + $0xf10] sm:$0xff]
        %v698 = vld [vmem:[%s180 + $0xf18] sm:$0xff]
        %v699 = vld [vmem:[%s180 + $0xf20] sm:$0xff]
        %v700 = vld [vmem:[%s180 + $0xf28] sm:$0xff]
        %v701 = vld [vmem:[%s180 + $0xf30] sm:$0xff]
        %v702 = vld [vmem:[%s180 + $0xf38] sm:$0xff]
        %v703 = vld [vmem:[%s180 + $0xf40] sm:$0xff]
        %v704 = vld [vmem:[%s180 + $0xf48] sm:$0xff]
        %v705 = vld [vmem:[%s180 + $0xf50] sm:$0xff]
        %v706 = vld [vmem:[%s180 + $0xf58] sm:$0xff]
        %v707 = vld [vmem:[%s180 + $0xf60] sm:$0xff]
        %v708 = vld [vmem:[%s180 + $0xf68] sm:$0xff]
        %v709 = vld [vmem:[%s180 + $0xf70] sm:$0xff]
        %v710 = vld [vmem:[%s180 + $0xf78] sm:$0xff]
        %v711 = vld [vmem:[%s180 + $0xf80] sm:$0xff]
        %v712 = vld [vmem:[%s180 + $0xf88] sm:$0xff]
        %v713 = vld [vmem:[%s180 + $0xf90] sm:$0xff]
        %v714 = vld [vmem:[%s180 + $0xf98] sm:$0xff]
        %v715 = vld [vmem:[%s180 + $0xfa0] sm:$0xff]
        %v716 = vld [vmem:[%s180 + $0xfa8] sm:$0xff]
        %v717 = vld [vmem:[%s180 + $0xfb0] sm:$0xff]
        %v718 = vld [vmem:[%s180 + $0xfb8] sm:$0xff]
        %v719 = vld [vmem:[%s180 + $0xfc0] sm:$0xff]
        %v720 = vld [vmem:[%s180 + $0xfc8] sm:$0xff]
        %v721 = vld [vmem:[%s180 + $0xfd0] sm:$0xff]
        %v722 = vld [vmem:[%s180 + $0xfd8] sm:$0xff]
        %v723 = vld [vmem:[%s180 + $0xfe0] sm:$0xff]
        %v724 = vld [vmem:[%s180 + $0xfe8] sm:$0xff]
        %v725 = vld [vmem:[%s180 + $0xff0] sm:$0xff]
        %v726 = vld [vmem:[%s180 + $0xff8] sm:$0xff]
        %v727 = vld [vmem:[%s180 + $0x1000] sm:$0xff]
        %v728 = vld [vmem:[%s180 + $0x1008] sm:$0xff]
        %v729 = vld [vmem:[%s180 + $0x1010] sm:$0xff]
        %v730 = vld [vmem:[%s180 + $0x1018] sm:$0xff]
        %v731 = vld [vmem:[%s180 + $0x1020] sm:$0xff]
        %v732 = vld [vmem:[%s180 + $0x1028] sm:$0xff]
        %v733 = vld [vmem:[%s180 + $0x1030] sm:$0xff]
        %v734 = vld [vmem:[%s180 + $0x1038] sm:$0xff]
        %v735 = vld [vmem:[%s180 + $0x1040] sm:$0xff]
        %v736 = vld [vmem:[%s180 + $0x1048] sm:$0xff]
        %v737 = vld [vmem:[%s180 + $0x1050] sm:$0xff]
        %v738 = vld [vmem:[%s180 + $0x1058] sm:$0xff]
        %v739 = vld [vmem:[%s180 + $0x1060] sm:$0xff]
        %v740 = vld [vmem:[%s180 + $0x1068] sm:$0xff]
        %v741 = vld [vmem:[%s180 + $0x1070] sm:$0xff]
        %v742 = vld [vmem:[%s180 + $0x1078] sm:$0xff]
        %v743 = vld [vmem:[%s180 + $0x1080] sm:$0xff]
        %v744 = vld [vmem:[%s180 + $0x1088] sm:$0xff]
        %v745 = vld [vmem:[%s180 + $0x1090] sm:$0xff]
        %v746 = vld [vmem:[%s180 + $0x1098] sm:$0xff]
        %v747 = vld [vmem:[%s180 + $0x10a0] sm:$0xff]
        %v748 = vld [vmem:[%s180 + $0x10a8] sm:$0xff]
        %v749 = vld [vmem:[%s180 + $0x10b0] sm:$0xff]
        %v750 = vld [vmem:[%s180 + $0x10b8] sm:$0xff]
        %v751 = vld [vmem:[%s180 + $0x10c0] sm:$0xff]
        %v752 = vld [vmem:[%s180 + $0x10c8] sm:$0xff]
        %v753 = vld [vmem:[%s180 + $0x10d0] sm:$0xff]
        %v754 = vld [vmem:[%s180 + $0x10d8] sm:$0xff]
        %v755 = vld [vmem:[%s180 + $0x10e0] sm:$0xff]
        %v756 = vld [vmem:[%s180 + $0x10e8] sm:$0xff]
        %v757 = vld [vmem:[%s180 + $0x10f0] sm:$0xff]
        %v758 = vld [vmem:[%s180 + $0x10f8] sm:$0xff]
        %v759 = vld [vmem:[%s180 + $0x1100] sm:$0xff]
        %v760 = vld [vmem:[%s180 + $0x1108] sm:$0xff]
        %v761 = vld [vmem:[%s180 + $0x1110] sm:$0xff]
        %v762 = vld [vmem:[%s180 + $0x1118] sm:$0xff]
        %v763 = vld [vmem:[%s180 + $0x1120] sm:$0xff]
        %v764 = vld [vmem:[%s180 + $0x1128] sm:$0xff]
        %v765 = vld [vmem:[%s180 + $0x1130] sm:$0xff]
        %v766 = vld [vmem:[%s180 + $0x1138] sm:$0xff]
        %v767 = vld [vmem:[%s180 + $0x1140] sm:$0xff]
        %v768 = vld [vmem:[%s180 + $0x1148] sm:$0xff]
        %v769 = vld [vmem:[%s180 + $0x1150] sm:$0xff]
        %v770 = vld [vmem:[%s180 + $0x1158] sm:$0xff]
        %v771 = vld [vmem:[%s180 + $0x1160] sm:$0xff]
        %v772 = vld [vmem:[%s180 + $0x1168] sm:$0xff]
        %v773 = vld [vmem:[%s180 + $0x1170] sm:$0xff]
        %v774 = vld [vmem:[%s180 + $0x1178] sm:$0xff]
        %v775 = vld [vmem:[%s180 + $0x1180] sm:$0xff]
        %v776 = vld [vmem:[%s180 + $0x1188] sm:$0xff]
        %v777 = vld [vmem:[%s180 + $0x1190] sm:$0xff]
        %v778 = vld [vmem:[%s180 + $0x1198] sm:$0xff]
        %v779 = vld [vmem:[%s180 + $0x11a0] sm:$0xff]
        %v780 = vld [vmem:[%s180 + $0x11a8] sm:$0xff]
        %v781 = vld [vmem:[%s180 + $0x11b0] sm:$0xff]
        %v782 = vld [vmem:[%s180 + $0x11b8] sm:$0xff]
        %v783 = vld [vmem:[%s180 + $0x11c0] sm:$0xff]
        %v784 = vld [vmem:[%s180 + $0x11c8] sm:$0xff]
        %v785 = vld [vmem:[%s180 + $0x11d0] sm:$0xff]
        %v786 = vld [vmem:[%s180 + $0x11d8] sm:$0xff]
        %v787 = vld [vmem:[%s180 + $0x11e0] sm:$0xff]
        %v788 = vld [vmem:[%s180 + $0x11e8] sm:$0xff]
        %v789 = vld [vmem:[%s180 + $0x11f0] sm:$0xff]
        %v790 = vld [vmem:[%s180 + $0x11f8] sm:$0xff]
        %v791 = vld [vmem:[%s180 + $0x1200] sm:$0xff]
        %v792 = vld [vmem:[%s180 + $0x1208] sm:$0xff]
        %v793 = vld [vmem:[%s180 + $0x1210] sm:$0xff]
        %v794 = vld [vmem:[%s180 + $0x1218] sm:$0xff]
        %v795 = vld [vmem:[%s180 + $0x1220] sm:$0xff]
        %v796 = vld [vmem:[%s180 + $0x1228] sm:$0xff]
        %v797 = vld [vmem:[%s180 + $0x1230] sm:$0xff]
        %v798 = vld [vmem:[%s180 + $0x1238] sm:$0xff]
        %v799 = vld [vmem:[%s180 + $0x1240] sm:$0xff]
        %v800 = vld [vmem:[%s180 + $0x1248] sm:$0xff]
        %v801 = vld [vmem:[%s180 + $0x1250] sm:$0xff]
        %v802 = vld [vmem:[%s180 + $0x1258] sm:$0xff]
        %v803 = vld [vmem:[%s180 + $0x1260] sm:$0xff]
        %v804 = vld [vmem:[%s180 + $0x1268] sm:$0xff]
        %v805 = vld [vmem:[%s180 + $0x1270] sm:$0xff]
        %v806 = vld [vmem:[%s180 + $0x1278] sm:$0xff]
        %v807 = vld [vmem:[%s180 + $0x1280] sm:$0xff]
        %v808 = vld [vmem:[%s180 + $0x1288] sm:$0xff]
        %v809 = vld [vmem:[%s180 + $0x1290] sm:$0xff]
        %v810 = vld [vmem:[%s180 + $0x1298] sm:$0xff]
        %v811 = vld [vmem:[%s180 + $0x12a0] sm:$0xff]
        %v812 = vld [vmem:[%s180 + $0x12a8] sm:$0xff]
        %v813 = vld [vmem:[%s180 + $0x12b0] sm:$0xff]
        %v814 = vld [vmem:[%s180 + $0x12b8] sm:$0xff]
        %v815 = vld [vmem:[%s180 + $0x12c0] sm:$0xff]
        %v816 = vld [vmem:[%s180 + $0x12c8] sm:$0xff]
        %v817 = vld [vmem:[%s180 + $0x12d0] sm:$0xff]
        %v818 = vld [vmem:[%s180 + $0x12d8] sm:$0xff]
        %v819 = vld [vmem:[%s180 + $0x12e0] sm:$0xff]
        %v820 = vld [vmem:[%s180 + $0x12e8] sm:$0xff]
        %v821 = vld [vmem:[%s180 + $0x12f0] sm:$0xff]
        %v822 = vld [vmem:[%s180 + $0x12f8] sm:$0xff]
        %v823 = vld [vmem:[%s180 + $0x1300] sm:$0xff]
        %v824 = vld [vmem:[%s180 + $0x1308] sm:$0xff]
        %v825 = vld [vmem:[%s180 + $0x1310] sm:$0xff]
        %v826 = vld [vmem:[%s180 + $0x1318] sm:$0xff]
        %v827 = vld [vmem:[%s180 + $0x1320] sm:$0xff]
        %v828 = vld [vmem:[%s180 + $0x1328] sm:$0xff]
        %v829 = vld [vmem:[%s180 + $0x1330] sm:$0xff]
        %v830 = vld [vmem:[%s180 + $0x1338] sm:$0xff]
        %v831 = vld [vmem:[%s180 + $0x1340] sm:$0xff]
        %v832 = vld [vmem:[%s180 + $0x1348] sm:$0xff]
        %v833 = vld [vmem:[%s180 + $0x1350] sm:$0xff]
        %v834 = vld [vmem:[%s180 + $0x1358] sm:$0xff]
        %v835 = vld [vmem:[%s180 + $0x1360] sm:$0xff]
        %v836 = vld [vmem:[%s180 + $0x1368] sm:$0xff]
        %v837 = vld [vmem:[%s180 + $0x1370] sm:$0xff]
        %v838 = vld [vmem:[%s180 + $0x1378] sm:$0xff]
        %v839 = vld [vmem:[%s180 + $0x1380] sm:$0xff]
        %v840 = vld [vmem:[%s180 + $0x1388] sm:$0xff]
        %v841 = vld [vmem:[%s180 + $0x1390] sm:$0xff]
        %v842 = vld [vmem:[%s180 + $0x1398] sm:$0xff]
        %v843 = vld [vmem:[%s180 + $0x13a0] sm:$0xff]
        %v844 = vld [vmem:[%s180 + $0x13a8] sm:$0xff]
        %v845 = vld [vmem:[%s180 + $0x13b0] sm:$0xff]
        %v846 = vld [vmem:[%s180 + $0x13b8] sm:$0xff]
        %v847 = vld [vmem:[%s180 + $0x13c0] sm:$0xff]
        %v848 = vld [vmem:[%s180 + $0x13c8] sm:$0xff]
        %v849 = vld [vmem:[%s180 + $0x13d0] sm:$0xff]
        %v850 = vld [vmem:[%s180 + $0x13d8] sm:$0xff]
        %v851 = vld [vmem:[%s180 + $0x13e0] sm:$0xff]
        %v852 = vld [vmem:[%s180 + $0x13e8] sm:$0xff]
        %v853 = vld [vmem:[%s180 + $0x13f0] sm:$0xff]
        %v854 = vld [vmem:[%s180 + $0x13f8] sm:$0xff]
        %v855 = vld [vmem:[%s180 + $0x1400] sm:$0xff]
        %v856 = vld [vmem:[%s180 + $0x1408] sm:$0xff]
        %v857 = vld [vmem:[%s180 + $0x1410] sm:$0xff]
        %v858 = vld [vmem:[%s180 + $0x1418] sm:$0xff]
        %v859 = vld [vmem:[%s180 + $0x1420] sm:$0xff]
        %v860 = vld [vmem:[%s180 + $0x1428] sm:$0xff]
        %v861 = vld [vmem:[%s180 + $0x1430] sm:$0xff]
        %v862 = vld [vmem:[%s180 + $0x1438] sm:$0xff]
        %v863 = vld [vmem:[%s180 + $0x1440] sm:$0xff]
        %v864 = vld [vmem:[%s180 + $0x1448] sm:$0xff]
        %v865 = vld [vmem:[%s180 + $0x1450] sm:$0xff]
        %v866 = vld [vmem:[%s180 + $0x1458] sm:$0xff]
        %v867 = vld [vmem:[%s180 + $0x1460] sm:$0xff]
        %v868 = vld [vmem:[%s180 + $0x1468] sm:$0xff]
        %v869 = vld [vmem:[%s180 + $0x1470] sm:$0xff]
        %v870 = vld [vmem:[%s180 + $0x1478] sm:$0xff]
        %v871 = vld [vmem:[%s180 + $0x1480] sm:$0xff]
        %v872 = vld [vmem:[%s180 + $0x1488] sm:$0xff]
        %v873 = vld [vmem:[%s180 + $0x1490] sm:$0xff]
        %v874 = vld [vmem:[%s180 + $0x1498] sm:$0xff]
        %v875 = vld [vmem:[%s180 + $0x14a0] sm:$0xff]
        %v876 = vld [vmem:[%s180 + $0x14a8] sm:$0xff]
        %v877 = vld [vmem:[%s180 + $0x14b0] sm:$0xff]
        %v878 = vld [vmem:[%s180 + $0x14b8] sm:$0xff]
        %v879 = vld [vmem:[%s180 + $0x14c0] sm:$0xff]
        %v880 = vld [vmem:[%s180 + $0x14c8] sm:$0xff]
        %v881 = vld [vmem:[%s180 + $0x14d0] sm:$0xff]
        %v882 = vld [vmem:[%s180 + $0x14d8] sm:$0xff]
        %v883 = vld [vmem:[%s180 + $0x14e0] sm:$0xff]
        %v884 = vld [vmem:[%s180 + $0x14e8] sm:$0xff]
        %v885 = vld [vmem:[%s180 + $0x14f0] sm:$0xff]
        %v886 = vld [vmem:[%s180 + $0x14f8] sm:$0xff]
        %v887 = vld [vmem:[%s180 + $0x1500] sm:$0xff]
        %v888 = vld [vmem:[%s180 + $0x1508] sm:$0xff]
        %v889 = vld [vmem:[%s180 + $0x1510] sm:$0xff]
        %v890 = vld [vmem:[%s180 + $0x1518] sm:$0xff]
        %v891 = vld [vmem:[%s180 + $0x1520] sm:$0xff]
        %v892 = vld [vmem:[%s180 + $0x1528] sm:$0xff]
        %v893 = vld [vmem:[%s180 + $0x1530] sm:$0xff]
        %v894 = vld [vmem:[%s180 + $0x1538] sm:$0xff]
        %v895 = vld [vmem:[%s180 + $0x1540] sm:$0xff]
        %v896 = vld [vmem:[%s180 + $0x1548] sm:$0xff]
        %v897 = vld [vmem:[%s180 + $0x1550] sm:$0xff]
        %v898 = vld [vmem:[%s180 + $0x1558] sm:$0xff]
        %v899 = vld [vmem:[%s180 + $0x1560] sm:$0xff]
        %v900 = vld [vmem:[%s180 + $0x1568] sm:$0xff]
        %v901 = vld [vmem:[%s180 + $0x1570] sm:$0xff]
        %v902 = vld [vmem:[%s180 + $0x1578] sm:$0xff]
        %v903 = vld [vmem:[%s180 + $0x1580] sm:$0xff]
        %v904 = vld [vmem:[%s180 + $0x1588] sm:$0xff]
        %v905 = vld [vmem:[%s180 + $0x1590] sm:$0xff]
        %v906 = vld [vmem:[%s180 + $0x1598] sm:$0xff]
        %v907 = vld [vmem:[%s180 + $0x15a0] sm:$0xff]
        %v908 = vld [vmem:[%s180 + $0x15a8] sm:$0xff]
        %v909 = vld [vmem:[%s180 + $0x15b0] sm:$0xff]
        %v910 = vld [vmem:[%s180 + $0x15b8] sm:$0xff]
        %v911 = vld [vmem:[%s180 + $0x15c0] sm:$0xff]
        %v912 = vld [vmem:[%s180 + $0x15c8] sm:$0xff]
        %v913 = vld [vmem:[%s180 + $0x15d0] sm:$0xff]
        %v914 = vld [vmem:[%s180 + $0x15d8] sm:$0xff]
        %v915 = vld [vmem:[%s180 + $0x15e0] sm:$0xff]
        %v916 = vld [vmem:[%s180 + $0x15e8] sm:$0xff]
        %v917 = vld [vmem:[%s180 + $0x15f0] sm:$0xff]
        %v918 = vld [vmem:[%s180 + $0x15f8] sm:$0xff]
        %v919 = vld [vmem:[%s180 + $0x1600] sm:$0xff]
        %v920 = vld [vmem:[%s180 + $0x1608] sm:$0xff]
        %v921 = vld [vmem:[%s180 + $0x1610] sm:$0xff]
        %v922 = vld [vmem:[%s180 + $0x1618] sm:$0xff]
        %v923 = vld [vmem:[%s180 + $0x1620] sm:$0xff]
        %v924 = vld [vmem:[%s180 + $0x1628] sm:$0xff]
        %v925 = vld [vmem:[%s180 + $0x1630] sm:$0xff]
        %v926 = vld [vmem:[%s180 + $0x1638] sm:$0xff]
        %v927 = vld [vmem:[%s180 + $0x1640] sm:$0xff]
        %v928 = vld [vmem:[%s180 + $0x1648] sm:$0xff]
        %v929 = vld [vmem:[%s180 + $0x1650] sm:$0xff]
        %v930 = vld [vmem:[%s180 + $0x1658] sm:$0xff]
        %v931 = vld [vmem:[%s180 + $0x1660] sm:$0xff]
        %v932 = vld [vmem:[%s180 + $0x1668] sm:$0xff]
        %v933 = vld [vmem:[%s180 + $0x1670] sm:$0xff]
        %v934 = vld [vmem:[%s180 + $0x1678] sm:$0xff]
        %v935 = vld [vmem:[%s180 + $0x1680] sm:$0xff]
        %v936 = vld [vmem:[%s180 + $0x1688] sm:$0xff]
        %v937 = vld [vmem:[%s180 + $0x1690] sm:$0xff]
        %v938 = vld [vmem:[%s180 + $0x1698] sm:$0xff]
        %v939 = vld [vmem:[%s180 + $0x16a0] sm:$0xff]
        %v940 = vld [vmem:[%s180 + $0x16a8] sm:$0xff]
        %v941 = vld [vmem:[%s180 + $0x16b0] sm:$0xff]
        %v942 = vld [vmem:[%s180 + $0x16b8] sm:$0xff]
        %v943 = vld [vmem:[%s180 + $0x16c0] sm:$0xff]
        %v944 = vld [vmem:[%s180 + $0x16c8] sm:$0xff]
        %v945 = vld [vmem:[%s180 + $0x16d0] sm:$0xff]
        %v946 = vld [vmem:[%s180 + $0x16d8] sm:$0xff]
        %v947 = vld [vmem:[%s180 + $0x16e0] sm:$0xff]
        %v948 = vld [vmem:[%s180 + $0x16e8] sm:$0xff]
        %v949 = vld [vmem:[%s180 + $0x16f0] sm:$0xff]
        %v950 = vld [vmem:[%s180 + $0x16f8] sm:$0xff]
        %v951 = vld [vmem:[%s180 + $0x1700] sm:$0xff]
        %v952 = vld [vmem:[%s180 + $0x1708] sm:$0xff]
        %v953 = vld [vmem:[%s180 + $0x1710] sm:$0xff]
        %v954 = vld [vmem:[%s180 + $0x1718] sm:$0xff]
        %v955 = vld [vmem:[%s180 + $0x1720] sm:$0xff]
        %v956 = vld [vmem:[%s180 + $0x1728] sm:$0xff]
        %v957 = vld [vmem:[%s180 + $0x1730] sm:$0xff]
        %v958 = vld [vmem:[%s180 + $0x1738] sm:$0xff]
        %v959 = vld [vmem:[%s180 + $0x1740] sm:$0xff]
        %v960 = vld [vmem:[%s180 + $0x1748] sm:$0xff]
        %v961 = vld [vmem:[%s180 + $0x1750] sm:$0xff]
        %v962 = vld [vmem:[%s180 + $0x1758] sm:$0xff]
        %v963 = vld [vmem:[%s180 + $0x1760] sm:$0xff]
        %v964 = vld [vmem:[%s180 + $0x1768] sm:$0xff]
        %v965 = vld [vmem:[%s180 + $0x1770] sm:$0xff]
        %v966 = vld [vmem:[%s180 + $0x1778] sm:$0xff]
        %v967 = vld [vmem:[%s180 + $0x1780] sm:$0xff]
        %v968 = vld [vmem:[%s180 + $0x1788] sm:$0xff]
        %v969 = vld [vmem:[%s180 + $0x1790] sm:$0xff]
        %v970 = vld [vmem:[%s180 + $0x1798] sm:$0xff]
        %v971 = vld [vmem:[%s180 + $0x17a0] sm:$0xff]
        %v972 = vld [vmem:[%s180 + $0x17a8] sm:$0xff]
        %v973 = vld [vmem:[%s180 + $0x17b0] sm:$0xff]
        %v974 = vld [vmem:[%s180 + $0x17b8] sm:$0xff]
        %v975 = vld [vmem:[%s180 + $0x17c0] sm:$0xff]
        %v976 = vld [vmem:[%s180 + $0x17c8] sm:$0xff]
        %v977 = vld [vmem:[%s180 + $0x17d0] sm:$0xff]
        %v978 = vld [vmem:[%s180 + $0x17d8] sm:$0xff]
        %v979 = vld [vmem:[%s180 + $0x17e0] sm:$0xff]
        %v980 = vld [vmem:[%s180 + $0x17e8] sm:$0xff]
        %v981 = vld [vmem:[%s180 + $0x17f0] sm:$0xff]
        %v982 = vld [vmem:[%s180 + $0x17f8] sm:$0xff]
        %v983 = vld [vmem:[%s180 + $0x1800] sm:$0xff]
        %v984 = vld [vmem:[%s180 + $0x1808] sm:$0xff]
        %v985 = vld [vmem:[%s180 + $0x1810] sm:$0xff]
        %v986 = vld [vmem:[%s180 + $0x1818] sm:$0xff]
        %v987 = vld [vmem:[%s180 + $0x1820] sm:$0xff]
        %v988 = vld [vmem:[%s180 + $0x1828] sm:$0xff]
        %v989 = vld [vmem:[%s180 + $0x1830] sm:$0xff]
        %v990 = vld [vmem:[%s180 + $0x1838] sm:$0xff]
        %v991 = vld [vmem:[%s180 + $0x1840] sm:$0xff]
        %v992 = vld [vmem:[%s180 + $0x1848] sm:$0xff]
        %v993 = vld [vmem:[%s180 + $0x1850] sm:$0xff]
        %v994 = vld [vmem:[%s180 + $0x1858] sm:$0xff]
        %v995 = vld [vmem:[%s180 + $0x1860] sm:$0xff]
        %v996 = vld [vmem:[%s180 + $0x1868] sm:$0xff]
        %v997 = vld [vmem:[%s180 + $0x1870] sm:$0xff]
        %v998 = vld [vmem:[%s180 + $0x1878] sm:$0xff]
        %v999 = vld [vmem:[%s180 + $0x1880] sm:$0xff]
        %v1000 = vld [vmem:[%s180 + $0x1888] sm:$0xff]
        %v1001 = vld [vmem:[%s180 + $0x1890] sm:$0xff]
        %v1002 = vld [vmem:[%s180 + $0x1898] sm:$0xff]
        %v1003 = vld [vmem:[%s180 + $0x18a0] sm:$0xff]
        %v1004 = vld [vmem:[%s180 + $0x18a8] sm:$0xff]
        %v1005 = vld [vmem:[%s180 + $0x18b0] sm:$0xff]
        %v1006 = vld [vmem:[%s180 + $0x18b8] sm:$0xff]
        %v1007 = vld [vmem:[%s180 + $0x18c0] sm:$0xff]
        %v1008 = vld [vmem:[%s180 + $0x18c8] sm:$0xff]
        %v1009 = vld [vmem:[%s180 + $0x18d0] sm:$0xff]
        %v1010 = vld [vmem:[%s180 + $0x18d8] sm:$0xff]
        %v1011 = vld [vmem:[%s180 + $0x18e0] sm:$0xff]
        %v1012 = vld [vmem:[%s180 + $0x18e8] sm:$0xff]
        %v1013 = vld [vmem:[%s180 + $0x18f0] sm:$0xff]
        %v1014 = vld [vmem:[%s180 + $0x18f8] sm:$0xff]
        %v1015 = vld [vmem:[%s180 + $0x1900] sm:$0xff]
        %v1016 = vld [vmem:[%s180 + $0x1908] sm:$0xff]
        %v1017 = vld [vmem:[%s180 + $0x1910] sm:$0xff]
        %v1018 = vld [vmem:[%s180 + $0x1918] sm:$0xff]
        %v1019 = vld [vmem:[%s180 + $0x1920] sm:$0xff]
        %v1020 = vld [vmem:[%s180 + $0x1928] sm:$0xff]
        %v1021 = vld [vmem:[%s180 + $0x1930] sm:$0xff]
        %v1022 = vld [vmem:[%s180 + $0x1938] sm:$0xff]
        %v1023 = vld [vmem:[%s180 + $0x1940] sm:$0xff]
        %v1024 = vld [vmem:[%s180 + $0x1948] sm:$0xff]
        %v1025 = vld [vmem:[%s180 + $0x1950] sm:$0xff]
        %v1026 = vld [vmem:[%s180 + $0x1958] sm:$0xff]
        %v1027 = vld [vmem:[%s180 + $0x1960] sm:$0xff]
        %v1028 = vld [vmem:[%s180 + $0x1968] sm:$0xff]
        %v1029 = vld [vmem:[%s180 + $0x1970] sm:$0xff]
        %v1030 = vld [vmem:[%s180 + $0x1978] sm:$0xff]
        %v1031 = vld [vmem:[%s180 + $0x1980] sm:$0xff]
        %v1032 = vld [vmem:[%s180 + $0x1988] sm:$0xff]
        %v1033 = vld [vmem:[%s180 + $0x1990] sm:$0xff]
        %v1034 = vld [vmem:[%s180 + $0x1998] sm:$0xff]
        %v1035 = vld [vmem:[%s180 + $0x19a0] sm:$0xff]
        %v1036 = vld [vmem:[%s180 + $0x19a8] sm:$0xff]
        %v1037 = vld [vmem:[%s180 + $0x19b0] sm:$0xff]
        %v1038 = vld [vmem:[%s180 + $0x19b8] sm:$0xff]
        %v1039 = vld [vmem:[%s180 + $0x19c0] sm:$0xff]
        %v1040 = vld [vmem:[%s180 + $0x19c8] sm:$0xff]
        %v1041 = vld [vmem:[%s180 + $0x19d0] sm:$0xff]
        %v1042 = vld [vmem:[%s180 + $0x19d8] sm:$0xff]
        %v1043 = vld [vmem:[%s180 + $0x19e0] sm:$0xff]
        %v1044 = vld [vmem:[%s180 + $0x19e8] sm:$0xff]
        %v1045 = vld [vmem:[%s180 + $0x19f0] sm:$0xff]
        %v1046 = vld [vmem:[%s180 + $0x19f8] sm:$0xff]
        %v1047 = vld [vmem:[%s180 + $0x1a00] sm:$0xff]
        %v1048 = vld [vmem:[%s180 + $0x1a08] sm:$0xff]
        %v1049 = vld [vmem:[%s180 + $0x1a10] sm:$0xff]
        %v1050 = vld [vmem:[%s180 + $0x1a18] sm:$0xff]
        %v1051 = vld [vmem:[%s180 + $0x1a20] sm:$0xff]
        %v1052 = vld [vmem:[%s180 + $0x1a28] sm:$0xff]
        %v1053 = vld [vmem:[%s180 + $0x1a30] sm:$0xff]
        %v1054 = vld [vmem:[%s180 + $0x1a38] sm:$0xff]
        %v1055 = vld [vmem:[%s180 + $0x1a40] sm:$0xff]
        %v1056 = vld [vmem:[%s180 + $0x1a48] sm:$0xff]
        %v1057 = vld [vmem:[%s180 + $0x1a50] sm:$0xff]
        %v1058 = vld [vmem:[%s180 + $0x1a58] sm:$0xff]
        %v1059 = vld [vmem:[%s180 + $0x1a60] sm:$0xff]
        %v1060 = vld [vmem:[%s180 + $0x1a68] sm:$0xff]
        %v1061 = vld [vmem:[%s180 + $0x1a70] sm:$0xff]
        %v1062 = vld [vmem:[%s180 + $0x1a78] sm:$0xff]
        %v1063 = vld [vmem:[%s180 + $0x1a80] sm:$0xff]
        %v1064 = vld [vmem:[%s180 + $0x1a88] sm:$0xff]
        %v1065 = vld [vmem:[%s180 + $0x1a90] sm:$0xff]
        %v1066 = vld [vmem:[%s180 + $0x1a98] sm:$0xff]
        %v1067 = vld [vmem:[%s180 + $0x1aa0] sm:$0xff]
        %v1068 = vld [vmem:[%s180 + $0x1aa8] sm:$0xff]
        %v1069 = vld [vmem:[%s180 + $0x1ab0] sm:$0xff]
        %v1070 = vld [vmem:[%s180 + $0x1ab8] sm:$0xff]
        %v1071 = vld [vmem:[%s180 + $0x1ac0] sm:$0xff]
        %v1072 = vld [vmem:[%s180 + $0x1ac8] sm:$0xff]
        %v1073 = vld [vmem:[%s180 + $0x1ad0] sm:$0xff]
        %v1074 = vld [vmem:[%s180 + $0x1ad8] sm:$0xff]
        %v1075 = vld [vmem:[%s180 + $0x1ae0] sm:$0xff]
        %v1076 = vld [vmem:[%s180 + $0x1ae8] sm:$0xff]
        %v1077 = vld [vmem:[%s180 + $0x1af0] sm:$0xff]
        %v1078 = vld [vmem:[%s180 + $0x1af8] sm:$0xff]
        %v1079 = vld [vmem:[%s180 + $0x1b00] sm:$0xff]
        %v1080 = vld [vmem:[%s180 + $0x1b08] sm:$0xff]
        %v1081 = vld [vmem:[%s180 + $0x1b10] sm:$0xff]
        %v1082 = vld [vmem:[%s180 + $0x1b18] sm:$0xff]
        %v1083 = vld [vmem:[%s180 + $0x1b20] sm:$0xff]
        %v1084 = vld [vmem:[%s180 + $0x1b28] sm:$0xff]
        %v1085 = vld [vmem:[%s180 + $0x1b30] sm:$0xff]
        %v1086 = vld [vmem:[%s180 + $0x1b38] sm:$0xff]
        %v1087 = vld [vmem:[%s180 + $0x1b40] sm:$0xff]
        %v1088 = vld [vmem:[%s180 + $0x1b48] sm:$0xff]
        %v1089 = vld [vmem:[%s180 + $0x1b50] sm:$0xff]
        %v1090 = vld [vmem:[%s180 + $0x1b58] sm:$0xff]
        %v1091 = vld [vmem:[%s180 + $0x1b60] sm:$0xff]
        %v1092 = vld [vmem:[%s180 + $0x1b68] sm:$0xff]
        %v1093 = vld [vmem:[%s180 + $0x1b70] sm:$0xff]
        %v1094 = vld [vmem:[%s180 + $0x1b78] sm:$0xff]
        %v1095 = vld [vmem:[%s180 + $0x1b80] sm:$0xff]
        %v1096 = vld [vmem:[%s180 + $0x1b88] sm:$0xff]
        %v1097 = vld [vmem:[%s180 + $0x1b90] sm:$0xff]
        %v1098 = vld [vmem:[%s180 + $0x1b98] sm:$0xff]
        %v1099 = vld [vmem:[%s180 + $0x1ba0] sm:$0xff]
        %v1100 = vld [vmem:[%s180 + $0x1ba8] sm:$0xff]
        %v1101 = vld [vmem:[%s180 + $0x1bb0] sm:$0xff]
        %v1102 = vld [vmem:[%s180 + $0x1bb8] sm:$0xff]
        %v1103 = vld [vmem:[%s180 + $0x1bc0] sm:$0xff]
        %v1104 = vld [vmem:[%s180 + $0x1bc8] sm:$0xff]
        %v1105 = vld [vmem:[%s180 + $0x1bd0] sm:$0xff]
        %v1106 = vld [vmem:[%s180 + $0x1bd8] sm:$0xff]
        %v1107 = vld [vmem:[%s180 + $0x1be0] sm:$0xff]
        %v1108 = vld [vmem:[%s180 + $0x1be8] sm:$0xff]
        %v1109 = vld [vmem:[%s180 + $0x1bf0] sm:$0xff]
        %v1110 = vld [vmem:[%s180 + $0x1bf8] sm:$0xff]
        %v1111 = vld [vmem:[%s180 + $0x1c00] sm:$0xff]
        %v1112 = vld [vmem:[%s180 + $0x1c08] sm:$0xff]
        %v1113 = vld [vmem:[%s180 + $0x1c10] sm:$0xff]
        %v1114 = vld [vmem:[%s180 + $0x1c18] sm:$0xff]
        %v1115 = vld [vmem:[%s180 + $0x1c20] sm:$0xff]
        %v1116 = vld [vmem:[%s180 + $0x1c28] sm:$0xff]
        %v1117 = vld [vmem:[%s180 + $0x1c30] sm:$0xff]
        %v1118 = vld [vmem:[%s180 + $0x1c38] sm:$0xff]
        %v1119 = vld [vmem:[%s180 + $0x1c40] sm:$0xff]
        %v1120 = vld [vmem:[%s180 + $0x1c48] sm:$0xff]
        %v1121 = vld [vmem:[%s180 + $0x1c50] sm:$0xff]
        %v1122 = vld [vmem:[%s180 + $0x1c58] sm:$0xff]
        %v1123 = vld [vmem:[%s180 + $0x1c60] sm:$0xff]
        %v1124 = vld [vmem:[%s180 + $0x1c68] sm:$0xff]
        %v1125 = vld [vmem:[%s180 + $0x1c70] sm:$0xff]
        %v1126 = vld [vmem:[%s180 + $0x1c78] sm:$0xff]
        %v1127 = vld [vmem:[%s180 + $0x1c80] sm:$0xff]
        %v1128 = vld [vmem:[%s180 + $0x1c88] sm:$0xff]
        %v1129 = vld [vmem:[%s180 + $0x1c90] sm:$0xff]
        %v1130 = vld [vmem:[%s180 + $0x1c98] sm:$0xff]
        %v1131 = vld [vmem:[%s180 + $0x1ca0] sm:$0xff]
        %v1132 = vld [vmem:[%s180 + $0x1ca8] sm:$0xff]
        %v1133 = vld [vmem:[%s180 + $0x1cb0] sm:$0xff]
        %v1134 = vld [vmem:[%s180 + $0x1cb8] sm:$0xff]
        %v1135 = vld [vmem:[%s180 + $0x1cc0] sm:$0xff]
        %v1136 = vld [vmem:[%s180 + $0x1cc8] sm:$0xff]
        %v1137 = vld [vmem:[%s180 + $0x1cd0] sm:$0xff]
        %v1138 = vld [vmem:[%s180 + $0x1cd8] sm:$0xff]
        %v1139 = vld [vmem:[%s180 + $0x1ce0] sm:$0xff]
        %v1140 = vld [vmem:[%s180 + $0x1ce8] sm:$0xff]
        %v1141 = vld [vmem:[%s180 + $0x1cf0] sm:$0xff]
        %v1142 = vld [vmem:[%s180 + $0x1cf8] sm:$0xff]
        %v1143 = vld [vmem:[%s180 + $0x1d00] sm:$0xff]
        %v1144 = vld [vmem:[%s180 + $0x1d08] sm:$0xff]
        %v1145 = vld [vmem:[%s180 + $0x1d10] sm:$0xff]
        %v1146 = vld [vmem:[%s180 + $0x1d18] sm:$0xff]
        %v1147 = vld [vmem:[%s180 + $0x1d20] sm:$0xff]
        %v1148 = vld [vmem:[%s180 + $0x1d28] sm:$0xff]
        %v1149 = vld [vmem:[%s180 + $0x1d30] sm:$0xff]
        %v1150 = vld [vmem:[%s180 + $0x1d38] sm:$0xff]
        %v1151 = vld [vmem:[%s180 + $0x1d40] sm:$0xff]
        %v1152 = vld [vmem:[%s180 + $0x1d48] sm:$0xff]
        %v1153 = vld [vmem:[%s180 + $0x1d50] sm:$0xff]
        %v1154 = vld [vmem:[%s180 + $0x1d58] sm:$0xff]
        %v1155 = vld [vmem:[%s180 + $0x1d60] sm:$0xff]
        %v1156 = vld [vmem:[%s180 + $0x1d68] sm:$0xff]
        %v1157 = vld [vmem:[%s180 + $0x1d70] sm:$0xff]
        %v1158 = vld [vmem:[%s180 + $0x1d78] sm:$0xff]
        %v1159 = vld [vmem:[%s180 + $0x1d80] sm:$0xff]
        %v1160 = vld [vmem:[%s180 + $0x1d88] sm:$0xff]
        %v1161 = vld [vmem:[%s180 + $0x1d90] sm:$0xff]
        %v1162 = vld [vmem:[%s180 + $0x1d98] sm:$0xff]
        %v1163 = vld [vmem:[%s180 + $0x1da0] sm:$0xff]
        %v1164 = vld [vmem:[%s180 + $0x1da8] sm:$0xff]
        %v1165 = vld [vmem:[%s180 + $0x1db0] sm:$0xff]
        %v1166 = vld [vmem:[%s180 + $0x1db8] sm:$0xff]
        %v1167 = vld [vmem:[%s180 + $0x1dc0] sm:$0xff]
        %v1168 = vld [vmem:[%s180 + $0x1dc8] sm:$0xff]
        %v1169 = vld [vmem:[%s180 + $0x1dd0] sm:$0xff]
        %v1170 = vld [vmem:[%s180 + $0x1dd8] sm:$0xff]
        %v1171 = vld [vmem:[%s180 + $0x1de0] sm:$0xff]
        %v1172 = vld [vmem:[%s180 + $0x1de8] sm:$0xff]
        %v1173 = vld [vmem:[%s180 + $0x1df0] sm:$0xff]
        %v1174 = vld [vmem:[%s180 + $0x1df8] sm:$0xff]
        %v1175 = vld [vmem:[%s180 + $0x1e00] sm:$0xff]
        %v1176 = vld [vmem:[%s180 + $0x1e08] sm:$0xff]
        %v1177 = vld [vmem:[%s180 + $0x1e10] sm:$0xff]
        %v1178 = vld [vmem:[%s180 + $0x1e18] sm:$0xff]
        %v1179 = vld [vmem:[%s180 + $0x1e20] sm:$0xff]
        %v1180 = vld [vmem:[%s180 + $0x1e28] sm:$0xff]
        %v1181 = vld [vmem:[%s180 + $0x1e30] sm:$0xff]
        %v1182 = vld [vmem:[%s180 + $0x1e38] sm:$0xff]
        %v1183 = vld [vmem:[%s180 + $0x1e40] sm:$0xff]
        %v1184 = vld [vmem:[%s180 + $0x1e48] sm:$0xff]
        %v1185 = vld [vmem:[%s180 + $0x1e50] sm:$0xff]
        %v1186 = vld [vmem:[%s180 + $0x1e58] sm:$0xff]
        %v1187 = vld [vmem:[%s180 + $0x1e60] sm:$0xff]
        %v1188 = vld [vmem:[%s180 + $0x1e68] sm:$0xff]
        %v1189 = vld [vmem:[%s180 + $0x1e70] sm:$0xff]
        %v1190 = vld [vmem:[%s180 + $0x1e78] sm:$0xff]
        %v1191 = vld [vmem:[%s180 + $0x1e80] sm:$0xff]
        %v1192 = vld [vmem:[%s180 + $0x1e88] sm:$0xff]
        %v1193 = vld [vmem:[%s180 + $0x1e90] sm:$0xff]
        %v1194 = vld [vmem:[%s180 + $0x1e98] sm:$0xff]
        %v1195 = vld [vmem:[%s180 + $0x1ea0] sm:$0xff]
        %v1196 = vld [vmem:[%s180 + $0x1ea8] sm:$0xff]
        %v1197 = vld [vmem:[%s180 + $0x1eb0] sm:$0xff]
        %v1198 = vld [vmem:[%s180 + $0x1eb8] sm:$0xff]
        %v1199 = vld [vmem:[%s180 + $0x1ec0] sm:$0xff]
        %v1200 = vld [vmem:[%s180 + $0x1ec8] sm:$0xff]
        %v1201 = vld [vmem:[%s180 + $0x1ed0] sm:$0xff]
        %v1202 = vld [vmem:[%s180 + $0x1ed8] sm:$0xff]
        %v1203 = vld [vmem:[%s180 + $0x1ee0] sm:$0xff]
        %v1204 = vld [vmem:[%s180 + $0x1ee8] sm:$0xff]
        %v1205 = vld [vmem:[%s180 + $0x1ef0] sm:$0xff]
        %v1206 = vld [vmem:[%s180 + $0x1ef8] sm:$0xff]
        %v1207 = vld [vmem:[%s180 + $0x1f00] sm:$0xff]
        %v1208 = vld [vmem:[%s180 + $0x1f08] sm:$0xff]
        %v1209 = vld [vmem:[%s180 + $0x1f10] sm:$0xff]
        %v1210 = vld [vmem:[%s180 + $0x1f18] sm:$0xff]
        %v1211 = vld [vmem:[%s180 + $0x1f20] sm:$0xff]
        %v1212 = vld [vmem:[%s180 + $0x1f28] sm:$0xff]
        %v1213 = vld [vmem:[%s180 + $0x1f30] sm:$0xff]
        %v1214 = vld [vmem:[%s180 + $0x1f38] sm:$0xff]
        %v1215 = vld [vmem:[%s180 + $0x1f40] sm:$0xff]
        %v1216 = vld [vmem:[%s180 + $0x1f48] sm:$0xff]
        %v1217 = vld [vmem:[%s180 + $0x1f50] sm:$0xff]
        %v1218 = vld [vmem:[%s180 + $0x1f58] sm:$0xff]
        %v1219 = vld [vmem:[%s180 + $0x1f60] sm:$0xff]
        %v1220 = vld [vmem:[%s180 + $0x1f68] sm:$0xff]
        %v1221 = vld [vmem:[%s180 + $0x1f70] sm:$0xff]
        %v1222 = vld [vmem:[%s180 + $0x1f78] sm:$0xff]
        %v1223 = vld [vmem:[%s180 + $0x1f80] sm:$0xff]
        %v1224 = vld [vmem:[%s180 + $0x1f88] sm:$0xff]
        %v1225 = vld [vmem:[%s180 + $0x1f90] sm:$0xff]
        %v1226 = vld [vmem:[%s180 + $0x1f98] sm:$0xff]
        %v1227 = vld [vmem:[%s180 + $0x1fa0] sm:$0xff]
        %v1228 = vld [vmem:[%s180 + $0x1fa8] sm:$0xff]
        %v1229 = vld [vmem:[%s180 + $0x1fb0] sm:$0xff]
        %v1230 = vld [vmem:[%s180 + $0x1fb8] sm:$0xff]
        %v1231 = vld [vmem:[%s180 + $0x1fc0] sm:$0xff]
        %v1232 = vld [vmem:[%s180 + $0x1fc8] sm:$0xff]
        %v1233 = vld [vmem:[%s180 + $0x1fd0] sm:$0xff]
        %v1234 = vld [vmem:[%s180 + $0x1fd8] sm:$0xff]
        %v1235 = vld [vmem:[%s180 + $0x1fe0] sm:$0xff]
        %v1236 = vld [vmem:[%s180 + $0x1fe8] sm:$0xff]
        %v1237 = vld [vmem:[%s180 + $0x1ff0] sm:$0xff]
        %v1238 = vld [vmem:[%s180 + $0x1ff8] sm:$0xff]
        %v1239 = vtanh.pop %v215
        %v1240 = vtanh.pop %v216
        %v1241 = vtanh.pop %v217
        %v1242 = vtanh.pop %v218
        %v1243 = vtanh.pop %v219
        %v1244 = vtanh.pop %v220
        %v1245 = vtanh.pop %v221
        %v1246 = vtanh.pop %v222
        %v1247 = vtanh.pop %v223
        %v1248 = vtanh.pop %v224
        %v1249 = vtanh.pop %v225
        %v1250 = vtanh.pop %v226
        %v1251 = vtanh.pop %v227
        %v1252 = vtanh.pop %v228
        %v1253 = vtanh.pop %v229
        %v1254 = vtanh.pop %v230
        %v1255 = vtanh.pop %v231
        %v1256 = vtanh.pop %v232
        %v1257 = vtanh.pop %v233
        %v1258 = vtanh.pop %v234
        %v1259 = vtanh.pop %v235
        %v1260 = vtanh.pop %v236
        %v1261 = vtanh.pop %v237
        %v1262 = vtanh.pop %v238
        %v1263 = vtanh.pop %v239
        %v1264 = vtanh.pop %v240
        %v1265 = vtanh.pop %v241
        %v1266 = vtanh.pop %v242
        %v1267 = vtanh.pop %v243
        %v1268 = vtanh.pop %v244
        %v1269 = vtanh.pop %v245
        %v1270 = vtanh.pop %v246
        %v1271 = vtanh.pop %v247
        %v1272 = vtanh.pop %v248
        %v1273 = vtanh.pop %v249
        %v1274 = vtanh.pop %v250
        %v1275 = vtanh.pop %v251
        %v1276 = vtanh.pop %v252
        %v1277 = vtanh.pop %v253
        %v1278 = vtanh.pop %v254
        %v1279 = vtanh.pop %v255
        %v1280 = vtanh.pop %v256
        %v1281 = vtanh.pop %v257
        %v1282 = vtanh.pop %v258
        %v1283 = vtanh.pop %v259
        %v1284 = vtanh.pop %v260
        %v1285 = vtanh.pop %v261
        %v1286 = vtanh.pop %v262
        %v1287 = vtanh.pop %v263
        %v1288 = vtanh.pop %v264
        %v1289 = vtanh.pop %v265
        %v1290 = vtanh.pop %v266
        %v1291 = vtanh.pop %v267
        %v1292 = vtanh.pop %v268
        %v1293 = vtanh.pop %v269
        %v1294 = vtanh.pop %v270
        %v1295 = vtanh.pop %v271
        %v1296 = vtanh.pop %v272
        %v1297 = vtanh.pop %v273
        %v1298 = vtanh.pop %v274
        %v1299 = vtanh.pop %v275
        %v1300 = vtanh.pop %v276
        %v1301 = vtanh.pop %v277
        %v1302 = vtanh.pop %v278
        %v1303 = vtanh.pop %v279
        %v1304 = vtanh.pop %v280
        %v1305 = vtanh.pop %v281
        %v1306 = vtanh.pop %v282
        %v1307 = vtanh.pop %v283
        %v1308 = vtanh.pop %v284
        %v1309 = vtanh.pop %v285
        %v1310 = vtanh.pop %v286
        %v1311 = vtanh.pop %v287
        %v1312 = vtanh.pop %v288
        %v1313 = vtanh.pop %v289
        %v1314 = vtanh.pop %v290
        %v1315 = vtanh.pop %v291
        %v1316 = vtanh.pop %v292
        %v1317 = vtanh.pop %v293
        %v1318 = vtanh.pop %v294
        %v1319 = vtanh.pop %v295
        %v1320 = vtanh.pop %v296
        %v1321 = vtanh.pop %v297
        %v1322 = vtanh.pop %v298
        %v1323 = vtanh.pop %v299
        %v1324 = vtanh.pop %v300
        %v1325 = vtanh.pop %v301
        %v1326 = vtanh.pop %v302
        %v1327 = vtanh.pop %v303
        %v1328 = vtanh.pop %v304
        %v1329 = vtanh.pop %v305
        %v1330 = vtanh.pop %v306
        %v1331 = vtanh.pop %v307
        %v1332 = vtanh.pop %v308
        %v1333 = vtanh.pop %v309
        %v1334 = vtanh.pop %v310
        %v1335 = vtanh.pop %v311
        %v1336 = vtanh.pop %v312
        %v1337 = vtanh.pop %v313
        %v1338 = vtanh.pop %v314
        %v1339 = vtanh.pop %v315
        %v1340 = vtanh.pop %v316
        %v1341 = vtanh.pop %v317
        %v1342 = vtanh.pop %v318
        %v1343 = vtanh.pop %v319
        %v1344 = vtanh.pop %v320
        %v1345 = vtanh.pop %v321
        %v1346 = vtanh.pop %v322
        %v1347 = vtanh.pop %v323
        %v1348 = vtanh.pop %v324
        %v1349 = vtanh.pop %v325
        %v1350 = vtanh.pop %v326
        %v1351 = vtanh.pop %v327
        %v1352 = vtanh.pop %v328
        %v1353 = vtanh.pop %v329
        %v1354 = vtanh.pop %v330
        %v1355 = vtanh.pop %v331
        %v1356 = vtanh.pop %v332
        %v1357 = vtanh.pop %v333
        %v1358 = vtanh.pop %v334
        %v1359 = vtanh.pop %v335
        %v1360 = vtanh.pop %v336
        %v1361 = vtanh.pop %v337
        %v1362 = vtanh.pop %v338
        %v1363 = vtanh.pop %v339
        %v1364 = vtanh.pop %v340
        %v1365 = vtanh.pop %v341
        %v1366 = vtanh.pop %v342
        %v1367 = vtanh.pop %v343
        %v1368 = vtanh.pop %v344
        %v1369 = vtanh.pop %v345
        %v1370 = vtanh.pop %v346
        %v1371 = vtanh.pop %v347
        %v1372 = vtanh.pop %v348
        %v1373 = vtanh.pop %v349
        %v1374 = vtanh.pop %v350
        %v1375 = vtanh.pop %v351
        %v1376 = vtanh.pop %v352
        %v1377 = vtanh.pop %v353
        %v1378 = vtanh.pop %v354
        %v1379 = vtanh.pop %v355
        %v1380 = vtanh.pop %v356
        %v1381 = vtanh.pop %v357
        %v1382 = vtanh.pop %v358
        %v1383 = vtanh.pop %v359
        %v1384 = vtanh.pop %v360
        %v1385 = vtanh.pop %v361
        %v1386 = vtanh.pop %v362
        %v1387 = vtanh.pop %v363
        %v1388 = vtanh.pop %v364
        %v1389 = vtanh.pop %v365
        %v1390 = vtanh.pop %v366
        %v1391 = vtanh.pop %v367
        %v1392 = vtanh.pop %v368
        %v1393 = vtanh.pop %v369
        %v1394 = vtanh.pop %v370
        %v1395 = vtanh.pop %v371
        %v1396 = vtanh.pop %v372
        %v1397 = vtanh.pop %v373
        %v1398 = vtanh.pop %v374
        %v1399 = vtanh.pop %v375
        %v1400 = vtanh.pop %v376
        %v1401 = vtanh.pop %v377
        %v1402 = vtanh.pop %v378
        %v1403 = vtanh.pop %v379
        %v1404 = vtanh.pop %v380
        %v1405 = vtanh.pop %v381
        %v1406 = vtanh.pop %v382
        %v1407 = vtanh.pop %v383
        %v1408 = vtanh.pop %v384
        %v1409 = vtanh.pop %v385
        %v1410 = vtanh.pop %v386
        %v1411 = vtanh.pop %v387
        %v1412 = vtanh.pop %v388
        %v1413 = vtanh.pop %v389
        %v1414 = vtanh.pop %v390
        %v1415 = vtanh.pop %v391
        %v1416 = vtanh.pop %v392
        %v1417 = vtanh.pop %v393
        %v1418 = vtanh.pop %v394
        %v1419 = vtanh.pop %v395
        %v1420 = vtanh.pop %v396
        %v1421 = vtanh.pop %v397
        %v1422 = vtanh.pop %v398
        %v1423 = vtanh.pop %v399
        %v1424 = vtanh.pop %v400
        %v1425 = vtanh.pop %v401
        %v1426 = vtanh.pop %v402
        %v1427 = vtanh.pop %v403
        %v1428 = vtanh.pop %v404
        %v1429 = vtanh.pop %v405
        %v1430 = vtanh.pop %v406
        %v1431 = vtanh.pop %v407
        %v1432 = vtanh.pop %v408
        %v1433 = vtanh.pop %v409
        %v1434 = vtanh.pop %v410
        %v1435 = vtanh.pop %v411
        %v1436 = vtanh.pop %v412
        %v1437 = vtanh.pop %v413
        %v1438 = vtanh.pop %v414
        %v1439 = vtanh.pop %v415
        %v1440 = vtanh.pop %v416
        %v1441 = vtanh.pop %v417
        %v1442 = vtanh.pop %v418
        %v1443 = vtanh.pop %v419
        %v1444 = vtanh.pop %v420
        %v1445 = vtanh.pop %v421
        %v1446 = vtanh.pop %v422
        %v1447 = vtanh.pop %v423
        %v1448 = vtanh.pop %v424
        %v1449 = vtanh.pop %v425
        %v1450 = vtanh.pop %v426
        %v1451 = vtanh.pop %v427
        %v1452 = vtanh.pop %v428
        %v1453 = vtanh.pop %v429
        %v1454 = vtanh.pop %v430
        %v1455 = vtanh.pop %v431
        %v1456 = vtanh.pop %v432
        %v1457 = vtanh.pop %v433
        %v1458 = vtanh.pop %v434
        %v1459 = vtanh.pop %v435
        %v1460 = vtanh.pop %v436
        %v1461 = vtanh.pop %v437
        %v1462 = vtanh.pop %v438
        %v1463 = vtanh.pop %v439
        %v1464 = vtanh.pop %v440
        %v1465 = vtanh.pop %v441
        %v1466 = vtanh.pop %v442
        %v1467 = vtanh.pop %v443
        %v1468 = vtanh.pop %v444
        %v1469 = vtanh.pop %v445
        %v1470 = vtanh.pop %v446
        %v1471 = vtanh.pop %v447
        %v1472 = vtanh.pop %v448
        %v1473 = vtanh.pop %v449
        %v1474 = vtanh.pop %v450
        %v1475 = vtanh.pop %v451
        %v1476 = vtanh.pop %v452
        %v1477 = vtanh.pop %v453
        %v1478 = vtanh.pop %v454
        %v1479 = vtanh.pop %v455
        %v1480 = vtanh.pop %v456
        %v1481 = vtanh.pop %v457
        %v1482 = vtanh.pop %v458
        %v1483 = vtanh.pop %v459
        %v1484 = vtanh.pop %v460
        %v1485 = vtanh.pop %v461
        %v1486 = vtanh.pop %v462
        %v1487 = vtanh.pop %v463
        %v1488 = vtanh.pop %v464
        %v1489 = vtanh.pop %v465
        %v1490 = vtanh.pop %v466
        %v1491 = vtanh.pop %v467
        %v1492 = vtanh.pop %v468
        %v1493 = vtanh.pop %v469
        %v1494 = vtanh.pop %v470
        %v1495 = vtanh.pop %v471
        %v1496 = vtanh.pop %v472
        %v1497 = vtanh.pop %v473
        %v1498 = vtanh.pop %v474
        %v1499 = vtanh.pop %v475
        %v1500 = vtanh.pop %v476
        %v1501 = vtanh.pop %v477
        %v1502 = vtanh.pop %v478
        %v1503 = vtanh.pop %v479
        %v1504 = vtanh.pop %v480
        %v1505 = vtanh.pop %v481
        %v1506 = vtanh.pop %v482
        %v1507 = vtanh.pop %v483
        %v1508 = vtanh.pop %v484
        %v1509 = vtanh.pop %v485
        %v1510 = vtanh.pop %v486
        %v1511 = vtanh.pop %v487
        %v1512 = vtanh.pop %v488
        %v1513 = vtanh.pop %v489
        %v1514 = vtanh.pop %v490
        %v1515 = vtanh.pop %v491
        %v1516 = vtanh.pop %v492
        %v1517 = vtanh.pop %v493
        %v1518 = vtanh.pop %v494
        %v1519 = vtanh.pop %v495
        %v1520 = vtanh.pop %v496
        %v1521 = vtanh.pop %v497
        %v1522 = vtanh.pop %v498
        %v1523 = vtanh.pop %v499
        %v1524 = vtanh.pop %v500
        %v1525 = vtanh.pop %v501
        %v1526 = vtanh.pop %v502
        %v1527 = vtanh.pop %v503
        %v1528 = vtanh.pop %v504
        %v1529 = vtanh.pop %v505
        %v1530 = vtanh.pop %v506
        %v1531 = vtanh.pop %v507
        %v1532 = vtanh.pop %v508
        %v1533 = vtanh.pop %v509
        %v1534 = vtanh.pop %v510
        %v1535 = vtanh.pop %v511
        %v1536 = vtanh.pop %v512
        %v1537 = vtanh.pop %v513
        %v1538 = vtanh.pop %v514
        %v1539 = vtanh.pop %v515
        %v1540 = vtanh.pop %v516
        %v1541 = vtanh.pop %v517
        %v1542 = vtanh.pop %v518
        %v1543 = vtanh.pop %v519
        %v1544 = vtanh.pop %v520
        %v1545 = vtanh.pop %v521
        %v1546 = vtanh.pop %v522
        %v1547 = vtanh.pop %v523
        %v1548 = vtanh.pop %v524
        %v1549 = vtanh.pop %v525
        %v1550 = vtanh.pop %v526
        %v1551 = vtanh.pop %v527
        %v1552 = vtanh.pop %v528
        %v1553 = vtanh.pop %v529
        %v1554 = vtanh.pop %v530
        %v1555 = vtanh.pop %v531
        %v1556 = vtanh.pop %v532
        %v1557 = vtanh.pop %v533
        %v1558 = vtanh.pop %v534
        %v1559 = vtanh.pop %v535
        %v1560 = vtanh.pop %v536
        %v1561 = vtanh.pop %v537
        %v1562 = vtanh.pop %v538
        %v1563 = vtanh.pop %v539
        %v1564 = vtanh.pop %v540
        %v1565 = vtanh.pop %v541
        %v1566 = vtanh.pop %v542
        %v1567 = vtanh.pop %v543
        %v1568 = vtanh.pop %v544
        %v1569 = vtanh.pop %v545
        %v1570 = vtanh.pop %v546
        %v1571 = vtanh.pop %v547
        %v1572 = vtanh.pop %v548
        %v1573 = vtanh.pop %v549
        %v1574 = vtanh.pop %v550
        %v1575 = vtanh.pop %v551
        %v1576 = vtanh.pop %v552
        %v1577 = vtanh.pop %v553
        %v1578 = vtanh.pop %v554
        %v1579 = vtanh.pop %v555
        %v1580 = vtanh.pop %v556
        %v1581 = vtanh.pop %v557
        %v1582 = vtanh.pop %v558
        %v1583 = vtanh.pop %v559
        %v1584 = vtanh.pop %v560
        %v1585 = vtanh.pop %v561
        %v1586 = vtanh.pop %v562
        %v1587 = vtanh.pop %v563
        %v1588 = vtanh.pop %v564
        %v1589 = vtanh.pop %v565
        %v1590 = vtanh.pop %v566
        %v1591 = vtanh.pop %v567
        %v1592 = vtanh.pop %v568
        %v1593 = vtanh.pop %v569
        %v1594 = vtanh.pop %v570
        %v1595 = vtanh.pop %v571
        %v1596 = vtanh.pop %v572
        %v1597 = vtanh.pop %v573
        %v1598 = vtanh.pop %v574
        %v1599 = vtanh.pop %v575
        %v1600 = vtanh.pop %v576
        %v1601 = vtanh.pop %v577
        %v1602 = vtanh.pop %v578
        %v1603 = vtanh.pop %v579
        %v1604 = vtanh.pop %v580
        %v1605 = vtanh.pop %v581
        %v1606 = vtanh.pop %v582
        %v1607 = vtanh.pop %v583
        %v1608 = vtanh.pop %v584
        %v1609 = vtanh.pop %v585
        %v1610 = vtanh.pop %v586
        %v1611 = vtanh.pop %v587
        %v1612 = vtanh.pop %v588
        %v1613 = vtanh.pop %v589
        %v1614 = vtanh.pop %v590
        %v1615 = vtanh.pop %v591
        %v1616 = vtanh.pop %v592
        %v1617 = vtanh.pop %v593
        %v1618 = vtanh.pop %v594
        %v1619 = vtanh.pop %v595
        %v1620 = vtanh.pop %v596
        %v1621 = vtanh.pop %v597
        %v1622 = vtanh.pop %v598
        %v1623 = vtanh.pop %v599
        %v1624 = vtanh.pop %v600
        %v1625 = vtanh.pop %v601
        %v1626 = vtanh.pop %v602
        %v1627 = vtanh.pop %v603
        %v1628 = vtanh.pop %v604
        %v1629 = vtanh.pop %v605
        %v1630 = vtanh.pop %v606
        %v1631 = vtanh.pop %v607
        %v1632 = vtanh.pop %v608
        %v1633 = vtanh.pop %v609
        %v1634 = vtanh.pop %v610
        %v1635 = vtanh.pop %v611
        %v1636 = vtanh.pop %v612
        %v1637 = vtanh.pop %v613
        %v1638 = vtanh.pop %v614
        %v1639 = vtanh.pop %v615
        %v1640 = vtanh.pop %v616
        %v1641 = vtanh.pop %v617
        %v1642 = vtanh.pop %v618
        %v1643 = vtanh.pop %v619
        %v1644 = vtanh.pop %v620
        %v1645 = vtanh.pop %v621
        %v1646 = vtanh.pop %v622
        %v1647 = vtanh.pop %v623
        %v1648 = vtanh.pop %v624
        %v1649 = vtanh.pop %v625
        %v1650 = vtanh.pop %v626
        %v1651 = vtanh.pop %v627
        %v1652 = vtanh.pop %v628
        %v1653 = vtanh.pop %v629
        %v1654 = vtanh.pop %v630
        %v1655 = vtanh.pop %v631
        %v1656 = vtanh.pop %v632
        %v1657 = vtanh.pop %v633
        %v1658 = vtanh.pop %v634
        %v1659 = vtanh.pop %v635
        %v1660 = vtanh.pop %v636
        %v1661 = vtanh.pop %v637
        %v1662 = vtanh.pop %v638
        %v1663 = vtanh.pop %v639
        %v1664 = vtanh.pop %v640
        %v1665 = vtanh.pop %v641
        %v1666 = vtanh.pop %v642
        %v1667 = vtanh.pop %v643
        %v1668 = vtanh.pop %v644
        %v1669 = vtanh.pop %v645
        %v1670 = vtanh.pop %v646
        %v1671 = vtanh.pop %v647
        %v1672 = vtanh.pop %v648
        %v1673 = vtanh.pop %v649
        %v1674 = vtanh.pop %v650
        %v1675 = vtanh.pop %v651
        %v1676 = vtanh.pop %v652
        %v1677 = vtanh.pop %v653
        %v1678 = vtanh.pop %v654
        %v1679 = vtanh.pop %v655
        %v1680 = vtanh.pop %v656
        %v1681 = vtanh.pop %v657
        %v1682 = vtanh.pop %v658
        %v1683 = vtanh.pop %v659
        %v1684 = vtanh.pop %v660
        %v1685 = vtanh.pop %v661
        %v1686 = vtanh.pop %v662
        %v1687 = vtanh.pop %v663
        %v1688 = vtanh.pop %v664
        %v1689 = vtanh.pop %v665
        %v1690 = vtanh.pop %v666
        %v1691 = vtanh.pop %v667
        %v1692 = vtanh.pop %v668
        %v1693 = vtanh.pop %v669
        %v1694 = vtanh.pop %v670
        %v1695 = vtanh.pop %v671
        %v1696 = vtanh.pop %v672
        %v1697 = vtanh.pop %v673
        %v1698 = vtanh.pop %v674
        %v1699 = vtanh.pop %v675
        %v1700 = vtanh.pop %v676
        %v1701 = vtanh.pop %v677
        %v1702 = vtanh.pop %v678
        %v1703 = vtanh.pop %v679
        %v1704 = vtanh.pop %v680
        %v1705 = vtanh.pop %v681
        %v1706 = vtanh.pop %v682
        %v1707 = vtanh.pop %v683
        %v1708 = vtanh.pop %v684
        %v1709 = vtanh.pop %v685
        %v1710 = vtanh.pop %v686
        %v1711 = vtanh.pop %v687
        %v1712 = vtanh.pop %v688
        %v1713 = vtanh.pop %v689
        %v1714 = vtanh.pop %v690
        %v1715 = vtanh.pop %v691
        %v1716 = vtanh.pop %v692
        %v1717 = vtanh.pop %v693
        %v1718 = vtanh.pop %v694
        %v1719 = vtanh.pop %v695
        %v1720 = vtanh.pop %v696
        %v1721 = vtanh.pop %v697
        %v1722 = vtanh.pop %v698
        %v1723 = vtanh.pop %v699
        %v1724 = vtanh.pop %v700
        %v1725 = vtanh.pop %v701
        %v1726 = vtanh.pop %v702
        %v1727 = vtanh.pop %v703
        %v1728 = vtanh.pop %v704
        %v1729 = vtanh.pop %v705
        %v1730 = vtanh.pop %v706
        %v1731 = vtanh.pop %v707
        %v1732 = vtanh.pop %v708
        %v1733 = vtanh.pop %v709
        %v1734 = vtanh.pop %v710
        %v1735 = vtanh.pop %v711
        %v1736 = vtanh.pop %v712
        %v1737 = vtanh.pop %v713
        %v1738 = vtanh.pop %v714
        %v1739 = vtanh.pop %v715
        %v1740 = vtanh.pop %v716
        %v1741 = vtanh.pop %v717
        %v1742 = vtanh.pop %v718
        %v1743 = vtanh.pop %v719
        %v1744 = vtanh.pop %v720
        %v1745 = vtanh.pop %v721
        %v1746 = vtanh.pop %v722
        %v1747 = vtanh.pop %v723
        %v1748 = vtanh.pop %v724
        %v1749 = vtanh.pop %v725
        %v1750 = vtanh.pop %v726
        %v1751 = vtanh.pop %v727
        %v1752 = vtanh.pop %v728
        %v1753 = vtanh.pop %v729
        %v1754 = vtanh.pop %v730
        %v1755 = vtanh.pop %v731
        %v1756 = vtanh.pop %v732
        %v1757 = vtanh.pop %v733
        %v1758 = vtanh.pop %v734
        %v1759 = vtanh.pop %v735
        %v1760 = vtanh.pop %v736
        %v1761 = vtanh.pop %v737
        %v1762 = vtanh.pop %v738
        %v1763 = vtanh.pop %v739
        %v1764 = vtanh.pop %v740
        %v1765 = vtanh.pop %v741
        %v1766 = vtanh.pop %v742
        %v1767 = vtanh.pop %v743
        %v1768 = vtanh.pop %v744
        %v1769 = vtanh.pop %v745
        %v1770 = vtanh.pop %v746
        %v1771 = vtanh.pop %v747
        %v1772 = vtanh.pop %v748
        %v1773 = vtanh.pop %v749
        %v1774 = vtanh.pop %v750
        %v1775 = vtanh.pop %v751
        %v1776 = vtanh.pop %v752
        %v1777 = vtanh.pop %v753
        %v1778 = vtanh.pop %v754
        %v1779 = vtanh.pop %v755
        %v1780 = vtanh.pop %v756
        %v1781 = vtanh.pop %v757
        %v1782 = vtanh.pop %v758
        %v1783 = vtanh.pop %v759
        %v1784 = vtanh.pop %v760
        %v1785 = vtanh.pop %v761
        %v1786 = vtanh.pop %v762
        %v1787 = vtanh.pop %v763
        %v1788 = vtanh.pop %v764
        %v1789 = vtanh.pop %v765
        %v1790 = vtanh.pop %v766
        %v1791 = vtanh.pop %v767
        %v1792 = vtanh.pop %v768
        %v1793 = vtanh.pop %v769
        %v1794 = vtanh.pop %v770
        %v1795 = vtanh.pop %v771
        %v1796 = vtanh.pop %v772
        %v1797 = vtanh.pop %v773
        %v1798 = vtanh.pop %v774
        %v1799 = vtanh.pop %v775
        %v1800 = vtanh.pop %v776
        %v1801 = vtanh.pop %v777
        %v1802 = vtanh.pop %v778
        %v1803 = vtanh.pop %v779
        %v1804 = vtanh.pop %v780
        %v1805 = vtanh.pop %v781
        %v1806 = vtanh.pop %v782
        %v1807 = vtanh.pop %v783
        %v1808 = vtanh.pop %v784
        %v1809 = vtanh.pop %v785
        %v1810 = vtanh.pop %v786
        %v1811 = vtanh.pop %v787
        %v1812 = vtanh.pop %v788
        %v1813 = vtanh.pop %v789
        %v1814 = vtanh.pop %v790
        %v1815 = vtanh.pop %v791
        %v1816 = vtanh.pop %v792
        %v1817 = vtanh.pop %v793
        %v1818 = vtanh.pop %v794
        %v1819 = vtanh.pop %v795
        %v1820 = vtanh.pop %v796
        %v1821 = vtanh.pop %v797
        %v1822 = vtanh.pop %v798
        %v1823 = vtanh.pop %v799
        %v1824 = vtanh.pop %v800
        %v1825 = vtanh.pop %v801
        %v1826 = vtanh.pop %v802
        %v1827 = vtanh.pop %v803
        %v1828 = vtanh.pop %v804
        %v1829 = vtanh.pop %v805
        %v1830 = vtanh.pop %v806
        %v1831 = vtanh.pop %v807
        %v1832 = vtanh.pop %v808
        %v1833 = vtanh.pop %v809
        %v1834 = vtanh.pop %v810
        %v1835 = vtanh.pop %v811
        %v1836 = vtanh.pop %v812
        %v1837 = vtanh.pop %v813
        %v1838 = vtanh.pop %v814
        %v1839 = vtanh.pop %v815
        %v1840 = vtanh.pop %v816
        %v1841 = vtanh.pop %v817
        %v1842 = vtanh.pop %v818
        %v1843 = vtanh.pop %v819
        %v1844 = vtanh.pop %v820
        %v1845 = vtanh.pop %v821
        %v1846 = vtanh.pop %v822
        %v1847 = vtanh.pop %v823
        %v1848 = vtanh.pop %v824
        %v1849 = vtanh.pop %v825
        %v1850 = vtanh.pop %v826
        %v1851 = vtanh.pop %v827
        %v1852 = vtanh.pop %v828
        %v1853 = vtanh.pop %v829
        %v1854 = vtanh.pop %v830
        %v1855 = vtanh.pop %v831
        %v1856 = vtanh.pop %v832
        %v1857 = vtanh.pop %v833
        %v1858 = vtanh.pop %v834
        %v1859 = vtanh.pop %v835
        %v1860 = vtanh.pop %v836
        %v1861 = vtanh.pop %v837
        %v1862 = vtanh.pop %v838
        %v1863 = vtanh.pop %v839
        %v1864 = vtanh.pop %v840
        %v1865 = vtanh.pop %v841
        %v1866 = vtanh.pop %v842
        %v1867 = vtanh.pop %v843
        %v1868 = vtanh.pop %v844
        %v1869 = vtanh.pop %v845
        %v1870 = vtanh.pop %v846
        %v1871 = vtanh.pop %v847
        %v1872 = vtanh.pop %v848
        %v1873 = vtanh.pop %v849
        %v1874 = vtanh.pop %v850
        %v1875 = vtanh.pop %v851
        %v1876 = vtanh.pop %v852
        %v1877 = vtanh.pop %v853
        %v1878 = vtanh.pop %v854
        %v1879 = vtanh.pop %v855
        %v1880 = vtanh.pop %v856
        %v1881 = vtanh.pop %v857
        %v1882 = vtanh.pop %v858
        %v1883 = vtanh.pop %v859
        %v1884 = vtanh.pop %v860
        %v1885 = vtanh.pop %v861
        %v1886 = vtanh.pop %v862
        %v1887 = vtanh.pop %v863
        %v1888 = vtanh.pop %v864
        %v1889 = vtanh.pop %v865
        %v1890 = vtanh.pop %v866
        %v1891 = vtanh.pop %v867
        %v1892 = vtanh.pop %v868
        %v1893 = vtanh.pop %v869
        %v1894 = vtanh.pop %v870
        %v1895 = vtanh.pop %v871
        %v1896 = vtanh.pop %v872
        %v1897 = vtanh.pop %v873
        %v1898 = vtanh.pop %v874
        %v1899 = vtanh.pop %v875
        %v1900 = vtanh.pop %v876
        %v1901 = vtanh.pop %v877
        %v1902 = vtanh.pop %v878
        %v1903 = vtanh.pop %v879
        %v1904 = vtanh.pop %v880
        %v1905 = vtanh.pop %v881
        %v1906 = vtanh.pop %v882
        %v1907 = vtanh.pop %v883
        %v1908 = vtanh.pop %v884
        %v1909 = vtanh.pop %v885
        %v1910 = vtanh.pop %v886
        %v1911 = vtanh.pop %v887
        %v1912 = vtanh.pop %v888
        %v1913 = vtanh.pop %v889
        %v1914 = vtanh.pop %v890
        %v1915 = vtanh.pop %v891
        %v1916 = vtanh.pop %v892
        %v1917 = vtanh.pop %v893
        %v1918 = vtanh.pop %v894
        %v1919 = vtanh.pop %v895
        %v1920 = vtanh.pop %v896
        %v1921 = vtanh.pop %v897
        %v1922 = vtanh.pop %v898
        %v1923 = vtanh.pop %v899
        %v1924 = vtanh.pop %v900
        %v1925 = vtanh.pop %v901
        %v1926 = vtanh.pop %v902
        %v1927 = vtanh.pop %v903
        %v1928 = vtanh.pop %v904
        %v1929 = vtanh.pop %v905
        %v1930 = vtanh.pop %v906
        %v1931 = vtanh.pop %v907
        %v1932 = vtanh.pop %v908
        %v1933 = vtanh.pop %v909
        %v1934 = vtanh.pop %v910
        %v1935 = vtanh.pop %v911
        %v1936 = vtanh.pop %v912
        %v1937 = vtanh.pop %v913
        %v1938 = vtanh.pop %v914
        %v1939 = vtanh.pop %v915
        %v1940 = vtanh.pop %v916
        %v1941 = vtanh.pop %v917
        %v1942 = vtanh.pop %v918
        %v1943 = vtanh.pop %v919
        %v1944 = vtanh.pop %v920
        %v1945 = vtanh.pop %v921
        %v1946 = vtanh.pop %v922
        %v1947 = vtanh.pop %v923
        %v1948 = vtanh.pop %v924
        %v1949 = vtanh.pop %v925
        %v1950 = vtanh.pop %v926
        %v1951 = vtanh.pop %v927
        %v1952 = vtanh.pop %v928
        %v1953 = vtanh.pop %v929
        %v1954 = vtanh.pop %v930
        %v1955 = vtanh.pop %v931
        %v1956 = vtanh.pop %v932
        %v1957 = vtanh.pop %v933
        %v1958 = vtanh.pop %v934
        %v1959 = vtanh.pop %v935
        %v1960 = vtanh.pop %v936
        %v1961 = vtanh.pop %v937
        %v1962 = vtanh.pop %v938
        %v1963 = vtanh.pop %v939
        %v1964 = vtanh.pop %v940
        %v1965 = vtanh.pop %v941
        %v1966 = vtanh.pop %v942
        %v1967 = vtanh.pop %v943
        %v1968 = vtanh.pop %v944
        %v1969 = vtanh.pop %v945
        %v1970 = vtanh.pop %v946
        %v1971 = vtanh.pop %v947
        %v1972 = vtanh.pop %v948
        %v1973 = vtanh.pop %v949
        %v1974 = vtanh.pop %v950
        %v1975 = vtanh.pop %v951
        %v1976 = vtanh.pop %v952
        %v1977 = vtanh.pop %v953
        %v1978 = vtanh.pop %v954
        %v1979 = vtanh.pop %v955
        %v1980 = vtanh.pop %v956
        %v1981 = vtanh.pop %v957
        %v1982 = vtanh.pop %v958
        %v1983 = vtanh.pop %v959
        %v1984 = vtanh.pop %v960
        %v1985 = vtanh.pop %v961
        %v1986 = vtanh.pop %v962
        %v1987 = vtanh.pop %v963
        %v1988 = vtanh.pop %v964
        %v1989 = vtanh.pop %v965
        %v1990 = vtanh.pop %v966
        %v1991 = vtanh.pop %v967
        %v1992 = vtanh.pop %v968
        %v1993 = vtanh.pop %v969
        %v1994 = vtanh.pop %v970
        %v1995 = vtanh.pop %v971
        %v1996 = vtanh.pop %v972
        %v1997 = vtanh.pop %v973
        %v1998 = vtanh.pop %v974
        %v1999 = vtanh.pop %v975
        %v2000 = vtanh.pop %v976
        %v2001 = vtanh.pop %v977
        %v2002 = vtanh.pop %v978
        %v2003 = vtanh.pop %v979
        %v2004 = vtanh.pop %v980
        %v2005 = vtanh.pop %v981
        %v2006 = vtanh.pop %v982
        %v2007 = vtanh.pop %v983
        %v2008 = vtanh.pop %v984
        %v2009 = vtanh.pop %v985
        %v2010 = vtanh.pop %v986
        %v2011 = vtanh.pop %v987
        %v2012 = vtanh.pop %v988
        %v2013 = vtanh.pop %v989
        %v2014 = vtanh.pop %v990
        %v2015 = vtanh.pop %v991
        %v2016 = vtanh.pop %v992
        %v2017 = vtanh.pop %v993
        %v2018 = vtanh.pop %v994
        %v2019 = vtanh.pop %v995
        %v2020 = vtanh.pop %v996
        %v2021 = vtanh.pop %v997
        %v2022 = vtanh.pop %v998
        %v2023 = vtanh.pop %v999
        %v2024 = vtanh.pop %v1000
        %v2025 = vtanh.pop %v1001
        %v2026 = vtanh.pop %v1002
        %v2027 = vtanh.pop %v1003
        %v2028 = vtanh.pop %v1004
        %v2029 = vtanh.pop %v1005
        %v2030 = vtanh.pop %v1006
        %v2031 = vtanh.pop %v1007
        %v2032 = vtanh.pop %v1008
        %v2033 = vtanh.pop %v1009
        %v2034 = vtanh.pop %v1010
        %v2035 = vtanh.pop %v1011
        %v2036 = vtanh.pop %v1012
        %v2037 = vtanh.pop %v1013
        %v2038 = vtanh.pop %v1014
        %v2039 = vtanh.pop %v1015
        %v2040 = vtanh.pop %v1016
        %v2041 = vtanh.pop %v1017
        %v2042 = vtanh.pop %v1018
        %v2043 = vtanh.pop %v1019
        %v2044 = vtanh.pop %v1020
        %v2045 = vtanh.pop %v1021
        %v2046 = vtanh.pop %v1022
        %v2047 = vtanh.pop %v1023
        %v2048 = vtanh.pop %v1024
        %v2049 = vtanh.pop %v1025
        %v2050 = vtanh.pop %v1026
        %v2051 = vtanh.pop %v1027
        %v2052 = vtanh.pop %v1028
        %v2053 = vtanh.pop %v1029
        %v2054 = vtanh.pop %v1030
        %v2055 = vtanh.pop %v1031
        %v2056 = vtanh.pop %v1032
        %v2057 = vtanh.pop %v1033
        %v2058 = vtanh.pop %v1034
        %v2059 = vtanh.pop %v1035
        %v2060 = vtanh.pop %v1036
        %v2061 = vtanh.pop %v1037
        %v2062 = vtanh.pop %v1038
        %v2063 = vtanh.pop %v1039
        %v2064 = vtanh.pop %v1040
        %v2065 = vtanh.pop %v1041
        %v2066 = vtanh.pop %v1042
        %v2067 = vtanh.pop %v1043
        %v2068 = vtanh.pop %v1044
        %v2069 = vtanh.pop %v1045
        %v2070 = vtanh.pop %v1046
        %v2071 = vtanh.pop %v1047
        %v2072 = vtanh.pop %v1048
        %v2073 = vtanh.pop %v1049
        %v2074 = vtanh.pop %v1050
        %v2075 = vtanh.pop %v1051
        %v2076 = vtanh.pop %v1052
        %v2077 = vtanh.pop %v1053
        %v2078 = vtanh.pop %v1054
        %v2079 = vtanh.pop %v1055
        %v2080 = vtanh.pop %v1056
        %v2081 = vtanh.pop %v1057
        %v2082 = vtanh.pop %v1058
        %v2083 = vtanh.pop %v1059
        %v2084 = vtanh.pop %v1060
        %v2085 = vtanh.pop %v1061
        %v2086 = vtanh.pop %v1062
        %v2087 = vtanh.pop %v1063
        %v2088 = vtanh.pop %v1064
        %v2089 = vtanh.pop %v1065
        %v2090 = vtanh.pop %v1066
        %v2091 = vtanh.pop %v1067
        %v2092 = vtanh.pop %v1068
        %v2093 = vtanh.pop %v1069
        %v2094 = vtanh.pop %v1070
        %v2095 = vtanh.pop %v1071
        %v2096 = vtanh.pop %v1072
        %v2097 = vtanh.pop %v1073
        %v2098 = vtanh.pop %v1074
        %v2099 = vtanh.pop %v1075
        %v2100 = vtanh.pop %v1076
        %v2101 = vtanh.pop %v1077
        %v2102 = vtanh.pop %v1078
        %v2103 = vtanh.pop %v1079
        %v2104 = vtanh.pop %v1080
        %v2105 = vtanh.pop %v1081
        %v2106 = vtanh.pop %v1082
        %v2107 = vtanh.pop %v1083
        %v2108 = vtanh.pop %v1084
        %v2109 = vtanh.pop %v1085
        %v2110 = vtanh.pop %v1086
        %v2111 = vtanh.pop %v1087
        %v2112 = vtanh.pop %v1088
        %v2113 = vtanh.pop %v1089
        %v2114 = vtanh.pop %v1090
        %v2115 = vtanh.pop %v1091
        %v2116 = vtanh.pop %v1092
        %v2117 = vtanh.pop %v1093
        %v2118 = vtanh.pop %v1094
        %v2119 = vtanh.pop %v1095
        %v2120 = vtanh.pop %v1096
        %v2121 = vtanh.pop %v1097
        %v2122 = vtanh.pop %v1098
        %v2123 = vtanh.pop %v1099
        %v2124 = vtanh.pop %v1100
        %v2125 = vtanh.pop %v1101
        %v2126 = vtanh.pop %v1102
        %v2127 = vtanh.pop %v1103
        %v2128 = vtanh.pop %v1104
        %v2129 = vtanh.pop %v1105
        %v2130 = vtanh.pop %v1106
        %v2131 = vtanh.pop %v1107
        %v2132 = vtanh.pop %v1108
        %v2133 = vtanh.pop %v1109
        %v2134 = vtanh.pop %v1110
        %v2135 = vtanh.pop %v1111
        %v2136 = vtanh.pop %v1112
        %v2137 = vtanh.pop %v1113
        %v2138 = vtanh.pop %v1114
        %v2139 = vtanh.pop %v1115
        %v2140 = vtanh.pop %v1116
        %v2141 = vtanh.pop %v1117
        %v2142 = vtanh.pop %v1118
        %v2143 = vtanh.pop %v1119
        %v2144 = vtanh.pop %v1120
        %v2145 = vtanh.pop %v1121
        %v2146 = vtanh.pop %v1122
        %v2147 = vtanh.pop %v1123
        %v2148 = vtanh.pop %v1124
        %v2149 = vtanh.pop %v1125
        %v2150 = vtanh.pop %v1126
        %v2151 = vtanh.pop %v1127
        %v2152 = vtanh.pop %v1128
        %v2153 = vtanh.pop %v1129
        %v2154 = vtanh.pop %v1130
        %v2155 = vtanh.pop %v1131
        %v2156 = vtanh.pop %v1132
        %v2157 = vtanh.pop %v1133
        %v2158 = vtanh.pop %v1134
        %v2159 = vtanh.pop %v1135
        %v2160 = vtanh.pop %v1136
        %v2161 = vtanh.pop %v1137
        %v2162 = vtanh.pop %v1138
        %v2163 = vtanh.pop %v1139
        %v2164 = vtanh.pop %v1140
        %v2165 = vtanh.pop %v1141
        %v2166 = vtanh.pop %v1142
        %v2167 = vtanh.pop %v1143
        %v2168 = vtanh.pop %v1144
        %v2169 = vtanh.pop %v1145
        %v2170 = vtanh.pop %v1146
        %v2171 = vtanh.pop %v1147
        %v2172 = vtanh.pop %v1148
        %v2173 = vtanh.pop %v1149
        %v2174 = vtanh.pop %v1150
        %v2175 = vtanh.pop %v1151
        %v2176 = vtanh.pop %v1152
        %v2177 = vtanh.pop %v1153
        %v2178 = vtanh.pop %v1154
        %v2179 = vtanh.pop %v1155
        %v2180 = vtanh.pop %v1156
        %v2181 = vtanh.pop %v1157
        %v2182 = vtanh.pop %v1158
        %v2183 = vtanh.pop %v1159
        %v2184 = vtanh.pop %v1160
        %v2185 = vtanh.pop %v1161
        %v2186 = vtanh.pop %v1162
        %v2187 = vtanh.pop %v1163
        %v2188 = vtanh.pop %v1164
        %v2189 = vtanh.pop %v1165
        %v2190 = vtanh.pop %v1166
        %v2191 = vtanh.pop %v1167
        %v2192 = vtanh.pop %v1168
        %v2193 = vtanh.pop %v1169
        %v2194 = vtanh.pop %v1170
        %v2195 = vtanh.pop %v1171
        %v2196 = vtanh.pop %v1172
        %v2197 = vtanh.pop %v1173
        %v2198 = vtanh.pop %v1174
        %v2199 = vtanh.pop %v1175
        %v2200 = vtanh.pop %v1176
        %v2201 = vtanh.pop %v1177
        %v2202 = vtanh.pop %v1178
        %v2203 = vtanh.pop %v1179
        %v2204 = vtanh.pop %v1180
        %v2205 = vtanh.pop %v1181
        %v2206 = vtanh.pop %v1182
        %v2207 = vtanh.pop %v1183
        %v2208 = vtanh.pop %v1184
        %v2209 = vtanh.pop %v1185
        %v2210 = vtanh.pop %v1186
        %v2211 = vtanh.pop %v1187
        %v2212 = vtanh.pop %v1188
        %v2213 = vtanh.pop %v1189
        %v2214 = vtanh.pop %v1190
        %v2215 = vtanh.pop %v1191
        %v2216 = vtanh.pop %v1192
        %v2217 = vtanh.pop %v1193
        %v2218 = vtanh.pop %v1194
        %v2219 = vtanh.pop %v1195
        %v2220 = vtanh.pop %v1196
        %v2221 = vtanh.pop %v1197
        %v2222 = vtanh.pop %v1198
        %v2223 = vtanh.pop %v1199
        %v2224 = vtanh.pop %v1200
        %v2225 = vtanh.pop %v1201
        %v2226 = vtanh.pop %v1202
        %v2227 = vtanh.pop %v1203
        %v2228 = vtanh.pop %v1204
        %v2229 = vtanh.pop %v1205
        %v2230 = vtanh.pop %v1206
        %v2231 = vtanh.pop %v1207
        %v2232 = vtanh.pop %v1208
        %v2233 = vtanh.pop %v1209
        %v2234 = vtanh.pop %v1210
        %v2235 = vtanh.pop %v1211
        %v2236 = vtanh.pop %v1212
        %v2237 = vtanh.pop %v1213
        %v2238 = vtanh.pop %v1214
        %v2239 = vtanh.pop %v1215
        %v2240 = vtanh.pop %v1216
        %v2241 = vtanh.pop %v1217
        %v2242 = vtanh.pop %v1218
        %v2243 = vtanh.pop %v1219
        %v2244 = vtanh.pop %v1220
        %v2245 = vtanh.pop %v1221
        %v2246 = vtanh.pop %v1222
        %v2247 = vtanh.pop %v1223
        %v2248 = vtanh.pop %v1224
        %v2249 = vtanh.pop %v1225
        %v2250 = vtanh.pop %v1226
        %v2251 = vtanh.pop %v1227
        %v2252 = vtanh.pop %v1228
        %v2253 = vtanh.pop %v1229
        %v2254 = vtanh.pop %v1230
        %v2255 = vtanh.pop %v1231
        %v2256 = vtanh.pop %v1232
        %v2257 = vtanh.pop %v1233
        %v2258 = vtanh.pop %v1234
        %v2259 = vtanh.pop %v1235
        %v2260 = vtanh.pop %v1236
        %v2261 = vtanh.pop %v1237
        %v2262 = vtanh.pop %v1238
        %v2263 = vld [vmem:[#allocation5] sm:$0x1]
        %v2265 = vlaneseq
        %v2266 = vshrl.u32 %v2265, 7
        %v2267 = vsub.s32 0, %v2266
        %v2268 = vrot.slane %v2263, %v2267
        %v2270 = vmul.f32 %v1239, %v2268
        %v2271 = vmul.f32 %v1240, %v2268
        %v2272 = vmul.f32 %v1241, %v2268
        %v2273 = vmul.f32 %v1242, %v2268
        %v2274 = vmul.f32 %v1243, %v2268
        %v2275 = vmul.f32 %v1244, %v2268
        %v2276 = vmul.f32 %v1245, %v2268
        %v2277 = vmul.f32 %v1246, %v2268
        %v2278 = vmul.f32 %v1247, %v2268
        %v2279 = vmul.f32 %v1248, %v2268
        %v2280 = vmul.f32 %v1249, %v2268
        %v2281 = vmul.f32 %v1250, %v2268
        %v2282 = vmul.f32 %v1251, %v2268
        %v2283 = vmul.f32 %v1252, %v2268
        %v2284 = vmul.f32 %v1253, %v2268
        %v2285 = vmul.f32 %v1254, %v2268
        %v2286 = vmul.f32 %v1255, %v2268
        %v2287 = vmul.f32 %v1256, %v2268
        %v2288 = vmul.f32 %v1257, %v2268
        %v2289 = vmul.f32 %v1258, %v2268
        %v2290 = vmul.f32 %v1259, %v2268
        %v2291 = vmul.f32 %v1260, %v2268
        %v2292 = vmul.f32 %v1261, %v2268
        %v2293 = vmul.f32 %v1262, %v2268
        %v2294 = vmul.f32 %v1263, %v2268
        %v2295 = vmul.f32 %v1264, %v2268
        %v2296 = vmul.f32 %v1265, %v2268
        %v2297 = vmul.f32 %v1266, %v2268
        %v2298 = vmul.f32 %v1267, %v2268
        %v2299 = vmul.f32 %v1268, %v2268
        %v2300 = vmul.f32 %v1269, %v2268
        %v2301 = vmul.f32 %v1270, %v2268
        %v2302 = vmul.f32 %v1271, %v2268
        %v2303 = vmul.f32 %v1272, %v2268
        %v2304 = vmul.f32 %v1273, %v2268
        %v2305 = vmul.f32 %v1274, %v2268
        %v2306 = vmul.f32 %v1275, %v2268
        %v2307 = vmul.f32 %v1276, %v2268
        %v2308 = vmul.f32 %v1277, %v2268
        %v2309 = vmul.f32 %v1278, %v2268
        %v2310 = vmul.f32 %v1279, %v2268
        %v2311 = vmul.f32 %v1280, %v2268
        %v2312 = vmul.f32 %v1281, %v2268
        %v2313 = vmul.f32 %v1282, %v2268
        %v2314 = vmul.f32 %v1283, %v2268
        %v2315 = vmul.f32 %v1284, %v2268
        %v2316 = vmul.f32 %v1285, %v2268
        %v2317 = vmul.f32 %v1286, %v2268
        %v2318 = vmul.f32 %v1287, %v2268
        %v2319 = vmul.f32 %v1288, %v2268
        %v2320 = vmul.f32 %v1289, %v2268
        %v2321 = vmul.f32 %v1290, %v2268
        %v2322 = vmul.f32 %v1291, %v2268
        %v2323 = vmul.f32 %v1292, %v2268
        %v2324 = vmul.f32 %v1293, %v2268
        %v2325 = vmul.f32 %v1294, %v2268
        %v2326 = vmul.f32 %v1295, %v2268
        %v2327 = vmul.f32 %v1296, %v2268
        %v2328 = vmul.f32 %v1297, %v2268
        %v2329 = vmul.f32 %v1298, %v2268
        %v2330 = vmul.f32 %v1299, %v2268
        %v2331 = vmul.f32 %v1300, %v2268
        %v2332 = vmul.f32 %v1301, %v2268
        %v2333 = vmul.f32 %v1302, %v2268
        %v2334 = vmul.f32 %v1303, %v2268
        %v2335 = vmul.f32 %v1304, %v2268
        %v2336 = vmul.f32 %v1305, %v2268
        %v2337 = vmul.f32 %v1306, %v2268
        %v2338 = vmul.f32 %v1307, %v2268
        %v2339 = vmul.f32 %v1308, %v2268
        %v2340 = vmul.f32 %v1309, %v2268
        %v2341 = vmul.f32 %v1310, %v2268
        %v2342 = vmul.f32 %v1311, %v2268
        %v2343 = vmul.f32 %v1312, %v2268
        %v2344 = vmul.f32 %v1313, %v2268
        %v2345 = vmul.f32 %v1314, %v2268
        %v2346 = vmul.f32 %v1315, %v2268
        %v2347 = vmul.f32 %v1316, %v2268
        %v2348 = vmul.f32 %v1317, %v2268
        %v2349 = vmul.f32 %v1318, %v2268
        %v2350 = vmul.f32 %v1319, %v2268
        %v2351 = vmul.f32 %v1320, %v2268
        %v2352 = vmul.f32 %v1321, %v2268
        %v2353 = vmul.f32 %v1322, %v2268
        %v2354 = vmul.f32 %v1323, %v2268
        %v2355 = vmul.f32 %v1324, %v2268
        %v2356 = vmul.f32 %v1325, %v2268
        %v2357 = vmul.f32 %v1326, %v2268
        %v2358 = vmul.f32 %v1327, %v2268
        %v2359 = vmul.f32 %v1328, %v2268
        %v2360 = vmul.f32 %v1329, %v2268
        %v2361 = vmul.f32 %v1330, %v2268
        %v2362 = vmul.f32 %v1331, %v2268
        %v2363 = vmul.f32 %v1332, %v2268
        %v2364 = vmul.f32 %v1333, %v2268
        %v2365 = vmul.f32 %v1334, %v2268
        %v2366 = vmul.f32 %v1335, %v2268
        %v2367 = vmul.f32 %v1336, %v2268
        %v2368 = vmul.f32 %v1337, %v2268
        %v2369 = vmul.f32 %v1338, %v2268
        %v2370 = vmul.f32 %v1339, %v2268
        %v2371 = vmul.f32 %v1340, %v2268
        %v2372 = vmul.f32 %v1341, %v2268
        %v2373 = vmul.f32 %v1342, %v2268
        %v2374 = vmul.f32 %v1343, %v2268
        %v2375 = vmul.f32 %v1344, %v2268
        %v2376 = vmul.f32 %v1345, %v2268
        %v2377 = vmul.f32 %v1346, %v2268
        %v2378 = vmul.f32 %v1347, %v2268
        %v2379 = vmul.f32 %v1348, %v2268
        %v2380 = vmul.f32 %v1349, %v2268
        %v2381 = vmul.f32 %v1350, %v2268
        %v2382 = vmul.f32 %v1351, %v2268
        %v2383 = vmul.f32 %v1352, %v2268
        %v2384 = vmul.f32 %v1353, %v2268
        %v2385 = vmul.f32 %v1354, %v2268
        %v2386 = vmul.f32 %v1355, %v2268
        %v2387 = vmul.f32 %v1356, %v2268
        %v2388 = vmul.f32 %v1357, %v2268
        %v2389 = vmul.f32 %v1358, %v2268
        %v2390 = vmul.f32 %v1359, %v2268
        %v2391 = vmul.f32 %v1360, %v2268
        %v2392 = vmul.f32 %v1361, %v2268
        %v2393 = vmul.f32 %v1362, %v2268
        %v2394 = vmul.f32 %v1363, %v2268
        %v2395 = vmul.f32 %v1364, %v2268
        %v2396 = vmul.f32 %v1365, %v2268
        %v2397 = vmul.f32 %v1366, %v2268
        %v2398 = vmul.f32 %v1367, %v2268
        %v2399 = vmul.f32 %v1368, %v2268
        %v2400 = vmul.f32 %v1369, %v2268
        %v2401 = vmul.f32 %v1370, %v2268
        %v2402 = vmul.f32 %v1371, %v2268
        %v2403 = vmul.f32 %v1372, %v2268
        %v2404 = vmul.f32 %v1373, %v2268
        %v2405 = vmul.f32 %v1374, %v2268
        %v2406 = vmul.f32 %v1375, %v2268
        %v2407 = vmul.f32 %v1376, %v2268
        %v2408 = vmul.f32 %v1377, %v2268
        %v2409 = vmul.f32 %v1378, %v2268
        %v2410 = vmul.f32 %v1379, %v2268
        %v2411 = vmul.f32 %v1380, %v2268
        %v2412 = vmul.f32 %v1381, %v2268
        %v2413 = vmul.f32 %v1382, %v2268
        %v2414 = vmul.f32 %v1383, %v2268
        %v2415 = vmul.f32 %v1384, %v2268
        %v2416 = vmul.f32 %v1385, %v2268
        %v2417 = vmul.f32 %v1386, %v2268
        %v2418 = vmul.f32 %v1387, %v2268
        %v2419 = vmul.f32 %v1388, %v2268
        %v2420 = vmul.f32 %v1389, %v2268
        %v2421 = vmul.f32 %v1390, %v2268
        %v2422 = vmul.f32 %v1391, %v2268
        %v2423 = vmul.f32 %v1392, %v2268
        %v2424 = vmul.f32 %v1393, %v2268
        %v2425 = vmul.f32 %v1394, %v2268
        %v2426 = vmul.f32 %v1395, %v2268
        %v2427 = vmul.f32 %v1396, %v2268
        %v2428 = vmul.f32 %v1397, %v2268
        %v2429 = vmul.f32 %v1398, %v2268
        %v2430 = vmul.f32 %v1399, %v2268
        %v2431 = vmul.f32 %v1400, %v2268
        %v2432 = vmul.f32 %v1401, %v2268
        %v2433 = vmul.f32 %v1402, %v2268
        %v2434 = vmul.f32 %v1403, %v2268
        %v2435 = vmul.f32 %v1404, %v2268
        %v2436 = vmul.f32 %v1405, %v2268
        %v2437 = vmul.f32 %v1406, %v2268
        %v2438 = vmul.f32 %v1407, %v2268
        %v2439 = vmul.f32 %v1408, %v2268
        %v2440 = vmul.f32 %v1409, %v2268
        %v2441 = vmul.f32 %v1410, %v2268
        %v2442 = vmul.f32 %v1411, %v2268
        %v2443 = vmul.f32 %v1412, %v2268
        %v2444 = vmul.f32 %v1413, %v2268
        %v2445 = vmul.f32 %v1414, %v2268
        %v2446 = vmul.f32 %v1415, %v2268
        %v2447 = vmul.f32 %v1416, %v2268
        %v2448 = vmul.f32 %v1417, %v2268
        %v2449 = vmul.f32 %v1418, %v2268
        %v2450 = vmul.f32 %v1419, %v2268
        %v2451 = vmul.f32 %v1420, %v2268
        %v2452 = vmul.f32 %v1421, %v2268
        %v2453 = vmul.f32 %v1422, %v2268
        %v2454 = vmul.f32 %v1423, %v2268
        %v2455 = vmul.f32 %v1424, %v2268
        %v2456 = vmul.f32 %v1425, %v2268
        %v2457 = vmul.f32 %v1426, %v2268
        %v2458 = vmul.f32 %v1427, %v2268
        %v2459 = vmul.f32 %v1428, %v2268
        %v2460 = vmul.f32 %v1429, %v2268
        %v2461 = vmul.f32 %v1430, %v2268
        %v2462 = vmul.f32 %v1431, %v2268
        %v2463 = vmul.f32 %v1432, %v2268
        %v2464 = vmul.f32 %v1433, %v2268
        %v2465 = vmul.f32 %v1434, %v2268
        %v2466 = vmul.f32 %v1435, %v2268
        %v2467 = vmul.f32 %v1436, %v2268
        %v2468 = vmul.f32 %v1437, %v2268
        %v2469 = vmul.f32 %v1438, %v2268
        %v2470 = vmul.f32 %v1439, %v2268
        %v2471 = vmul.f32 %v1440, %v2268
        %v2472 = vmul.f32 %v1441, %v2268
        %v2473 = vmul.f32 %v1442, %v2268
        %v2474 = vmul.f32 %v1443, %v2268
        %v2475 = vmul.f32 %v1444, %v2268
        %v2476 = vmul.f32 %v1445, %v2268
        %v2477 = vmul.f32 %v1446, %v2268
        %v2478 = vmul.f32 %v1447, %v2268
        %v2479 = vmul.f32 %v1448, %v2268
        %v2480 = vmul.f32 %v1449, %v2268
        %v2481 = vmul.f32 %v1450, %v2268
        %v2482 = vmul.f32 %v1451, %v2268
        %v2483 = vmul.f32 %v1452, %v2268
        %v2484 = vmul.f32 %v1453, %v2268
        %v2485 = vmul.f32 %v1454, %v2268
        %v2486 = vmul.f32 %v1455, %v2268
        %v2487 = vmul.f32 %v1456, %v2268
        %v2488 = vmul.f32 %v1457, %v2268
        %v2489 = vmul.f32 %v1458, %v2268
        %v2490 = vmul.f32 %v1459, %v2268
        %v2491 = vmul.f32 %v1460, %v2268
        %v2492 = vmul.f32 %v1461, %v2268
        %v2493 = vmul.f32 %v1462, %v2268
        %v2494 = vmul.f32 %v1463, %v2268
        %v2495 = vmul.f32 %v1464, %v2268
        %v2496 = vmul.f32 %v1465, %v2268
        %v2497 = vmul.f32 %v1466, %v2268
        %v2498 = vmul.f32 %v1467, %v2268
        %v2499 = vmul.f32 %v1468, %v2268
        %v2500 = vmul.f32 %v1469, %v2268
        %v2501 = vmul.f32 %v1470, %v2268
        %v2502 = vmul.f32 %v1471, %v2268
        %v2503 = vmul.f32 %v1472, %v2268
        %v2504 = vmul.f32 %v1473, %v2268
        %v2505 = vmul.f32 %v1474, %v2268
        %v2506 = vmul.f32 %v1475, %v2268
        %v2507 = vmul.f32 %v1476, %v2268
        %v2508 = vmul.f32 %v1477, %v2268
        %v2509 = vmul.f32 %v1478, %v2268
        %v2510 = vmul.f32 %v1479, %v2268
        %v2511 = vmul.f32 %v1480, %v2268
        %v2512 = vmul.f32 %v1481, %v2268
        %v2513 = vmul.f32 %v1482, %v2268
        %v2514 = vmul.f32 %v1483, %v2268
        %v2515 = vmul.f32 %v1484, %v2268
        %v2516 = vmul.f32 %v1485, %v2268
        %v2517 = vmul.f32 %v1486, %v2268
        %v2518 = vmul.f32 %v1487, %v2268
        %v2519 = vmul.f32 %v1488, %v2268
        %v2520 = vmul.f32 %v1489, %v2268
        %v2521 = vmul.f32 %v1490, %v2268
        %v2522 = vmul.f32 %v1491, %v2268
        %v2523 = vmul.f32 %v1492, %v2268
        %v2524 = vmul.f32 %v1493, %v2268
        %v2525 = vmul.f32 %v1494, %v2268
        %v2526 = vmul.f32 %v1495, %v2268
        %v2527 = vmul.f32 %v1496, %v2268
        %v2528 = vmul.f32 %v1497, %v2268
        %v2529 = vmul.f32 %v1498, %v2268
        %v2530 = vmul.f32 %v1499, %v2268
        %v2531 = vmul.f32 %v1500, %v2268
        %v2532 = vmul.f32 %v1501, %v2268
        %v2533 = vmul.f32 %v1502, %v2268
        %v2534 = vmul.f32 %v1503, %v2268
        %v2535 = vmul.f32 %v1504, %v2268
        %v2536 = vmul.f32 %v1505, %v2268
        %v2537 = vmul.f32 %v1506, %v2268
        %v2538 = vmul.f32 %v1507, %v2268
        %v2539 = vmul.f32 %v1508, %v2268
        %v2540 = vmul.f32 %v1509, %v2268
        %v2541 = vmul.f32 %v1510, %v2268
        %v2542 = vmul.f32 %v1511, %v2268
        %v2543 = vmul.f32 %v1512, %v2268
        %v2544 = vmul.f32 %v1513, %v2268
        %v2545 = vmul.f32 %v1514, %v2268
        %v2546 = vmul.f32 %v1515, %v2268
        %v2547 = vmul.f32 %v1516, %v2268
        %v2548 = vmul.f32 %v1517, %v2268
        %v2549 = vmul.f32 %v1518, %v2268
        %v2550 = vmul.f32 %v1519, %v2268
        %v2551 = vmul.f32 %v1520, %v2268
        %v2552 = vmul.f32 %v1521, %v2268
        %v2553 = vmul.f32 %v1522, %v2268
        %v2554 = vmul.f32 %v1523, %v2268
        %v2555 = vmul.f32 %v1524, %v2268
        %v2556 = vmul.f32 %v1525, %v2268
        %v2557 = vmul.f32 %v1526, %v2268
        %v2558 = vmul.f32 %v1527, %v2268
        %v2559 = vmul.f32 %v1528, %v2268
        %v2560 = vmul.f32 %v1529, %v2268
        %v2561 = vmul.f32 %v1530, %v2268
        %v2562 = vmul.f32 %v1531, %v2268
        %v2563 = vmul.f32 %v1532, %v2268
        %v2564 = vmul.f32 %v1533, %v2268
        %v2565 = vmul.f32 %v1534, %v2268
        %v2566 = vmul.f32 %v1535, %v2268
        %v2567 = vmul.f32 %v1536, %v2268
        %v2568 = vmul.f32 %v1537, %v2268
        %v2569 = vmul.f32 %v1538, %v2268
        %v2570 = vmul.f32 %v1539, %v2268
        %v2571 = vmul.f32 %v1540, %v2268
        %v2572 = vmul.f32 %v1541, %v2268
        %v2573 = vmul.f32 %v1542, %v2268
        %v2574 = vmul.f32 %v1543, %v2268
        %v2575 = vmul.f32 %v1544, %v2268
        %v2576 = vmul.f32 %v1545, %v2268
        %v2577 = vmul.f32 %v1546, %v2268
        %v2578 = vmul.f32 %v1547, %v2268
        %v2579 = vmul.f32 %v1548, %v2268
        %v2580 = vmul.f32 %v1549, %v2268
        %v2581 = vmul.f32 %v1550, %v2268
        %v2582 = vmul.f32 %v1551, %v2268
        %v2583 = vmul.f32 %v1552, %v2268
        %v2584 = vmul.f32 %v1553, %v2268
        %v2585 = vmul.f32 %v1554, %v2268
        %v2586 = vmul.f32 %v1555, %v2268
        %v2587 = vmul.f32 %v1556, %v2268
        %v2588 = vmul.f32 %v1557, %v2268
        %v2589 = vmul.f32 %v1558, %v2268
        %v2590 = vmul.f32 %v1559, %v2268
        %v2591 = vmul.f32 %v1560, %v2268
        %v2592 = vmul.f32 %v1561, %v2268
        %v2593 = vmul.f32 %v1562, %v2268
        %v2594 = vmul.f32 %v1563, %v2268
        %v2595 = vmul.f32 %v1564, %v2268
        %v2596 = vmul.f32 %v1565, %v2268
        %v2597 = vmul.f32 %v1566, %v2268
        %v2598 = vmul.f32 %v1567, %v2268
        %v2599 = vmul.f32 %v1568, %v2268
        %v2600 = vmul.f32 %v1569, %v2268
        %v2601 = vmul.f32 %v1570, %v2268
        %v2602 = vmul.f32 %v1571, %v2268
        %v2603 = vmul.f32 %v1572, %v2268
        %v2604 = vmul.f32 %v1573, %v2268
        %v2605 = vmul.f32 %v1574, %v2268
        %v2606 = vmul.f32 %v1575, %v2268
        %v2607 = vmul.f32 %v1576, %v2268
        %v2608 = vmul.f32 %v1577, %v2268
        %v2609 = vmul.f32 %v1578, %v2268
        %v2610 = vmul.f32 %v1579, %v2268
        %v2611 = vmul.f32 %v1580, %v2268
        %v2612 = vmul.f32 %v1581, %v2268
        %v2613 = vmul.f32 %v1582, %v2268
        %v2614 = vmul.f32 %v1583, %v2268
        %v2615 = vmul.f32 %v1584, %v2268
        %v2616 = vmul.f32 %v1585, %v2268
        %v2617 = vmul.f32 %v1586, %v2268
        %v2618 = vmul.f32 %v1587, %v2268
        %v2619 = vmul.f32 %v1588, %v2268
        %v2620 = vmul.f32 %v1589, %v2268
        %v2621 = vmul.f32 %v1590, %v2268
        %v2622 = vmul.f32 %v1591, %v2268
        %v2623 = vmul.f32 %v1592, %v2268
        %v2624 = vmul.f32 %v1593, %v2268
        %v2625 = vmul.f32 %v1594, %v2268
        %v2626 = vmul.f32 %v1595, %v2268
        %v2627 = vmul.f32 %v1596, %v2268
        %v2628 = vmul.f32 %v1597, %v2268
        %v2629 = vmul.f32 %v1598, %v2268
        %v2630 = vmul.f32 %v1599, %v2268
        %v2631 = vmul.f32 %v1600, %v2268
        %v2632 = vmul.f32 %v1601, %v2268
        %v2633 = vmul.f32 %v1602, %v2268
        %v2634 = vmul.f32 %v1603, %v2268
        %v2635 = vmul.f32 %v1604, %v2268
        %v2636 = vmul.f32 %v1605, %v2268
        %v2637 = vmul.f32 %v1606, %v2268
        %v2638 = vmul.f32 %v1607, %v2268
        %v2639 = vmul.f32 %v1608, %v2268
        %v2640 = vmul.f32 %v1609, %v2268
        %v2641 = vmul.f32 %v1610, %v2268
        %v2642 = vmul.f32 %v1611, %v2268
        %v2643 = vmul.f32 %v1612, %v2268
        %v2644 = vmul.f32 %v1613, %v2268
        %v2645 = vmul.f32 %v1614, %v2268
        %v2646 = vmul.f32 %v1615, %v2268
        %v2647 = vmul.f32 %v1616, %v2268
        %v2648 = vmul.f32 %v1617, %v2268
        %v2649 = vmul.f32 %v1618, %v2268
        %v2650 = vmul.f32 %v1619, %v2268
        %v2651 = vmul.f32 %v1620, %v2268
        %v2652 = vmul.f32 %v1621, %v2268
        %v2653 = vmul.f32 %v1622, %v2268
        %v2654 = vmul.f32 %v1623, %v2268
        %v2655 = vmul.f32 %v1624, %v2268
        %v2656 = vmul.f32 %v1625, %v2268
        %v2657 = vmul.f32 %v1626, %v2268
        %v2658 = vmul.f32 %v1627, %v2268
        %v2659 = vmul.f32 %v1628, %v2268
        %v2660 = vmul.f32 %v1629, %v2268
        %v2661 = vmul.f32 %v1630, %v2268
        %v2662 = vmul.f32 %v1631, %v2268
        %v2663 = vmul.f32 %v1632, %v2268
        %v2664 = vmul.f32 %v1633, %v2268
        %v2665 = vmul.f32 %v1634, %v2268
        %v2666 = vmul.f32 %v1635, %v2268
        %v2667 = vmul.f32 %v1636, %v2268
        %v2668 = vmul.f32 %v1637, %v2268
        %v2669 = vmul.f32 %v1638, %v2268
        %v2670 = vmul.f32 %v1639, %v2268
        %v2671 = vmul.f32 %v1640, %v2268
        %v2672 = vmul.f32 %v1641, %v2268
        %v2673 = vmul.f32 %v1642, %v2268
        %v2674 = vmul.f32 %v1643, %v2268
        %v2675 = vmul.f32 %v1644, %v2268
        %v2676 = vmul.f32 %v1645, %v2268
        %v2677 = vmul.f32 %v1646, %v2268
        %v2678 = vmul.f32 %v1647, %v2268
        %v2679 = vmul.f32 %v1648, %v2268
        %v2680 = vmul.f32 %v1649, %v2268
        %v2681 = vmul.f32 %v1650, %v2268
        %v2682 = vmul.f32 %v1651, %v2268
        %v2683 = vmul.f32 %v1652, %v2268
        %v2684 = vmul.f32 %v1653, %v2268
        %v2685 = vmul.f32 %v1654, %v2268
        %v2686 = vmul.f32 %v1655, %v2268
        %v2687 = vmul.f32 %v1656, %v2268
        %v2688 = vmul.f32 %v1657, %v2268
        %v2689 = vmul.f32 %v1658, %v2268
        %v2690 = vmul.f32 %v1659, %v2268
        %v2691 = vmul.f32 %v1660, %v2268
        %v2692 = vmul.f32 %v1661, %v2268
        %v2693 = vmul.f32 %v1662, %v2268
        %v2694 = vmul.f32 %v1663, %v2268
        %v2695 = vmul.f32 %v1664, %v2268
        %v2696 = vmul.f32 %v1665, %v2268
        %v2697 = vmul.f32 %v1666, %v2268
        %v2698 = vmul.f32 %v1667, %v2268
        %v2699 = vmul.f32 %v1668, %v2268
        %v2700 = vmul.f32 %v1669, %v2268
        %v2701 = vmul.f32 %v1670, %v2268
        %v2702 = vmul.f32 %v1671, %v2268
        %v2703 = vmul.f32 %v1672, %v2268
        %v2704 = vmul.f32 %v1673, %v2268
        %v2705 = vmul.f32 %v1674, %v2268
        %v2706 = vmul.f32 %v1675, %v2268
        %v2707 = vmul.f32 %v1676, %v2268
        %v2708 = vmul.f32 %v1677, %v2268
        %v2709 = vmul.f32 %v1678, %v2268
        %v2710 = vmul.f32 %v1679, %v2268
        %v2711 = vmul.f32 %v1680, %v2268
        %v2712 = vmul.f32 %v1681, %v2268
        %v2713 = vmul.f32 %v1682, %v2268
        %v2714 = vmul.f32 %v1683, %v2268
        %v2715 = vmul.f32 %v1684, %v2268
        %v2716 = vmul.f32 %v1685, %v2268
        %v2717 = vmul.f32 %v1686, %v2268
        %v2718 = vmul.f32 %v1687, %v2268
        %v2719 = vmul.f32 %v1688, %v2268
        %v2720 = vmul.f32 %v1689, %v2268
        %v2721 = vmul.f32 %v1690, %v2268
        %v2722 = vmul.f32 %v1691, %v2268
        %v2723 = vmul.f32 %v1692, %v2268
        %v2724 = vmul.f32 %v1693, %v2268
        %v2725 = vmul.f32 %v1694, %v2268
        %v2726 = vmul.f32 %v1695, %v2268
        %v2727 = vmul.f32 %v1696, %v2268
        %v2728 = vmul.f32 %v1697, %v2268
        %v2729 = vmul.f32 %v1698, %v2268
        %v2730 = vmul.f32 %v1699, %v2268
        %v2731 = vmul.f32 %v1700, %v2268
        %v2732 = vmul.f32 %v1701, %v2268
        %v2733 = vmul.f32 %v1702, %v2268
        %v2734 = vmul.f32 %v1703, %v2268
        %v2735 = vmul.f32 %v1704, %v2268
        %v2736 = vmul.f32 %v1705, %v2268
        %v2737 = vmul.f32 %v1706, %v2268
        %v2738 = vmul.f32 %v1707, %v2268
        %v2739 = vmul.f32 %v1708, %v2268
        %v2740 = vmul.f32 %v1709, %v2268
        %v2741 = vmul.f32 %v1710, %v2268
        %v2742 = vmul.f32 %v1711, %v2268
        %v2743 = vmul.f32 %v1712, %v2268
        %v2744 = vmul.f32 %v1713, %v2268
        %v2745 = vmul.f32 %v1714, %v2268
        %v2746 = vmul.f32 %v1715, %v2268
        %v2747 = vmul.f32 %v1716, %v2268
        %v2748 = vmul.f32 %v1717, %v2268
        %v2749 = vmul.f32 %v1718, %v2268
        %v2750 = vmul.f32 %v1719, %v2268
        %v2751 = vmul.f32 %v1720, %v2268
        %v2752 = vmul.f32 %v1721, %v2268
        %v2753 = vmul.f32 %v1722, %v2268
        %v2754 = vmul.f32 %v1723, %v2268
        %v2755 = vmul.f32 %v1724, %v2268
        %v2756 = vmul.f32 %v1725, %v2268
        %v2757 = vmul.f32 %v1726, %v2268
        %v2758 = vmul.f32 %v1727, %v2268
        %v2759 = vmul.f32 %v1728, %v2268
        %v2760 = vmul.f32 %v1729, %v2268
        %v2761 = vmul.f32 %v1730, %v2268
        %v2762 = vmul.f32 %v1731, %v2268
        %v2763 = vmul.f32 %v1732, %v2268
        %v2764 = vmul.f32 %v1733, %v2268
        %v2765 = vmul.f32 %v1734, %v2268
        %v2766 = vmul.f32 %v1735, %v2268
        %v2767 = vmul.f32 %v1736, %v2268
        %v2768 = vmul.f32 %v1737, %v2268
        %v2769 = vmul.f32 %v1738, %v2268
        %v2770 = vmul.f32 %v1739, %v2268
        %v2771 = vmul.f32 %v1740, %v2268
        %v2772 = vmul.f32 %v1741, %v2268
        %v2773 = vmul.f32 %v1742, %v2268
        %v2774 = vmul.f32 %v1743, %v2268
        %v2775 = vmul.f32 %v1744, %v2268
        %v2776 = vmul.f32 %v1745, %v2268
        %v2777 = vmul.f32 %v1746, %v2268
        %v2778 = vmul.f32 %v1747, %v2268
        %v2779 = vmul.f32 %v1748, %v2268
        %v2780 = vmul.f32 %v1749, %v2268
        %v2781 = vmul.f32 %v1750, %v2268
        %v2782 = vmul.f32 %v1751, %v2268
        %v2783 = vmul.f32 %v1752, %v2268
        %v2784 = vmul.f32 %v1753, %v2268
        %v2785 = vmul.f32 %v1754, %v2268
        %v2786 = vmul.f32 %v1755, %v2268
        %v2787 = vmul.f32 %v1756, %v2268
        %v2788 = vmul.f32 %v1757, %v2268
        %v2789 = vmul.f32 %v1758, %v2268
        %v2790 = vmul.f32 %v1759, %v2268
        %v2791 = vmul.f32 %v1760, %v2268
        %v2792 = vmul.f32 %v1761, %v2268
        %v2793 = vmul.f32 %v1762, %v2268
        %v2794 = vmul.f32 %v1763, %v2268
        %v2795 = vmul.f32 %v1764, %v2268
        %v2796 = vmul.f32 %v1765, %v2268
        %v2797 = vmul.f32 %v1766, %v2268
        %v2798 = vmul.f32 %v1767, %v2268
        %v2799 = vmul.f32 %v1768, %v2268
        %v2800 = vmul.f32 %v1769, %v2268
        %v2801 = vmul.f32 %v1770, %v2268
        %v2802 = vmul.f32 %v1771, %v2268
        %v2803 = vmul.f32 %v1772, %v2268
        %v2804 = vmul.f32 %v1773, %v2268
        %v2805 = vmul.f32 %v1774, %v2268
        %v2806 = vmul.f32 %v1775, %v2268
        %v2807 = vmul.f32 %v1776, %v2268
        %v2808 = vmul.f32 %v1777, %v2268
        %v2809 = vmul.f32 %v1778, %v2268
        %v2810 = vmul.f32 %v1779, %v2268
        %v2811 = vmul.f32 %v1780, %v2268
        %v2812 = vmul.f32 %v1781, %v2268
        %v2813 = vmul.f32 %v1782, %v2268
        %v2814 = vmul.f32 %v1783, %v2268
        %v2815 = vmul.f32 %v1784, %v2268
        %v2816 = vmul.f32 %v1785, %v2268
        %v2817 = vmul.f32 %v1786, %v2268
        %v2818 = vmul.f32 %v1787, %v2268
        %v2819 = vmul.f32 %v1788, %v2268
        %v2820 = vmul.f32 %v1789, %v2268
        %v2821 = vmul.f32 %v1790, %v2268
        %v2822 = vmul.f32 %v1791, %v2268
        %v2823 = vmul.f32 %v1792, %v2268
        %v2824 = vmul.f32 %v1793, %v2268
        %v2825 = vmul.f32 %v1794, %v2268
        %v2826 = vmul.f32 %v1795, %v2268
        %v2827 = vmul.f32 %v1796, %v2268
        %v2828 = vmul.f32 %v1797, %v2268
        %v2829 = vmul.f32 %v1798, %v2268
        %v2830 = vmul.f32 %v1799, %v2268
        %v2831 = vmul.f32 %v1800, %v2268
        %v2832 = vmul.f32 %v1801, %v2268
        %v2833 = vmul.f32 %v1802, %v2268
        %v2834 = vmul.f32 %v1803, %v2268
        %v2835 = vmul.f32 %v1804, %v2268
        %v2836 = vmul.f32 %v1805, %v2268
        %v2837 = vmul.f32 %v1806, %v2268
        %v2838 = vmul.f32 %v1807, %v2268
        %v2839 = vmul.f32 %v1808, %v2268
        %v2840 = vmul.f32 %v1809, %v2268
        %v2841 = vmul.f32 %v1810, %v2268
        %v2842 = vmul.f32 %v1811, %v2268
        %v2843 = vmul.f32 %v1812, %v2268
        %v2844 = vmul.f32 %v1813, %v2268
        %v2845 = vmul.f32 %v1814, %v2268
        %v2846 = vmul.f32 %v1815, %v2268
        %v2847 = vmul.f32 %v1816, %v2268
        %v2848 = vmul.f32 %v1817, %v2268
        %v2849 = vmul.f32 %v1818, %v2268
        %v2850 = vmul.f32 %v1819, %v2268
        %v2851 = vmul.f32 %v1820, %v2268
        %v2852 = vmul.f32 %v1821, %v2268
        %v2853 = vmul.f32 %v1822, %v2268
        %v2854 = vmul.f32 %v1823, %v2268
        %v2855 = vmul.f32 %v1824, %v2268
        %v2856 = vmul.f32 %v1825, %v2268
        %v2857 = vmul.f32 %v1826, %v2268
        %v2858 = vmul.f32 %v1827, %v2268
        %v2859 = vmul.f32 %v1828, %v2268
        %v2860 = vmul.f32 %v1829, %v2268
        %v2861 = vmul.f32 %v1830, %v2268
        %v2862 = vmul.f32 %v1831, %v2268
        %v2863 = vmul.f32 %v1832, %v2268
        %v2864 = vmul.f32 %v1833, %v2268
        %v2865 = vmul.f32 %v1834, %v2268
        %v2866 = vmul.f32 %v1835, %v2268
        %v2867 = vmul.f32 %v1836, %v2268
        %v2868 = vmul.f32 %v1837, %v2268
        %v2869 = vmul.f32 %v1838, %v2268
        %v2870 = vmul.f32 %v1839, %v2268
        %v2871 = vmul.f32 %v1840, %v2268
        %v2872 = vmul.f32 %v1841, %v2268
        %v2873 = vmul.f32 %v1842, %v2268
        %v2874 = vmul.f32 %v1843, %v2268
        %v2875 = vmul.f32 %v1844, %v2268
        %v2876 = vmul.f32 %v1845, %v2268
        %v2877 = vmul.f32 %v1846, %v2268
        %v2878 = vmul.f32 %v1847, %v2268
        %v2879 = vmul.f32 %v1848, %v2268
        %v2880 = vmul.f32 %v1849, %v2268
        %v2881 = vmul.f32 %v1850, %v2268
        %v2882 = vmul.f32 %v1851, %v2268
        %v2883 = vmul.f32 %v1852, %v2268
        %v2884 = vmul.f32 %v1853, %v2268
        %v2885 = vmul.f32 %v1854, %v2268
        %v2886 = vmul.f32 %v1855, %v2268
        %v2887 = vmul.f32 %v1856, %v2268
        %v2888 = vmul.f32 %v1857, %v2268
        %v2889 = vmul.f32 %v1858, %v2268
        %v2890 = vmul.f32 %v1859, %v2268
        %v2891 = vmul.f32 %v1860, %v2268
        %v2892 = vmul.f32 %v1861, %v2268
        %v2893 = vmul.f32 %v1862, %v2268
        %v2894 = vmul.f32 %v1863, %v2268
        %v2895 = vmul.f32 %v1864, %v2268
        %v2896 = vmul.f32 %v1865, %v2268
        %v2897 = vmul.f32 %v1866, %v2268
        %v2898 = vmul.f32 %v1867, %v2268
        %v2899 = vmul.f32 %v1868, %v2268
        %v2900 = vmul.f32 %v1869, %v2268
        %v2901 = vmul.f32 %v1870, %v2268
        %v2902 = vmul.f32 %v1871, %v2268
        %v2903 = vmul.f32 %v1872, %v2268
        %v2904 = vmul.f32 %v1873, %v2268
        %v2905 = vmul.f32 %v1874, %v2268
        %v2906 = vmul.f32 %v1875, %v2268
        %v2907 = vmul.f32 %v1876, %v2268
        %v2908 = vmul.f32 %v1877, %v2268
        %v2909 = vmul.f32 %v1878, %v2268
        %v2910 = vmul.f32 %v1879, %v2268
        %v2911 = vmul.f32 %v1880, %v2268
        %v2912 = vmul.f32 %v1881, %v2268
        %v2913 = vmul.f32 %v1882, %v2268
        %v2914 = vmul.f32 %v1883, %v2268
        %v2915 = vmul.f32 %v1884, %v2268
        %v2916 = vmul.f32 %v1885, %v2268
        %v2917 = vmul.f32 %v1886, %v2268
        %v2918 = vmul.f32 %v1887, %v2268
        %v2919 = vmul.f32 %v1888, %v2268
        %v2920 = vmul.f32 %v1889, %v2268
        %v2921 = vmul.f32 %v1890, %v2268
        %v2922 = vmul.f32 %v1891, %v2268
        %v2923 = vmul.f32 %v1892, %v2268
        %v2924 = vmul.f32 %v1893, %v2268
        %v2925 = vmul.f32 %v1894, %v2268
        %v2926 = vmul.f32 %v1895, %v2268
        %v2927 = vmul.f32 %v1896, %v2268
        %v2928 = vmul.f32 %v1897, %v2268
        %v2929 = vmul.f32 %v1898, %v2268
        %v2930 = vmul.f32 %v1899, %v2268
        %v2931 = vmul.f32 %v1900, %v2268
        %v2932 = vmul.f32 %v1901, %v2268
        %v2933 = vmul.f32 %v1902, %v2268
        %v2934 = vmul.f32 %v1903, %v2268
        %v2935 = vmul.f32 %v1904, %v2268
        %v2936 = vmul.f32 %v1905, %v2268
        %v2937 = vmul.f32 %v1906, %v2268
        %v2938 = vmul.f32 %v1907, %v2268
        %v2939 = vmul.f32 %v1908, %v2268
        %v2940 = vmul.f32 %v1909, %v2268
        %v2941 = vmul.f32 %v1910, %v2268
        %v2942 = vmul.f32 %v1911, %v2268
        %v2943 = vmul.f32 %v1912, %v2268
        %v2944 = vmul.f32 %v1913, %v2268
        %v2945 = vmul.f32 %v1914, %v2268
        %v2946 = vmul.f32 %v1915, %v2268
        %v2947 = vmul.f32 %v1916, %v2268
        %v2948 = vmul.f32 %v1917, %v2268
        %v2949 = vmul.f32 %v1918, %v2268
        %v2950 = vmul.f32 %v1919, %v2268
        %v2951 = vmul.f32 %v1920, %v2268
        %v2952 = vmul.f32 %v1921, %v2268
        %v2953 = vmul.f32 %v1922, %v2268
        %v2954 = vmul.f32 %v1923, %v2268
        %v2955 = vmul.f32 %v1924, %v2268
        %v2956 = vmul.f32 %v1925, %v2268
        %v2957 = vmul.f32 %v1926, %v2268
        %v2958 = vmul.f32 %v1927, %v2268
        %v2959 = vmul.f32 %v1928, %v2268
        %v2960 = vmul.f32 %v1929, %v2268
        %v2961 = vmul.f32 %v1930, %v2268
        %v2962 = vmul.f32 %v1931, %v2268
        %v2963 = vmul.f32 %v1932, %v2268
        %v2964 = vmul.f32 %v1933, %v2268
        %v2965 = vmul.f32 %v1934, %v2268
        %v2966 = vmul.f32 %v1935, %v2268
        %v2967 = vmul.f32 %v1936, %v2268
        %v2968 = vmul.f32 %v1937, %v2268
        %v2969 = vmul.f32 %v1938, %v2268
        %v2970 = vmul.f32 %v1939, %v2268
        %v2971 = vmul.f32 %v1940, %v2268
        %v2972 = vmul.f32 %v1941, %v2268
        %v2973 = vmul.f32 %v1942, %v2268
        %v2974 = vmul.f32 %v1943, %v2268
        %v2975 = vmul.f32 %v1944, %v2268
        %v2976 = vmul.f32 %v1945, %v2268
        %v2977 = vmul.f32 %v1946, %v2268
        %v2978 = vmul.f32 %v1947, %v2268
        %v2979 = vmul.f32 %v1948, %v2268
        %v2980 = vmul.f32 %v1949, %v2268
        %v2981 = vmul.f32 %v1950, %v2268
        %v2982 = vmul.f32 %v1951, %v2268
        %v2983 = vmul.f32 %v1952, %v2268
        %v2984 = vmul.f32 %v1953, %v2268
        %v2985 = vmul.f32 %v1954, %v2268
        %v2986 = vmul.f32 %v1955, %v2268
        %v2987 = vmul.f32 %v1956, %v2268
        %v2988 = vmul.f32 %v1957, %v2268
        %v2989 = vmul.f32 %v1958, %v2268
        %v2990 = vmul.f32 %v1959, %v2268
        %v2991 = vmul.f32 %v1960, %v2268
        %v2992 = vmul.f32 %v1961, %v2268
        %v2993 = vmul.f32 %v1962, %v2268
        %v2994 = vmul.f32 %v1963, %v2268
        %v2995 = vmul.f32 %v1964, %v2268
        %v2996 = vmul.f32 %v1965, %v2268
        %v2997 = vmul.f32 %v1966, %v2268
        %v2998 = vmul.f32 %v1967, %v2268
        %v2999 = vmul.f32 %v1968, %v2268
        %v3000 = vmul.f32 %v1969, %v2268
        %v3001 = vmul.f32 %v1970, %v2268
        %v3002 = vmul.f32 %v1971, %v2268
        %v3003 = vmul.f32 %v1972, %v2268
        %v3004 = vmul.f32 %v1973, %v2268
        %v3005 = vmul.f32 %v1974, %v2268
        %v3006 = vmul.f32 %v1975, %v2268
        %v3007 = vmul.f32 %v1976, %v2268
        %v3008 = vmul.f32 %v1977, %v2268
        %v3009 = vmul.f32 %v1978, %v2268
        %v3010 = vmul.f32 %v1979, %v2268
        %v3011 = vmul.f32 %v1980, %v2268
        %v3012 = vmul.f32 %v1981, %v2268
        %v3013 = vmul.f32 %v1982, %v2268
        %v3014 = vmul.f32 %v1983, %v2268
        %v3015 = vmul.f32 %v1984, %v2268
        %v3016 = vmul.f32 %v1985, %v2268
        %v3017 = vmul.f32 %v1986, %v2268
        %v3018 = vmul.f32 %v1987, %v2268
        %v3019 = vmul.f32 %v1988, %v2268
        %v3020 = vmul.f32 %v1989, %v2268
        %v3021 = vmul.f32 %v1990, %v2268
        %v3022 = vmul.f32 %v1991, %v2268
        %v3023 = vmul.f32 %v1992, %v2268
        %v3024 = vmul.f32 %v1993, %v2268
        %v3025 = vmul.f32 %v1994, %v2268
        %v3026 = vmul.f32 %v1995, %v2268
        %v3027 = vmul.f32 %v1996, %v2268
        %v3028 = vmul.f32 %v1997, %v2268
        %v3029 = vmul.f32 %v1998, %v2268
        %v3030 = vmul.f32 %v1999, %v2268
        %v3031 = vmul.f32 %v2000, %v2268
        %v3032 = vmul.f32 %v2001, %v2268
        %v3033 = vmul.f32 %v2002, %v2268
        %v3034 = vmul.f32 %v2003, %v2268
        %v3035 = vmul.f32 %v2004, %v2268
        %v3036 = vmul.f32 %v2005, %v2268
        %v3037 = vmul.f32 %v2006, %v2268
        %v3038 = vmul.f32 %v2007, %v2268
        %v3039 = vmul.f32 %v2008, %v2268
        %v3040 = vmul.f32 %v2009, %v2268
        %v3041 = vmul.f32 %v2010, %v2268
        %v3042 = vmul.f32 %v2011, %v2268
        %v3043 = vmul.f32 %v2012, %v2268
        %v3044 = vmul.f32 %v2013, %v2268
        %v3045 = vmul.f32 %v2014, %v2268
        %v3046 = vmul.f32 %v2015, %v2268
        %v3047 = vmul.f32 %v2016, %v2268
        %v3048 = vmul.f32 %v2017, %v2268
        %v3049 = vmul.f32 %v2018, %v2268
        %v3050 = vmul.f32 %v2019, %v2268
        %v3051 = vmul.f32 %v2020, %v2268
        %v3052 = vmul.f32 %v2021, %v2268
        %v3053 = vmul.f32 %v2022, %v2268
        %v3054 = vmul.f32 %v2023, %v2268
        %v3055 = vmul.f32 %v2024, %v2268
        %v3056 = vmul.f32 %v2025, %v2268
        %v3057 = vmul.f32 %v2026, %v2268
        %v3058 = vmul.f32 %v2027, %v2268
        %v3059 = vmul.f32 %v2028, %v2268
        %v3060 = vmul.f32 %v2029, %v2268
        %v3061 = vmul.f32 %v2030, %v2268
        %v3062 = vmul.f32 %v2031, %v2268
        %v3063 = vmul.f32 %v2032, %v2268
        %v3064 = vmul.f32 %v2033, %v2268
        %v3065 = vmul.f32 %v2034, %v2268
        %v3066 = vmul.f32 %v2035, %v2268
        %v3067 = vmul.f32 %v2036, %v2268
        %v3068 = vmul.f32 %v2037, %v2268
        %v3069 = vmul.f32 %v2038, %v2268
        %v3070 = vmul.f32 %v2039, %v2268
        %v3071 = vmul.f32 %v2040, %v2268
        %v3072 = vmul.f32 %v2041, %v2268
        %v3073 = vmul.f32 %v2042, %v2268
        %v3074 = vmul.f32 %v2043, %v2268
        %v3075 = vmul.f32 %v2044, %v2268
        %v3076 = vmul.f32 %v2045, %v2268
        %v3077 = vmul.f32 %v2046, %v2268
        %v3078 = vmul.f32 %v2047, %v2268
        %v3079 = vmul.f32 %v2048, %v2268
        %v3080 = vmul.f32 %v2049, %v2268
        %v3081 = vmul.f32 %v2050, %v2268
        %v3082 = vmul.f32 %v2051, %v2268
        %v3083 = vmul.f32 %v2052, %v2268
        %v3084 = vmul.f32 %v2053, %v2268
        %v3085 = vmul.f32 %v2054, %v2268
        %v3086 = vmul.f32 %v2055, %v2268
        %v3087 = vmul.f32 %v2056, %v2268
        %v3088 = vmul.f32 %v2057, %v2268
        %v3089 = vmul.f32 %v2058, %v2268
        %v3090 = vmul.f32 %v2059, %v2268
        %v3091 = vmul.f32 %v2060, %v2268
        %v3092 = vmul.f32 %v2061, %v2268
        %v3093 = vmul.f32 %v2062, %v2268
        %v3094 = vmul.f32 %v2063, %v2268
        %v3095 = vmul.f32 %v2064, %v2268
        %v3096 = vmul.f32 %v2065, %v2268
        %v3097 = vmul.f32 %v2066, %v2268
        %v3098 = vmul.f32 %v2067, %v2268
        %v3099 = vmul.f32 %v2068, %v2268
        %v3100 = vmul.f32 %v2069, %v2268
        %v3101 = vmul.f32 %v2070, %v2268
        %v3102 = vmul.f32 %v2071, %v2268
        %v3103 = vmul.f32 %v2072, %v2268
        %v3104 = vmul.f32 %v2073, %v2268
        %v3105 = vmul.f32 %v2074, %v2268
        %v3106 = vmul.f32 %v2075, %v2268
        %v3107 = vmul.f32 %v2076, %v2268
        %v3108 = vmul.f32 %v2077, %v2268
        %v3109 = vmul.f32 %v2078, %v2268
        %v3110 = vmul.f32 %v2079, %v2268
        %v3111 = vmul.f32 %v2080, %v2268
        %v3112 = vmul.f32 %v2081, %v2268
        %v3113 = vmul.f32 %v2082, %v2268
        %v3114 = vmul.f32 %v2083, %v2268
        %v3115 = vmul.f32 %v2084, %v2268
        %v3116 = vmul.f32 %v2085, %v2268
        %v3117 = vmul.f32 %v2086, %v2268
        %v3118 = vmul.f32 %v2087, %v2268
        %v3119 = vmul.f32 %v2088, %v2268
        %v3120 = vmul.f32 %v2089, %v2268
        %v3121 = vmul.f32 %v2090, %v2268
        %v3122 = vmul.f32 %v2091, %v2268
        %v3123 = vmul.f32 %v2092, %v2268
        %v3124 = vmul.f32 %v2093, %v2268
        %v3125 = vmul.f32 %v2094, %v2268
        %v3126 = vmul.f32 %v2095, %v2268
        %v3127 = vmul.f32 %v2096, %v2268
        %v3128 = vmul.f32 %v2097, %v2268
        %v3129 = vmul.f32 %v2098, %v2268
        %v3130 = vmul.f32 %v2099, %v2268
        %v3131 = vmul.f32 %v2100, %v2268
        %v3132 = vmul.f32 %v2101, %v2268
        %v3133 = vmul.f32 %v2102, %v2268
        %v3134 = vmul.f32 %v2103, %v2268
        %v3135 = vmul.f32 %v2104, %v2268
        %v3136 = vmul.f32 %v2105, %v2268
        %v3137 = vmul.f32 %v2106, %v2268
        %v3138 = vmul.f32 %v2107, %v2268
        %v3139 = vmul.f32 %v2108, %v2268
        %v3140 = vmul.f32 %v2109, %v2268
        %v3141 = vmul.f32 %v2110, %v2268
        %v3142 = vmul.f32 %v2111, %v2268
        %v3143 = vmul.f32 %v2112, %v2268
        %v3144 = vmul.f32 %v2113, %v2268
        %v3145 = vmul.f32 %v2114, %v2268
        %v3146 = vmul.f32 %v2115, %v2268
        %v3147 = vmul.f32 %v2116, %v2268
        %v3148 = vmul.f32 %v2117, %v2268
        %v3149 = vmul.f32 %v2118, %v2268
        %v3150 = vmul.f32 %v2119, %v2268
        %v3151 = vmul.f32 %v2120, %v2268
        %v3152 = vmul.f32 %v2121, %v2268
        %v3153 = vmul.f32 %v2122, %v2268
        %v3154 = vmul.f32 %v2123, %v2268
        %v3155 = vmul.f32 %v2124, %v2268
        %v3156 = vmul.f32 %v2125, %v2268
        %v3157 = vmul.f32 %v2126, %v2268
        %v3158 = vmul.f32 %v2127, %v2268
        %v3159 = vmul.f32 %v2128, %v2268
        %v3160 = vmul.f32 %v2129, %v2268
        %v3161 = vmul.f32 %v2130, %v2268
        %v3162 = vmul.f32 %v2131, %v2268
        %v3163 = vmul.f32 %v2132, %v2268
        %v3164 = vmul.f32 %v2133, %v2268
        %v3165 = vmul.f32 %v2134, %v2268
        %v3166 = vmul.f32 %v2135, %v2268
        %v3167 = vmul.f32 %v2136, %v2268
        %v3168 = vmul.f32 %v2137, %v2268
        %v3169 = vmul.f32 %v2138, %v2268
        %v3170 = vmul.f32 %v2139, %v2268
        %v3171 = vmul.f32 %v2140, %v2268
        %v3172 = vmul.f32 %v2141, %v2268
        %v3173 = vmul.f32 %v2142, %v2268
        %v3174 = vmul.f32 %v2143, %v2268
        %v3175 = vmul.f32 %v2144, %v2268
        %v3176 = vmul.f32 %v2145, %v2268
        %v3177 = vmul.f32 %v2146, %v2268
        %v3178 = vmul.f32 %v2147, %v2268
        %v3179 = vmul.f32 %v2148, %v2268
        %v3180 = vmul.f32 %v2149, %v2268
        %v3181 = vmul.f32 %v2150, %v2268
        %v3182 = vmul.f32 %v2151, %v2268
        %v3183 = vmul.f32 %v2152, %v2268
        %v3184 = vmul.f32 %v2153, %v2268
        %v3185 = vmul.f32 %v2154, %v2268
        %v3186 = vmul.f32 %v2155, %v2268
        %v3187 = vmul.f32 %v2156, %v2268
        %v3188 = vmul.f32 %v2157, %v2268
        %v3189 = vmul.f32 %v2158, %v2268
        %v3190 = vmul.f32 %v2159, %v2268
        %v3191 = vmul.f32 %v2160, %v2268
        %v3192 = vmul.f32 %v2161, %v2268
        %v3193 = vmul.f32 %v2162, %v2268
        %v3194 = vmul.f32 %v2163, %v2268
        %v3195 = vmul.f32 %v2164, %v2268
        %v3196 = vmul.f32 %v2165, %v2268
        %v3197 = vmul.f32 %v2166, %v2268
        %v3198 = vmul.f32 %v2167, %v2268
        %v3199 = vmul.f32 %v2168, %v2268
        %v3200 = vmul.f32 %v2169, %v2268
        %v3201 = vmul.f32 %v2170, %v2268
        %v3202 = vmul.f32 %v2171, %v2268
        %v3203 = vmul.f32 %v2172, %v2268
        %v3204 = vmul.f32 %v2173, %v2268
        %v3205 = vmul.f32 %v2174, %v2268
        %v3206 = vmul.f32 %v2175, %v2268
        %v3207 = vmul.f32 %v2176, %v2268
        %v3208 = vmul.f32 %v2177, %v2268
        %v3209 = vmul.f32 %v2178, %v2268
        %v3210 = vmul.f32 %v2179, %v2268
        %v3211 = vmul.f32 %v2180, %v2268
        %v3212 = vmul.f32 %v2181, %v2268
        %v3213 = vmul.f32 %v2182, %v2268
        %v3214 = vmul.f32 %v2183, %v2268
        %v3215 = vmul.f32 %v2184, %v2268
        %v3216 = vmul.f32 %v2185, %v2268
        %v3217 = vmul.f32 %v2186, %v2268
        %v3218 = vmul.f32 %v2187, %v2268
        %v3219 = vmul.f32 %v2188, %v2268
        %v3220 = vmul.f32 %v2189, %v2268
        %v3221 = vmul.f32 %v2190, %v2268
        %v3222 = vmul.f32 %v2191, %v2268
        %v3223 = vmul.f32 %v2192, %v2268
        %v3224 = vmul.f32 %v2193, %v2268
        %v3225 = vmul.f32 %v2194, %v2268
        %v3226 = vmul.f32 %v2195, %v2268
        %v3227 = vmul.f32 %v2196, %v2268
        %v3228 = vmul.f32 %v2197, %v2268
        %v3229 = vmul.f32 %v2198, %v2268
        %v3230 = vmul.f32 %v2199, %v2268
        %v3231 = vmul.f32 %v2200, %v2268
        %v3232 = vmul.f32 %v2201, %v2268
        %v3233 = vmul.f32 %v2202, %v2268
        %v3234 = vmul.f32 %v2203, %v2268
        %v3235 = vmul.f32 %v2204, %v2268
        %v3236 = vmul.f32 %v2205, %v2268
        %v3237 = vmul.f32 %v2206, %v2268
        %v3238 = vmul.f32 %v2207, %v2268
        %v3239 = vmul.f32 %v2208, %v2268
        %v3240 = vmul.f32 %v2209, %v2268
        %v3241 = vmul.f32 %v2210, %v2268
        %v3242 = vmul.f32 %v2211, %v2268
        %v3243 = vmul.f32 %v2212, %v2268
        %v3244 = vmul.f32 %v2213, %v2268
        %v3245 = vmul.f32 %v2214, %v2268
        %v3246 = vmul.f32 %v2215, %v2268
        %v3247 = vmul.f32 %v2216, %v2268
        %v3248 = vmul.f32 %v2217, %v2268
        %v3249 = vmul.f32 %v2218, %v2268
        %v3250 = vmul.f32 %v2219, %v2268
        %v3251 = vmul.f32 %v2220, %v2268
        %v3252 = vmul.f32 %v2221, %v2268
        %v3253 = vmul.f32 %v2222, %v2268
        %v3254 = vmul.f32 %v2223, %v2268
        %v3255 = vmul.f32 %v2224, %v2268
        %v3256 = vmul.f32 %v2225, %v2268
        %v3257 = vmul.f32 %v2226, %v2268
        %v3258 = vmul.f32 %v2227, %v2268
        %v3259 = vmul.f32 %v2228, %v2268
        %v3260 = vmul.f32 %v2229, %v2268
        %v3261 = vmul.f32 %v2230, %v2268
        %v3262 = vmul.f32 %v2231, %v2268
        %v3263 = vmul.f32 %v2232, %v2268
        %v3264 = vmul.f32 %v2233, %v2268
        %v3265 = vmul.f32 %v2234, %v2268
        %v3266 = vmul.f32 %v2235, %v2268
        %v3267 = vmul.f32 %v2236, %v2268
        %v3268 = vmul.f32 %v2237, %v2268
        %v3269 = vmul.f32 %v2238, %v2268
        %v3270 = vmul.f32 %v2239, %v2268
        %v3271 = vmul.f32 %v2240, %v2268
        %v3272 = vmul.f32 %v2241, %v2268
        %v3273 = vmul.f32 %v2242, %v2268
        %v3274 = vmul.f32 %v2243, %v2268
        %v3275 = vmul.f32 %v2244, %v2268
        %v3276 = vmul.f32 %v2245, %v2268
        %v3277 = vmul.f32 %v2246, %v2268
        %v3278 = vmul.f32 %v2247, %v2268
        %v3279 = vmul.f32 %v2248, %v2268
        %v3280 = vmul.f32 %v2249, %v2268
        %v3281 = vmul.f32 %v2250, %v2268
        %v3282 = vmul.f32 %v2251, %v2268
        %v3283 = vmul.f32 %v2252, %v2268
        %v3284 = vmul.f32 %v2253, %v2268
        %v3285 = vmul.f32 %v2254, %v2268
        %v3286 = vmul.f32 %v2255, %v2268
        %v3287 = vmul.f32 %v2256, %v2268
        %v3288 = vmul.f32 %v2257, %v2268
        %v3289 = vmul.f32 %v2258, %v2268
        %v3290 = vmul.f32 %v2259, %v2268
        %v3291 = vmul.f32 %v2260, %v2268
        %v3292 = vmul.f32 %v2261, %v2268
        %v3293 = vmul.f32 %v2262, %v2268
        %3294 = vst [vmem:[%s204] sm:$0xff] %v2270
        %3295 = vst [vmem:[%s204 + $0x8] sm:$0xff] %v2271
        %3296 = vst [vmem:[%s204 + $0x10] sm:$0xff] %v2272
        %3297 = vst [vmem:[%s204 + $0x18] sm:$0xff] %v2273
        %3298 = vst [vmem:[%s204 + $0x20] sm:$0xff] %v2274
        %3299 = vst [vmem:[%s204 + $0x28] sm:$0xff] %v2275
        %3300 = vst [vmem:[%s204 + $0x30] sm:$0xff] %v2276
        %3301 = vst [vmem:[%s204 + $0x38] sm:$0xff] %v2277
        %3302 = vst [vmem:[%s204 + $0x40] sm:$0xff] %v2278
        %3303 = vst [vmem:[%s204 + $0x48] sm:$0xff] %v2279
        %3304 = vst [vmem:[%s204 + $0x50] sm:$0xff] %v2280
        %3305 = vst [vmem:[%s204 + $0x58] sm:$0xff] %v2281
        %3306 = vst [vmem:[%s204 + $0x60] sm:$0xff] %v2282
        %3307 = vst [vmem:[%s204 + $0x68] sm:$0xff] %v2283
        %3308 = vst [vmem:[%s204 + $0x70] sm:$0xff] %v2284
        %3309 = vst [vmem:[%s204 + $0x78] sm:$0xff] %v2285
        %3310 = vst [vmem:[%s204 + $0x80] sm:$0xff] %v2286
        %3311 = vst [vmem:[%s204 + $0x88] sm:$0xff] %v2287
        %3312 = vst [vmem:[%s204 + $0x90] sm:$0xff] %v2288
        %3313 = vst [vmem:[%s204 + $0x98] sm:$0xff] %v2289
        %3314 = vst [vmem:[%s204 + $0xa0] sm:$0xff] %v2290
        %3315 = vst [vmem:[%s204 + $0xa8] sm:$0xff] %v2291
        %3316 = vst [vmem:[%s204 + $0xb0] sm:$0xff] %v2292
        %3317 = vst [vmem:[%s204 + $0xb8] sm:$0xff] %v2293
        %3318 = vst [vmem:[%s204 + $0xc0] sm:$0xff] %v2294
        %3319 = vst [vmem:[%s204 + $0xc8] sm:$0xff] %v2295
        %3320 = vst [vmem:[%s204 + $0xd0] sm:$0xff] %v2296
        %3321 = vst [vmem:[%s204 + $0xd8] sm:$0xff] %v2297
        %3322 = vst [vmem:[%s204 + $0xe0] sm:$0xff] %v2298
        %3323 = vst [vmem:[%s204 + $0xe8] sm:$0xff] %v2299
        %3324 = vst [vmem:[%s204 + $0xf0] sm:$0xff] %v2300
        %3325 = vst [vmem:[%s204 + $0xf8] sm:$0xff] %v2301
        %3326 = vst [vmem:[%s204 + $0x100] sm:$0xff] %v2302
        %3327 = vst [vmem:[%s204 + $0x108] sm:$0xff] %v2303
        %3328 = vst [vmem:[%s204 + $0x110] sm:$0xff] %v2304
        %3329 = vst [vmem:[%s204 + $0x118] sm:$0xff] %v2305
        %3330 = vst [vmem:[%s204 + $0x120] sm:$0xff] %v2306
        %3331 = vst [vmem:[%s204 + $0x128] sm:$0xff] %v2307
        %3332 = vst [vmem:[%s204 + $0x130] sm:$0xff] %v2308
        %3333 = vst [vmem:[%s204 + $0x138] sm:$0xff] %v2309
        %3334 = vst [vmem:[%s204 + $0x140] sm:$0xff] %v2310
        %3335 = vst [vmem:[%s204 + $0x148] sm:$0xff] %v2311
        %3336 = vst [vmem:[%s204 + $0x150] sm:$0xff] %v2312
        %3337 = vst [vmem:[%s204 + $0x158] sm:$0xff] %v2313
        %3338 = vst [vmem:[%s204 + $0x160] sm:$0xff] %v2314
        %3339 = vst [vmem:[%s204 + $0x168] sm:$0xff] %v2315
        %3340 = vst [vmem:[%s204 + $0x170] sm:$0xff] %v2316
        %3341 = vst [vmem:[%s204 + $0x178] sm:$0xff] %v2317
        %3342 = vst [vmem:[%s204 + $0x180] sm:$0xff] %v2318
        %3343 = vst [vmem:[%s204 + $0x188] sm:$0xff] %v2319
        %3344 = vst [vmem:[%s204 + $0x190] sm:$0xff] %v2320
        %3345 = vst [vmem:[%s204 + $0x198] sm:$0xff] %v2321
        %3346 = vst [vmem:[%s204 + $0x1a0] sm:$0xff] %v2322
        %3347 = vst [vmem:[%s204 + $0x1a8] sm:$0xff] %v2323
        %3348 = vst [vmem:[%s204 + $0x1b0] sm:$0xff] %v2324
        %3349 = vst [vmem:[%s204 + $0x1b8] sm:$0xff] %v2325
        %3350 = vst [vmem:[%s204 + $0x1c0] sm:$0xff] %v2326
        %3351 = vst [vmem:[%s204 + $0x1c8] sm:$0xff] %v2327
        %3352 = vst [vmem:[%s204 + $0x1d0] sm:$0xff] %v2328
        %3353 = vst [vmem:[%s204 + $0x1d8] sm:$0xff] %v2329
        %3354 = vst [vmem:[%s204 + $0x1e0] sm:$0xff] %v2330
        %3355 = vst [vmem:[%s204 + $0x1e8] sm:$0xff] %v2331
        %3356 = vst [vmem:[%s204 + $0x1f0] sm:$0xff] %v2332
        %3357 = vst [vmem:[%s204 + $0x1f8] sm:$0xff] %v2333
        %3358 = vst [vmem:[%s204 + $0x200] sm:$0xff] %v2334
        %3359 = vst [vmem:[%s204 + $0x208] sm:$0xff] %v2335
        %3360 = vst [vmem:[%s204 + $0x210] sm:$0xff] %v2336
        %3361 = vst [vmem:[%s204 + $0x218] sm:$0xff] %v2337
        %3362 = vst [vmem:[%s204 + $0x220] sm:$0xff] %v2338
        %3363 = vst [vmem:[%s204 + $0x228] sm:$0xff] %v2339
        %3364 = vst [vmem:[%s204 + $0x230] sm:$0xff] %v2340
        %3365 = vst [vmem:[%s204 + $0x238] sm:$0xff] %v2341
        %3366 = vst [vmem:[%s204 + $0x240] sm:$0xff] %v2342
        %3367 = vst [vmem:[%s204 + $0x248] sm:$0xff] %v2343
        %3368 = vst [vmem:[%s204 + $0x250] sm:$0xff] %v2344
        %3369 = vst [vmem:[%s204 + $0x258] sm:$0xff] %v2345
        %3370 = vst [vmem:[%s204 + $0x260] sm:$0xff] %v2346
        %3371 = vst [vmem:[%s204 + $0x268] sm:$0xff] %v2347
        %3372 = vst [vmem:[%s204 + $0x270] sm:$0xff] %v2348
        %3373 = vst [vmem:[%s204 + $0x278] sm:$0xff] %v2349
        %3374 = vst [vmem:[%s204 + $0x280] sm:$0xff] %v2350
        %3375 = vst [vmem:[%s204 + $0x288] sm:$0xff] %v2351
        %3376 = vst [vmem:[%s204 + $0x290] sm:$0xff] %v2352
        %3377 = vst [vmem:[%s204 + $0x298] sm:$0xff] %v2353
        %3378 = vst [vmem:[%s204 + $0x2a0] sm:$0xff] %v2354
        %3379 = vst [vmem:[%s204 + $0x2a8] sm:$0xff] %v2355
        %3380 = vst [vmem:[%s204 + $0x2b0] sm:$0xff] %v2356
        %3381 = vst [vmem:[%s204 + $0x2b8] sm:$0xff] %v2357
        %3382 = vst [vmem:[%s204 + $0x2c0] sm:$0xff] %v2358
        %3383 = vst [vmem:[%s204 + $0x2c8] sm:$0xff] %v2359
        %3384 = vst [vmem:[%s204 + $0x2d0] sm:$0xff] %v2360
        %3385 = vst [vmem:[%s204 + $0x2d8] sm:$0xff] %v2361
        %3386 = vst [vmem:[%s204 + $0x2e0] sm:$0xff] %v2362
        %3387 = vst [vmem:[%s204 + $0x2e8] sm:$0xff] %v2363
        %3388 = vst [vmem:[%s204 + $0x2f0] sm:$0xff] %v2364
        %3389 = vst [vmem:[%s204 + $0x2f8] sm:$0xff] %v2365
        %3390 = vst [vmem:[%s204 + $0x300] sm:$0xff] %v2366
        %3391 = vst [vmem:[%s204 + $0x308] sm:$0xff] %v2367
        %3392 = vst [vmem:[%s204 + $0x310] sm:$0xff] %v2368
        %3393 = vst [vmem:[%s204 + $0x318] sm:$0xff] %v2369
        %3394 = vst [vmem:[%s204 + $0x320] sm:$0xff] %v2370
        %3395 = vst [vmem:[%s204 + $0x328] sm:$0xff] %v2371
        %3396 = vst [vmem:[%s204 + $0x330] sm:$0xff] %v2372
        %3397 = vst [vmem:[%s204 + $0x338] sm:$0xff] %v2373
        %3398 = vst [vmem:[%s204 + $0x340] sm:$0xff] %v2374
        %3399 = vst [vmem:[%s204 + $0x348] sm:$0xff] %v2375
        %3400 = vst [vmem:[%s204 + $0x350] sm:$0xff] %v2376
        %3401 = vst [vmem:[%s204 + $0x358] sm:$0xff] %v2377
        %3402 = vst [vmem:[%s204 + $0x360] sm:$0xff] %v2378
        %3403 = vst [vmem:[%s204 + $0x368] sm:$0xff] %v2379
        %3404 = vst [vmem:[%s204 + $0x370] sm:$0xff] %v2380
        %3405 = vst [vmem:[%s204 + $0x378] sm:$0xff] %v2381
        %3406 = vst [vmem:[%s204 + $0x380] sm:$0xff] %v2382
        %3407 = vst [vmem:[%s204 + $0x388] sm:$0xff] %v2383
        %3408 = vst [vmem:[%s204 + $0x390] sm:$0xff] %v2384
        %3409 = vst [vmem:[%s204 + $0x398] sm:$0xff] %v2385
        %3410 = vst [vmem:[%s204 + $0x3a0] sm:$0xff] %v2386
        %3411 = vst [vmem:[%s204 + $0x3a8] sm:$0xff] %v2387
        %3412 = vst [vmem:[%s204 + $0x3b0] sm:$0xff] %v2388
        %3413 = vst [vmem:[%s204 + $0x3b8] sm:$0xff] %v2389
        %3414 = vst [vmem:[%s204 + $0x3c0] sm:$0xff] %v2390
        %3415 = vst [vmem:[%s204 + $0x3c8] sm:$0xff] %v2391
        %3416 = vst [vmem:[%s204 + $0x3d0] sm:$0xff] %v2392
        %3417 = vst [vmem:[%s204 + $0x3d8] sm:$0xff] %v2393
        %3418 = vst [vmem:[%s204 + $0x3e0] sm:$0xff] %v2394
        %3419 = vst [vmem:[%s204 + $0x3e8] sm:$0xff] %v2395
        %3420 = vst [vmem:[%s204 + $0x3f0] sm:$0xff] %v2396
        %3421 = vst [vmem:[%s204 + $0x3f8] sm:$0xff] %v2397
        %3422 = vst [vmem:[%s204 + $0x400] sm:$0xff] %v2398
        %3423 = vst [vmem:[%s204 + $0x408] sm:$0xff] %v2399
        %3424 = vst [vmem:[%s204 + $0x410] sm:$0xff] %v2400
        %3425 = vst [vmem:[%s204 + $0x418] sm:$0xff] %v2401
        %3426 = vst [vmem:[%s204 + $0x420] sm:$0xff] %v2402
        %3427 = vst [vmem:[%s204 + $0x428] sm:$0xff] %v2403
        %3428 = vst [vmem:[%s204 + $0x430] sm:$0xff] %v2404
        %3429 = vst [vmem:[%s204 + $0x438] sm:$0xff] %v2405
        %3430 = vst [vmem:[%s204 + $0x440] sm:$0xff] %v2406
        %3431 = vst [vmem:[%s204 + $0x448] sm:$0xff] %v2407
        %3432 = vst [vmem:[%s204 + $0x450] sm:$0xff] %v2408
        %3433 = vst [vmem:[%s204 + $0x458] sm:$0xff] %v2409
        %3434 = vst [vmem:[%s204 + $0x460] sm:$0xff] %v2410
        %3435 = vst [vmem:[%s204 + $0x468] sm:$0xff] %v2411
        %3436 = vst [vmem:[%s204 + $0x470] sm:$0xff] %v2412
        %3437 = vst [vmem:[%s204 + $0x478] sm:$0xff] %v2413
        %3438 = vst [vmem:[%s204 + $0x480] sm:$0xff] %v2414
        %3439 = vst [vmem:[%s204 + $0x488] sm:$0xff] %v2415
        %3440 = vst [vmem:[%s204 + $0x490] sm:$0xff] %v2416
        %3441 = vst [vmem:[%s204 + $0x498] sm:$0xff] %v2417
        %3442 = vst [vmem:[%s204 + $0x4a0] sm:$0xff] %v2418
        %3443 = vst [vmem:[%s204 + $0x4a8] sm:$0xff] %v2419
        %3444 = vst [vmem:[%s204 + $0x4b0] sm:$0xff] %v2420
        %3445 = vst [vmem:[%s204 + $0x4b8] sm:$0xff] %v2421
        %3446 = vst [vmem:[%s204 + $0x4c0] sm:$0xff] %v2422
        %3447 = vst [vmem:[%s204 + $0x4c8] sm:$0xff] %v2423
        %3448 = vst [vmem:[%s204 + $0x4d0] sm:$0xff] %v2424
        %3449 = vst [vmem:[%s204 + $0x4d8] sm:$0xff] %v2425
        %3450 = vst [vmem:[%s204 + $0x4e0] sm:$0xff] %v2426
        %3451 = vst [vmem:[%s204 + $0x4e8] sm:$0xff] %v2427
        %3452 = vst [vmem:[%s204 + $0x4f0] sm:$0xff] %v2428
        %3453 = vst [vmem:[%s204 + $0x4f8] sm:$0xff] %v2429
        %3454 = vst [vmem:[%s204 + $0x500] sm:$0xff] %v2430
        %3455 = vst [vmem:[%s204 + $0x508] sm:$0xff] %v2431
        %3456 = vst [vmem:[%s204 + $0x510] sm:$0xff] %v2432
        %3457 = vst [vmem:[%s204 + $0x518] sm:$0xff] %v2433
        %3458 = vst [vmem:[%s204 + $0x520] sm:$0xff] %v2434
        %3459 = vst [vmem:[%s204 + $0x528] sm:$0xff] %v2435
        %3460 = vst [vmem:[%s204 + $0x530] sm:$0xff] %v2436
        %3461 = vst [vmem:[%s204 + $0x538] sm:$0xff] %v2437
        %3462 = vst [vmem:[%s204 + $0x540] sm:$0xff] %v2438
        %3463 = vst [vmem:[%s204 + $0x548] sm:$0xff] %v2439
        %3464 = vst [vmem:[%s204 + $0x550] sm:$0xff] %v2440
        %3465 = vst [vmem:[%s204 + $0x558] sm:$0xff] %v2441
        %3466 = vst [vmem:[%s204 + $0x560] sm:$0xff] %v2442
        %3467 = vst [vmem:[%s204 + $0x568] sm:$0xff] %v2443
        %3468 = vst [vmem:[%s204 + $0x570] sm:$0xff] %v2444
        %3469 = vst [vmem:[%s204 + $0x578] sm:$0xff] %v2445
        %3470 = vst [vmem:[%s204 + $0x580] sm:$0xff] %v2446
        %3471 = vst [vmem:[%s204 + $0x588] sm:$0xff] %v2447
        %3472 = vst [vmem:[%s204 + $0x590] sm:$0xff] %v2448
        %3473 = vst [vmem:[%s204 + $0x598] sm:$0xff] %v2449
        %3474 = vst [vmem:[%s204 + $0x5a0] sm:$0xff] %v2450
        %3475 = vst [vmem:[%s204 + $0x5a8] sm:$0xff] %v2451
        %3476 = vst [vmem:[%s204 + $0x5b0] sm:$0xff] %v2452
        %3477 = vst [vmem:[%s204 + $0x5b8] sm:$0xff] %v2453
        %3478 = vst [vmem:[%s204 + $0x5c0] sm:$0xff] %v2454
        %3479 = vst [vmem:[%s204 + $0x5c8] sm:$0xff] %v2455
        %3480 = vst [vmem:[%s204 + $0x5d0] sm:$0xff] %v2456
        %3481 = vst [vmem:[%s204 + $0x5d8] sm:$0xff] %v2457
        %3482 = vst [vmem:[%s204 + $0x5e0] sm:$0xff] %v2458
        %3483 = vst [vmem:[%s204 + $0x5e8] sm:$0xff] %v2459
        %3484 = vst [vmem:[%s204 + $0x5f0] sm:$0xff] %v2460
        %3485 = vst [vmem:[%s204 + $0x5f8] sm:$0xff] %v2461
        %3486 = vst [vmem:[%s204 + $0x600] sm:$0xff] %v2462
        %3487 = vst [vmem:[%s204 + $0x608] sm:$0xff] %v2463
        %3488 = vst [vmem:[%s204 + $0x610] sm:$0xff] %v2464
        %3489 = vst [vmem:[%s204 + $0x618] sm:$0xff] %v2465
        %3490 = vst [vmem:[%s204 + $0x620] sm:$0xff] %v2466
        %3491 = vst [vmem:[%s204 + $0x628] sm:$0xff] %v2467
        %3492 = vst [vmem:[%s204 + $0x630] sm:$0xff] %v2468
        %3493 = vst [vmem:[%s204 + $0x638] sm:$0xff] %v2469
        %3494 = vst [vmem:[%s204 + $0x640] sm:$0xff] %v2470
        %3495 = vst [vmem:[%s204 + $0x648] sm:$0xff] %v2471
        %3496 = vst [vmem:[%s204 + $0x650] sm:$0xff] %v2472
        %3497 = vst [vmem:[%s204 + $0x658] sm:$0xff] %v2473
        %3498 = vst [vmem:[%s204 + $0x660] sm:$0xff] %v2474
        %3499 = vst [vmem:[%s204 + $0x668] sm:$0xff] %v2475
        %3500 = vst [vmem:[%s204 + $0x670] sm:$0xff] %v2476
        %3501 = vst [vmem:[%s204 + $0x678] sm:$0xff] %v2477
        %3502 = vst [vmem:[%s204 + $0x680] sm:$0xff] %v2478
        %3503 = vst [vmem:[%s204 + $0x688] sm:$0xff] %v2479
        %3504 = vst [vmem:[%s204 + $0x690] sm:$0xff] %v2480
        %3505 = vst [vmem:[%s204 + $0x698] sm:$0xff] %v2481
        %3506 = vst [vmem:[%s204 + $0x6a0] sm:$0xff] %v2482
        %3507 = vst [vmem:[%s204 + $0x6a8] sm:$0xff] %v2483
        %3508 = vst [vmem:[%s204 + $0x6b0] sm:$0xff] %v2484
        %3509 = vst [vmem:[%s204 + $0x6b8] sm:$0xff] %v2485
        %3510 = vst [vmem:[%s204 + $0x6c0] sm:$0xff] %v2486
        %3511 = vst [vmem:[%s204 + $0x6c8] sm:$0xff] %v2487
        %3512 = vst [vmem:[%s204 + $0x6d0] sm:$0xff] %v2488
        %3513 = vst [vmem:[%s204 + $0x6d8] sm:$0xff] %v2489
        %3514 = vst [vmem:[%s204 + $0x6e0] sm:$0xff] %v2490
        %3515 = vst [vmem:[%s204 + $0x6e8] sm:$0xff] %v2491
        %3516 = vst [vmem:[%s204 + $0x6f0] sm:$0xff] %v2492
        %3517 = vst [vmem:[%s204 + $0x6f8] sm:$0xff] %v2493
        %3518 = vst [vmem:[%s204 + $0x700] sm:$0xff] %v2494
        %3519 = vst [vmem:[%s204 + $0x708] sm:$0xff] %v2495
        %3520 = vst [vmem:[%s204 + $0x710] sm:$0xff] %v2496
        %3521 = vst [vmem:[%s204 + $0x718] sm:$0xff] %v2497
        %3522 = vst [vmem:[%s204 + $0x720] sm:$0xff] %v2498
        %3523 = vst [vmem:[%s204 + $0x728] sm:$0xff] %v2499
        %3524 = vst [vmem:[%s204 + $0x730] sm:$0xff] %v2500
        %3525 = vst [vmem:[%s204 + $0x738] sm:$0xff] %v2501
        %3526 = vst [vmem:[%s204 + $0x740] sm:$0xff] %v2502
        %3527 = vst [vmem:[%s204 + $0x748] sm:$0xff] %v2503
        %3528 = vst [vmem:[%s204 + $0x750] sm:$0xff] %v2504
        %3529 = vst [vmem:[%s204 + $0x758] sm:$0xff] %v2505
        %3530 = vst [vmem:[%s204 + $0x760] sm:$0xff] %v2506
        %3531 = vst [vmem:[%s204 + $0x768] sm:$0xff] %v2507
        %3532 = vst [vmem:[%s204 + $0x770] sm:$0xff] %v2508
        %3533 = vst [vmem:[%s204 + $0x778] sm:$0xff] %v2509
        %3534 = vst [vmem:[%s204 + $0x780] sm:$0xff] %v2510
        %3535 = vst [vmem:[%s204 + $0x788] sm:$0xff] %v2511
        %3536 = vst [vmem:[%s204 + $0x790] sm:$0xff] %v2512
        %3537 = vst [vmem:[%s204 + $0x798] sm:$0xff] %v2513
        %3538 = vst [vmem:[%s204 + $0x7a0] sm:$0xff] %v2514
        %3539 = vst [vmem:[%s204 + $0x7a8] sm:$0xff] %v2515
        %3540 = vst [vmem:[%s204 + $0x7b0] sm:$0xff] %v2516
        %3541 = vst [vmem:[%s204 + $0x7b8] sm:$0xff] %v2517
        %3542 = vst [vmem:[%s204 + $0x7c0] sm:$0xff] %v2518
        %3543 = vst [vmem:[%s204 + $0x7c8] sm:$0xff] %v2519
        %3544 = vst [vmem:[%s204 + $0x7d0] sm:$0xff] %v2520
        %3545 = vst [vmem:[%s204 + $0x7d8] sm:$0xff] %v2521
        %3546 = vst [vmem:[%s204 + $0x7e0] sm:$0xff] %v2522
        %3547 = vst [vmem:[%s204 + $0x7e8] sm:$0xff] %v2523
        %3548 = vst [vmem:[%s204 + $0x7f0] sm:$0xff] %v2524
        %3549 = vst [vmem:[%s204 + $0x7f8] sm:$0xff] %v2525
        %3550 = vst [vmem:[%s204 + $0x800] sm:$0xff] %v2526
        %3551 = vst [vmem:[%s204 + $0x808] sm:$0xff] %v2527
        %3552 = vst [vmem:[%s204 + $0x810] sm:$0xff] %v2528
        %3553 = vst [vmem:[%s204 + $0x818] sm:$0xff] %v2529
        %3554 = vst [vmem:[%s204 + $0x820] sm:$0xff] %v2530
        %3555 = vst [vmem:[%s204 + $0x828] sm:$0xff] %v2531
        %3556 = vst [vmem:[%s204 + $0x830] sm:$0xff] %v2532
        %3557 = vst [vmem:[%s204 + $0x838] sm:$0xff] %v2533
        %3558 = vst [vmem:[%s204 + $0x840] sm:$0xff] %v2534
        %3559 = vst [vmem:[%s204 + $0x848] sm:$0xff] %v2535
        %3560 = vst [vmem:[%s204 + $0x850] sm:$0xff] %v2536
        %3561 = vst [vmem:[%s204 + $0x858] sm:$0xff] %v2537
        %3562 = vst [vmem:[%s204 + $0x860] sm:$0xff] %v2538
        %3563 = vst [vmem:[%s204 + $0x868] sm:$0xff] %v2539
        %3564 = vst [vmem:[%s204 + $0x870] sm:$0xff] %v2540
        %3565 = vst [vmem:[%s204 + $0x878] sm:$0xff] %v2541
        %3566 = vst [vmem:[%s204 + $0x880] sm:$0xff] %v2542
        %3567 = vst [vmem:[%s204 + $0x888] sm:$0xff] %v2543
        %3568 = vst [vmem:[%s204 + $0x890] sm:$0xff] %v2544
        %3569 = vst [vmem:[%s204 + $0x898] sm:$0xff] %v2545
        %3570 = vst [vmem:[%s204 + $0x8a0] sm:$0xff] %v2546
        %3571 = vst [vmem:[%s204 + $0x8a8] sm:$0xff] %v2547
        %3572 = vst [vmem:[%s204 + $0x8b0] sm:$0xff] %v2548
        %3573 = vst [vmem:[%s204 + $0x8b8] sm:$0xff] %v2549
        %3574 = vst [vmem:[%s204 + $0x8c0] sm:$0xff] %v2550
        %3575 = vst [vmem:[%s204 + $0x8c8] sm:$0xff] %v2551
        %3576 = vst [vmem:[%s204 + $0x8d0] sm:$0xff] %v2552
        %3577 = vst [vmem:[%s204 + $0x8d8] sm:$0xff] %v2553
        %3578 = vst [vmem:[%s204 + $0x8e0] sm:$0xff] %v2554
        %3579 = vst [vmem:[%s204 + $0x8e8] sm:$0xff] %v2555
        %3580 = vst [vmem:[%s204 + $0x8f0] sm:$0xff] %v2556
        %3581 = vst [vmem:[%s204 + $0x8f8] sm:$0xff] %v2557
        %3582 = vst [vmem:[%s204 + $0x900] sm:$0xff] %v2558
        %3583 = vst [vmem:[%s204 + $0x908] sm:$0xff] %v2559
        %3584 = vst [vmem:[%s204 + $0x910] sm:$0xff] %v2560
        %3585 = vst [vmem:[%s204 + $0x918] sm:$0xff] %v2561
        %3586 = vst [vmem:[%s204 + $0x920] sm:$0xff] %v2562
        %3587 = vst [vmem:[%s204 + $0x928] sm:$0xff] %v2563
        %3588 = vst [vmem:[%s204 + $0x930] sm:$0xff] %v2564
        %3589 = vst [vmem:[%s204 + $0x938] sm:$0xff] %v2565
        %3590 = vst [vmem:[%s204 + $0x940] sm:$0xff] %v2566
        %3591 = vst [vmem:[%s204 + $0x948] sm:$0xff] %v2567
        %3592 = vst [vmem:[%s204 + $0x950] sm:$0xff] %v2568
        %3593 = vst [vmem:[%s204 + $0x958] sm:$0xff] %v2569
        %3594 = vst [vmem:[%s204 + $0x960] sm:$0xff] %v2570
        %3595 = vst [vmem:[%s204 + $0x968] sm:$0xff] %v2571
        %3596 = vst [vmem:[%s204 + $0x970] sm:$0xff] %v2572
        %3597 = vst [vmem:[%s204 + $0x978] sm:$0xff] %v2573
        %3598 = vst [vmem:[%s204 + $0x980] sm:$0xff] %v2574
        %3599 = vst [vmem:[%s204 + $0x988] sm:$0xff] %v2575
        %3600 = vst [vmem:[%s204 + $0x990] sm:$0xff] %v2576
        %3601 = vst [vmem:[%s204 + $0x998] sm:$0xff] %v2577
        %3602 = vst [vmem:[%s204 + $0x9a0] sm:$0xff] %v2578
        %3603 = vst [vmem:[%s204 + $0x9a8] sm:$0xff] %v2579
        %3604 = vst [vmem:[%s204 + $0x9b0] sm:$0xff] %v2580
        %3605 = vst [vmem:[%s204 + $0x9b8] sm:$0xff] %v2581
        %3606 = vst [vmem:[%s204 + $0x9c0] sm:$0xff] %v2582
        %3607 = vst [vmem:[%s204 + $0x9c8] sm:$0xff] %v2583
        %3608 = vst [vmem:[%s204 + $0x9d0] sm:$0xff] %v2584
        %3609 = vst [vmem:[%s204 + $0x9d8] sm:$0xff] %v2585
        %3610 = vst [vmem:[%s204 + $0x9e0] sm:$0xff] %v2586
        %3611 = vst [vmem:[%s204 + $0x9e8] sm:$0xff] %v2587
        %3612 = vst [vmem:[%s204 + $0x9f0] sm:$0xff] %v2588
        %3613 = vst [vmem:[%s204 + $0x9f8] sm:$0xff] %v2589
        %3614 = vst [vmem:[%s204 + $0xa00] sm:$0xff] %v2590
        %3615 = vst [vmem:[%s204 + $0xa08] sm:$0xff] %v2591
        %3616 = vst [vmem:[%s204 + $0xa10] sm:$0xff] %v2592
        %3617 = vst [vmem:[%s204 + $0xa18] sm:$0xff] %v2593
        %3618 = vst [vmem:[%s204 + $0xa20] sm:$0xff] %v2594
        %3619 = vst [vmem:[%s204 + $0xa28] sm:$0xff] %v2595
        %3620 = vst [vmem:[%s204 + $0xa30] sm:$0xff] %v2596
        %3621 = vst [vmem:[%s204 + $0xa38] sm:$0xff] %v2597
        %3622 = vst [vmem:[%s204 + $0xa40] sm:$0xff] %v2598
        %3623 = vst [vmem:[%s204 + $0xa48] sm:$0xff] %v2599
        %3624 = vst [vmem:[%s204 + $0xa50] sm:$0xff] %v2600
        %3625 = vst [vmem:[%s204 + $0xa58] sm:$0xff] %v2601
        %3626 = vst [vmem:[%s204 + $0xa60] sm:$0xff] %v2602
        %3627 = vst [vmem:[%s204 + $0xa68] sm:$0xff] %v2603
        %3628 = vst [vmem:[%s204 + $0xa70] sm:$0xff] %v2604
        %3629 = vst [vmem:[%s204 + $0xa78] sm:$0xff] %v2605
        %3630 = vst [vmem:[%s204 + $0xa80] sm:$0xff] %v2606
        %3631 = vst [vmem:[%s204 + $0xa88] sm:$0xff] %v2607
        %3632 = vst [vmem:[%s204 + $0xa90] sm:$0xff] %v2608
        %3633 = vst [vmem:[%s204 + $0xa98] sm:$0xff] %v2609
        %3634 = vst [vmem:[%s204 + $0xaa0] sm:$0xff] %v2610
        %3635 = vst [vmem:[%s204 + $0xaa8] sm:$0xff] %v2611
        %3636 = vst [vmem:[%s204 + $0xab0] sm:$0xff] %v2612
        %3637 = vst [vmem:[%s204 + $0xab8] sm:$0xff] %v2613
        %3638 = vst [vmem:[%s204 + $0xac0] sm:$0xff] %v2614
        %3639 = vst [vmem:[%s204 + $0xac8] sm:$0xff] %v2615
        %3640 = vst [vmem:[%s204 + $0xad0] sm:$0xff] %v2616
        %3641 = vst [vmem:[%s204 + $0xad8] sm:$0xff] %v2617
        %3642 = vst [vmem:[%s204 + $0xae0] sm:$0xff] %v2618
        %3643 = vst [vmem:[%s204 + $0xae8] sm:$0xff] %v2619
        %3644 = vst [vmem:[%s204 + $0xaf0] sm:$0xff] %v2620
        %3645 = vst [vmem:[%s204 + $0xaf8] sm:$0xff] %v2621
        %3646 = vst [vmem:[%s204 + $0xb00] sm:$0xff] %v2622
        %3647 = vst [vmem:[%s204 + $0xb08] sm:$0xff] %v2623
        %3648 = vst [vmem:[%s204 + $0xb10] sm:$0xff] %v2624
        %3649 = vst [vmem:[%s204 + $0xb18] sm:$0xff] %v2625
        %3650 = vst [vmem:[%s204 + $0xb20] sm:$0xff] %v2626
        %3651 = vst [vmem:[%s204 + $0xb28] sm:$0xff] %v2627
        %3652 = vst [vmem:[%s204 + $0xb30] sm:$0xff] %v2628
        %3653 = vst [vmem:[%s204 + $0xb38] sm:$0xff] %v2629
        %3654 = vst [vmem:[%s204 + $0xb40] sm:$0xff] %v2630
        %3655 = vst [vmem:[%s204 + $0xb48] sm:$0xff] %v2631
        %3656 = vst [vmem:[%s204 + $0xb50] sm:$0xff] %v2632
        %3657 = vst [vmem:[%s204 + $0xb58] sm:$0xff] %v2633
        %3658 = vst [vmem:[%s204 + $0xb60] sm:$0xff] %v2634
        %3659 = vst [vmem:[%s204 + $0xb68] sm:$0xff] %v2635
        %3660 = vst [vmem:[%s204 + $0xb70] sm:$0xff] %v2636
        %3661 = vst [vmem:[%s204 + $0xb78] sm:$0xff] %v2637
        %3662 = vst [vmem:[%s204 + $0xb80] sm:$0xff] %v2638
        %3663 = vst [vmem:[%s204 + $0xb88] sm:$0xff] %v2639
        %3664 = vst [vmem:[%s204 + $0xb90] sm:$0xff] %v2640
        %3665 = vst [vmem:[%s204 + $0xb98] sm:$0xff] %v2641
        %3666 = vst [vmem:[%s204 + $0xba0] sm:$0xff] %v2642
        %3667 = vst [vmem:[%s204 + $0xba8] sm:$0xff] %v2643
        %3668 = vst [vmem:[%s204 + $0xbb0] sm:$0xff] %v2644
        %3669 = vst [vmem:[%s204 + $0xbb8] sm:$0xff] %v2645
        %3670 = vst [vmem:[%s204 + $0xbc0] sm:$0xff] %v2646
        %3671 = vst [vmem:[%s204 + $0xbc8] sm:$0xff] %v2647
        %3672 = vst [vmem:[%s204 + $0xbd0] sm:$0xff] %v2648
        %3673 = vst [vmem:[%s204 + $0xbd8] sm:$0xff] %v2649
        %3674 = vst [vmem:[%s204 + $0xbe0] sm:$0xff] %v2650
        %3675 = vst [vmem:[%s204 + $0xbe8] sm:$0xff] %v2651
        %3676 = vst [vmem:[%s204 + $0xbf0] sm:$0xff] %v2652
        %3677 = vst [vmem:[%s204 + $0xbf8] sm:$0xff] %v2653
        %3678 = vst [vmem:[%s204 + $0xc00] sm:$0xff] %v2654
        %3679 = vst [vmem:[%s204 + $0xc08] sm:$0xff] %v2655
        %3680 = vst [vmem:[%s204 + $0xc10] sm:$0xff] %v2656
        %3681 = vst [vmem:[%s204 + $0xc18] sm:$0xff] %v2657
        %3682 = vst [vmem:[%s204 + $0xc20] sm:$0xff] %v2658
        %3683 = vst [vmem:[%s204 + $0xc28] sm:$0xff] %v2659
        %3684 = vst [vmem:[%s204 + $0xc30] sm:$0xff] %v2660
        %3685 = vst [vmem:[%s204 + $0xc38] sm:$0xff] %v2661
        %3686 = vst [vmem:[%s204 + $0xc40] sm:$0xff] %v2662
        %3687 = vst [vmem:[%s204 + $0xc48] sm:$0xff] %v2663
        %3688 = vst [vmem:[%s204 + $0xc50] sm:$0xff] %v2664
        %3689 = vst [vmem:[%s204 + $0xc58] sm:$0xff] %v2665
        %3690 = vst [vmem:[%s204 + $0xc60] sm:$0xff] %v2666
        %3691 = vst [vmem:[%s204 + $0xc68] sm:$0xff] %v2667
        %3692 = vst [vmem:[%s204 + $0xc70] sm:$0xff] %v2668
        %3693 = vst [vmem:[%s204 + $0xc78] sm:$0xff] %v2669
        %3694 = vst [vmem:[%s204 + $0xc80] sm:$0xff] %v2670
        %3695 = vst [vmem:[%s204 + $0xc88] sm:$0xff] %v2671
        %3696 = vst [vmem:[%s204 + $0xc90] sm:$0xff] %v2672
        %3697 = vst [vmem:[%s204 + $0xc98] sm:$0xff] %v2673
        %3698 = vst [vmem:[%s204 + $0xca0] sm:$0xff] %v2674
        %3699 = vst [vmem:[%s204 + $0xca8] sm:$0xff] %v2675
        %3700 = vst [vmem:[%s204 + $0xcb0] sm:$0xff] %v2676
        %3701 = vst [vmem:[%s204 + $0xcb8] sm:$0xff] %v2677
        %3702 = vst [vmem:[%s204 + $0xcc0] sm:$0xff] %v2678
        %3703 = vst [vmem:[%s204 + $0xcc8] sm:$0xff] %v2679
        %3704 = vst [vmem:[%s204 + $0xcd0] sm:$0xff] %v2680
        %3705 = vst [vmem:[%s204 + $0xcd8] sm:$0xff] %v2681
        %3706 = vst [vmem:[%s204 + $0xce0] sm:$0xff] %v2682
        %3707 = vst [vmem:[%s204 + $0xce8] sm:$0xff] %v2683
        %3708 = vst [vmem:[%s204 + $0xcf0] sm:$0xff] %v2684
        %3709 = vst [vmem:[%s204 + $0xcf8] sm:$0xff] %v2685
        %3710 = vst [vmem:[%s204 + $0xd00] sm:$0xff] %v2686
        %3711 = vst [vmem:[%s204 + $0xd08] sm:$0xff] %v2687
        %3712 = vst [vmem:[%s204 + $0xd10] sm:$0xff] %v2688
        %3713 = vst [vmem:[%s204 + $0xd18] sm:$0xff] %v2689
        %3714 = vst [vmem:[%s204 + $0xd20] sm:$0xff] %v2690
        %3715 = vst [vmem:[%s204 + $0xd28] sm:$0xff] %v2691
        %3716 = vst [vmem:[%s204 + $0xd30] sm:$0xff] %v2692
        %3717 = vst [vmem:[%s204 + $0xd38] sm:$0xff] %v2693
        %3718 = vst [vmem:[%s204 + $0xd40] sm:$0xff] %v2694
        %3719 = vst [vmem:[%s204 + $0xd48] sm:$0xff] %v2695
        %3720 = vst [vmem:[%s204 + $0xd50] sm:$0xff] %v2696
        %3721 = vst [vmem:[%s204 + $0xd58] sm:$0xff] %v2697
        %3722 = vst [vmem:[%s204 + $0xd60] sm:$0xff] %v2698
        %3723 = vst [vmem:[%s204 + $0xd68] sm:$0xff] %v2699
        %3724 = vst [vmem:[%s204 + $0xd70] sm:$0xff] %v2700
        %3725 = vst [vmem:[%s204 + $0xd78] sm:$0xff] %v2701
        %3726 = vst [vmem:[%s204 + $0xd80] sm:$0xff] %v2702
        %3727 = vst [vmem:[%s204 + $0xd88] sm:$0xff] %v2703
        %3728 = vst [vmem:[%s204 + $0xd90] sm:$0xff] %v2704
        %3729 = vst [vmem:[%s204 + $0xd98] sm:$0xff] %v2705
        %3730 = vst [vmem:[%s204 + $0xda0] sm:$0xff] %v2706
        %3731 = vst [vmem:[%s204 + $0xda8] sm:$0xff] %v2707
        %3732 = vst [vmem:[%s204 + $0xdb0] sm:$0xff] %v2708
        %3733 = vst [vmem:[%s204 + $0xdb8] sm:$0xff] %v2709
        %3734 = vst [vmem:[%s204 + $0xdc0] sm:$0xff] %v2710
        %3735 = vst [vmem:[%s204 + $0xdc8] sm:$0xff] %v2711
        %3736 = vst [vmem:[%s204 + $0xdd0] sm:$0xff] %v2712
        %3737 = vst [vmem:[%s204 + $0xdd8] sm:$0xff] %v2713
        %3738 = vst [vmem:[%s204 + $0xde0] sm:$0xff] %v2714
        %3739 = vst [vmem:[%s204 + $0xde8] sm:$0xff] %v2715
        %3740 = vst [vmem:[%s204 + $0xdf0] sm:$0xff] %v2716
        %3741 = vst [vmem:[%s204 + $0xdf8] sm:$0xff] %v2717
        %3742 = vst [vmem:[%s204 + $0xe00] sm:$0xff] %v2718
        %3743 = vst [vmem:[%s204 + $0xe08] sm:$0xff] %v2719
        %3744 = vst [vmem:[%s204 + $0xe10] sm:$0xff] %v2720
        %3745 = vst [vmem:[%s204 + $0xe18] sm:$0xff] %v2721
        %3746 = vst [vmem:[%s204 + $0xe20] sm:$0xff] %v2722
        %3747 = vst [vmem:[%s204 + $0xe28] sm:$0xff] %v2723
        %3748 = vst [vmem:[%s204 + $0xe30] sm:$0xff] %v2724
        %3749 = vst [vmem:[%s204 + $0xe38] sm:$0xff] %v2725
        %3750 = vst [vmem:[%s204 + $0xe40] sm:$0xff] %v2726
        %3751 = vst [vmem:[%s204 + $0xe48] sm:$0xff] %v2727
        %3752 = vst [vmem:[%s204 + $0xe50] sm:$0xff] %v2728
        %3753 = vst [vmem:[%s204 + $0xe58] sm:$0xff] %v2729
        %3754 = vst [vmem:[%s204 + $0xe60] sm:$0xff] %v2730
        %3755 = vst [vmem:[%s204 + $0xe68] sm:$0xff] %v2731
        %3756 = vst [vmem:[%s204 + $0xe70] sm:$0xff] %v2732
        %3757 = vst [vmem:[%s204 + $0xe78] sm:$0xff] %v2733
        %3758 = vst [vmem:[%s204 + $0xe80] sm:$0xff] %v2734
        %3759 = vst [vmem:[%s204 + $0xe88] sm:$0xff] %v2735
        %3760 = vst [vmem:[%s204 + $0xe90] sm:$0xff] %v2736
        %3761 = vst [vmem:[%s204 + $0xe98] sm:$0xff] %v2737
        %3762 = vst [vmem:[%s204 + $0xea0] sm:$0xff] %v2738
        %3763 = vst [vmem:[%s204 + $0xea8] sm:$0xff] %v2739
        %3764 = vst [vmem:[%s204 + $0xeb0] sm:$0xff] %v2740
        %3765 = vst [vmem:[%s204 + $0xeb8] sm:$0xff] %v2741
        %3766 = vst [vmem:[%s204 + $0xec0] sm:$0xff] %v2742
        %3767 = vst [vmem:[%s204 + $0xec8] sm:$0xff] %v2743
        %3768 = vst [vmem:[%s204 + $0xed0] sm:$0xff] %v2744
        %3769 = vst [vmem:[%s204 + $0xed8] sm:$0xff] %v2745
        %3770 = vst [vmem:[%s204 + $0xee0] sm:$0xff] %v2746
        %3771 = vst [vmem:[%s204 + $0xee8] sm:$0xff] %v2747
        %3772 = vst [vmem:[%s204 + $0xef0] sm:$0xff] %v2748
        %3773 = vst [vmem:[%s204 + $0xef8] sm:$0xff] %v2749
        %3774 = vst [vmem:[%s204 + $0xf00] sm:$0xff] %v2750
        %3775 = vst [vmem:[%s204 + $0xf08] sm:$0xff] %v2751
        %3776 = vst [vmem:[%s204 + $0xf10] sm:$0xff] %v2752
        %3777 = vst [vmem:[%s204 + $0xf18] sm:$0xff] %v2753
        %3778 = vst [vmem:[%s204 + $0xf20] sm:$0xff] %v2754
        %3779 = vst [vmem:[%s204 + $0xf28] sm:$0xff] %v2755
        %3780 = vst [vmem:[%s204 + $0xf30] sm:$0xff] %v2756
        %3781 = vst [vmem:[%s204 + $0xf38] sm:$0xff] %v2757
        %3782 = vst [vmem:[%s204 + $0xf40] sm:$0xff] %v2758
        %3783 = vst [vmem:[%s204 + $0xf48] sm:$0xff] %v2759
        %3784 = vst [vmem:[%s204 + $0xf50] sm:$0xff] %v2760
        %3785 = vst [vmem:[%s204 + $0xf58] sm:$0xff] %v2761
        %3786 = vst [vmem:[%s204 + $0xf60] sm:$0xff] %v2762
        %3787 = vst [vmem:[%s204 + $0xf68] sm:$0xff] %v2763
        %3788 = vst [vmem:[%s204 + $0xf70] sm:$0xff] %v2764
        %3789 = vst [vmem:[%s204 + $0xf78] sm:$0xff] %v2765
        %3790 = vst [vmem:[%s204 + $0xf80] sm:$0xff] %v2766
        %3791 = vst [vmem:[%s204 + $0xf88] sm:$0xff] %v2767
        %3792 = vst [vmem:[%s204 + $0xf90] sm:$0xff] %v2768
        %3793 = vst [vmem:[%s204 + $0xf98] sm:$0xff] %v2769
        %3794 = vst [vmem:[%s204 + $0xfa0] sm:$0xff] %v2770
        %3795 = vst [vmem:[%s204 + $0xfa8] sm:$0xff] %v2771
        %3796 = vst [vmem:[%s204 + $0xfb0] sm:$0xff] %v2772
        %3797 = vst [vmem:[%s204 + $0xfb8] sm:$0xff] %v2773
        %3798 = vst [vmem:[%s204 + $0xfc0] sm:$0xff] %v2774
        %3799 = vst [vmem:[%s204 + $0xfc8] sm:$0xff] %v2775
        %3800 = vst [vmem:[%s204 + $0xfd0] sm:$0xff] %v2776
        %3801 = vst [vmem:[%s204 + $0xfd8] sm:$0xff] %v2777
        %3802 = vst [vmem:[%s204 + $0xfe0] sm:$0xff] %v2778
        %3803 = vst [vmem:[%s204 + $0xfe8] sm:$0xff] %v2779
        %3804 = vst [vmem:[%s204 + $0xff0] sm:$0xff] %v2780
        %3805 = vst [vmem:[%s204 + $0xff8] sm:$0xff] %v2781
        %3806 = vst [vmem:[%s204 + $0x1000] sm:$0xff] %v2782
        %3807 = vst [vmem:[%s204 + $0x1008] sm:$0xff] %v2783
        %3808 = vst [vmem:[%s204 + $0x1010] sm:$0xff] %v2784
        %3809 = vst [vmem:[%s204 + $0x1018] sm:$0xff] %v2785
        %3810 = vst [vmem:[%s204 + $0x1020] sm:$0xff] %v2786
        %3811 = vst [vmem:[%s204 + $0x1028] sm:$0xff] %v2787
        %3812 = vst [vmem:[%s204 + $0x1030] sm:$0xff] %v2788
        %3813 = vst [vmem:[%s204 + $0x1038] sm:$0xff] %v2789
        %3814 = vst [vmem:[%s204 + $0x1040] sm:$0xff] %v2790
        %3815 = vst [vmem:[%s204 + $0x1048] sm:$0xff] %v2791
        %3816 = vst [vmem:[%s204 + $0x1050] sm:$0xff] %v2792
        %3817 = vst [vmem:[%s204 + $0x1058] sm:$0xff] %v2793
        %3818 = vst [vmem:[%s204 + $0x1060] sm:$0xff] %v2794
        %3819 = vst [vmem:[%s204 + $0x1068] sm:$0xff] %v2795
        %3820 = vst [vmem:[%s204 + $0x1070] sm:$0xff] %v2796
        %3821 = vst [vmem:[%s204 + $0x1078] sm:$0xff] %v2797
        %3822 = vst [vmem:[%s204 + $0x1080] sm:$0xff] %v2798
        %3823 = vst [vmem:[%s204 + $0x1088] sm:$0xff] %v2799
        %3824 = vst [vmem:[%s204 + $0x1090] sm:$0xff] %v2800
        %3825 = vst [vmem:[%s204 + $0x1098] sm:$0xff] %v2801
        %3826 = vst [vmem:[%s204 + $0x10a0] sm:$0xff] %v2802
        %3827 = vst [vmem:[%s204 + $0x10a8] sm:$0xff] %v2803
        %3828 = vst [vmem:[%s204 + $0x10b0] sm:$0xff] %v2804
        %3829 = vst [vmem:[%s204 + $0x10b8] sm:$0xff] %v2805
        %3830 = vst [vmem:[%s204 + $0x10c0] sm:$0xff] %v2806
        %3831 = vst [vmem:[%s204 + $0x10c8] sm:$0xff] %v2807
        %3832 = vst [vmem:[%s204 + $0x10d0] sm:$0xff] %v2808
        %3833 = vst [vmem:[%s204 + $0x10d8] sm:$0xff] %v2809
        %3834 = vst [vmem:[%s204 + $0x10e0] sm:$0xff] %v2810
        %3835 = vst [vmem:[%s204 + $0x10e8] sm:$0xff] %v2811
        %3836 = vst [vmem:[%s204 + $0x10f0] sm:$0xff] %v2812
        %3837 = vst [vmem:[%s204 + $0x10f8] sm:$0xff] %v2813
        %3838 = vst [vmem:[%s204 + $0x1100] sm:$0xff] %v2814
        %3839 = vst [vmem:[%s204 + $0x1108] sm:$0xff] %v2815
        %3840 = vst [vmem:[%s204 + $0x1110] sm:$0xff] %v2816
        %3841 = vst [vmem:[%s204 + $0x1118] sm:$0xff] %v2817
        %3842 = vst [vmem:[%s204 + $0x1120] sm:$0xff] %v2818
        %3843 = vst [vmem:[%s204 + $0x1128] sm:$0xff] %v2819
        %3844 = vst [vmem:[%s204 + $0x1130] sm:$0xff] %v2820
        %3845 = vst [vmem:[%s204 + $0x1138] sm:$0xff] %v2821
        %3846 = vst [vmem:[%s204 + $0x1140] sm:$0xff] %v2822
        %3847 = vst [vmem:[%s204 + $0x1148] sm:$0xff] %v2823
        %3848 = vst [vmem:[%s204 + $0x1150] sm:$0xff] %v2824
        %3849 = vst [vmem:[%s204 + $0x1158] sm:$0xff] %v2825
        %3850 = vst [vmem:[%s204 + $0x1160] sm:$0xff] %v2826
        %3851 = vst [vmem:[%s204 + $0x1168] sm:$0xff] %v2827
        %3852 = vst [vmem:[%s204 + $0x1170] sm:$0xff] %v2828
        %3853 = vst [vmem:[%s204 + $0x1178] sm:$0xff] %v2829
        %3854 = vst [vmem:[%s204 + $0x1180] sm:$0xff] %v2830
        %3855 = vst [vmem:[%s204 + $0x1188] sm:$0xff] %v2831
        %3856 = vst [vmem:[%s204 + $0x1190] sm:$0xff] %v2832
        %3857 = vst [vmem:[%s204 + $0x1198] sm:$0xff] %v2833
        %3858 = vst [vmem:[%s204 + $0x11a0] sm:$0xff] %v2834
        %3859 = vst [vmem:[%s204 + $0x11a8] sm:$0xff] %v2835
        %3860 = vst [vmem:[%s204 + $0x11b0] sm:$0xff] %v2836
        %3861 = vst [vmem:[%s204 + $0x11b8] sm:$0xff] %v2837
        %3862 = vst [vmem:[%s204 + $0x11c0] sm:$0xff] %v2838
        %3863 = vst [vmem:[%s204 + $0x11c8] sm:$0xff] %v2839
        %3864 = vst [vmem:[%s204 + $0x11d0] sm:$0xff] %v2840
        %3865 = vst [vmem:[%s204 + $0x11d8] sm:$0xff] %v2841
        %3866 = vst [vmem:[%s204 + $0x11e0] sm:$0xff] %v2842
        %3867 = vst [vmem:[%s204 + $0x11e8] sm:$0xff] %v2843
        %3868 = vst [vmem:[%s204 + $0x11f0] sm:$0xff] %v2844
        %3869 = vst [vmem:[%s204 + $0x11f8] sm:$0xff] %v2845
        %3870 = vst [vmem:[%s204 + $0x1200] sm:$0xff] %v2846
        %3871 = vst [vmem:[%s204 + $0x1208] sm:$0xff] %v2847
        %3872 = vst [vmem:[%s204 + $0x1210] sm:$0xff] %v2848
        %3873 = vst [vmem:[%s204 + $0x1218] sm:$0xff] %v2849
        %3874 = vst [vmem:[%s204 + $0x1220] sm:$0xff] %v2850
        %3875 = vst [vmem:[%s204 + $0x1228] sm:$0xff] %v2851
        %3876 = vst [vmem:[%s204 + $0x1230] sm:$0xff] %v2852
        %3877 = vst [vmem:[%s204 + $0x1238] sm:$0xff] %v2853
        %3878 = vst [vmem:[%s204 + $0x1240] sm:$0xff] %v2854
        %3879 = vst [vmem:[%s204 + $0x1248] sm:$0xff] %v2855
        %3880 = vst [vmem:[%s204 + $0x1250] sm:$0xff] %v2856
        %3881 = vst [vmem:[%s204 + $0x1258] sm:$0xff] %v2857
        %3882 = vst [vmem:[%s204 + $0x1260] sm:$0xff] %v2858
        %3883 = vst [vmem:[%s204 + $0x1268] sm:$0xff] %v2859
        %3884 = vst [vmem:[%s204 + $0x1270] sm:$0xff] %v2860
        %3885 = vst [vmem:[%s204 + $0x1278] sm:$0xff] %v2861
        %3886 = vst [vmem:[%s204 + $0x1280] sm:$0xff] %v2862
        %3887 = vst [vmem:[%s204 + $0x1288] sm:$0xff] %v2863
        %3888 = vst [vmem:[%s204 + $0x1290] sm:$0xff] %v2864
        %3889 = vst [vmem:[%s204 + $0x1298] sm:$0xff] %v2865
        %3890 = vst [vmem:[%s204 + $0x12a0] sm:$0xff] %v2866
        %3891 = vst [vmem:[%s204 + $0x12a8] sm:$0xff] %v2867
        %3892 = vst [vmem:[%s204 + $0x12b0] sm:$0xff] %v2868
        %3893 = vst [vmem:[%s204 + $0x12b8] sm:$0xff] %v2869
        %3894 = vst [vmem:[%s204 + $0x12c0] sm:$0xff] %v2870
        %3895 = vst [vmem:[%s204 + $0x12c8] sm:$0xff] %v2871
        %3896 = vst [vmem:[%s204 + $0x12d0] sm:$0xff] %v2872
        %3897 = vst [vmem:[%s204 + $0x12d8] sm:$0xff] %v2873
        %3898 = vst [vmem:[%s204 + $0x12e0] sm:$0xff] %v2874
        %3899 = vst [vmem:[%s204 + $0x12e8] sm:$0xff] %v2875
        %3900 = vst [vmem:[%s204 + $0x12f0] sm:$0xff] %v2876
        %3901 = vst [vmem:[%s204 + $0x12f8] sm:$0xff] %v2877
        %3902 = vst [vmem:[%s204 + $0x1300] sm:$0xff] %v2878
        %3903 = vst [vmem:[%s204 + $0x1308] sm:$0xff] %v2879
        %3904 = vst [vmem:[%s204 + $0x1310] sm:$0xff] %v2880
        %3905 = vst [vmem:[%s204 + $0x1318] sm:$0xff] %v2881
        %3906 = vst [vmem:[%s204 + $0x1320] sm:$0xff] %v2882
        %3907 = vst [vmem:[%s204 + $0x1328] sm:$0xff] %v2883
        %3908 = vst [vmem:[%s204 + $0x1330] sm:$0xff] %v2884
        %3909 = vst [vmem:[%s204 + $0x1338] sm:$0xff] %v2885
        %3910 = vst [vmem:[%s204 + $0x1340] sm:$0xff] %v2886
        %3911 = vst [vmem:[%s204 + $0x1348] sm:$0xff] %v2887
        %3912 = vst [vmem:[%s204 + $0x1350] sm:$0xff] %v2888
        %3913 = vst [vmem:[%s204 + $0x1358] sm:$0xff] %v2889
        %3914 = vst [vmem:[%s204 + $0x1360] sm:$0xff] %v2890
        %3915 = vst [vmem:[%s204 + $0x1368] sm:$0xff] %v2891
        %3916 = vst [vmem:[%s204 + $0x1370] sm:$0xff] %v2892
        %3917 = vst [vmem:[%s204 + $0x1378] sm:$0xff] %v2893
        %3918 = vst [vmem:[%s204 + $0x1380] sm:$0xff] %v2894
        %3919 = vst [vmem:[%s204 + $0x1388] sm:$0xff] %v2895
        %3920 = vst [vmem:[%s204 + $0x1390] sm:$0xff] %v2896
        %3921 = vst [vmem:[%s204 + $0x1398] sm:$0xff] %v2897
        %3922 = vst [vmem:[%s204 + $0x13a0] sm:$0xff] %v2898
        %3923 = vst [vmem:[%s204 + $0x13a8] sm:$0xff] %v2899
        %3924 = vst [vmem:[%s204 + $0x13b0] sm:$0xff] %v2900
        %3925 = vst [vmem:[%s204 + $0x13b8] sm:$0xff] %v2901
        %3926 = vst [vmem:[%s204 + $0x13c0] sm:$0xff] %v2902
        %3927 = vst [vmem:[%s204 + $0x13c8] sm:$0xff] %v2903
        %3928 = vst [vmem:[%s204 + $0x13d0] sm:$0xff] %v2904
        %3929 = vst [vmem:[%s204 + $0x13d8] sm:$0xff] %v2905
        %3930 = vst [vmem:[%s204 + $0x13e0] sm:$0xff] %v2906
        %3931 = vst [vmem:[%s204 + $0x13e8] sm:$0xff] %v2907
        %3932 = vst [vmem:[%s204 + $0x13f0] sm:$0xff] %v2908
        %3933 = vst [vmem:[%s204 + $0x13f8] sm:$0xff] %v2909
        %3934 = vst [vmem:[%s204 + $0x1400] sm:$0xff] %v2910
        %3935 = vst [vmem:[%s204 + $0x1408] sm:$0xff] %v2911
        %3936 = vst [vmem:[%s204 + $0x1410] sm:$0xff] %v2912
        %3937 = vst [vmem:[%s204 + $0x1418] sm:$0xff] %v2913
        %3938 = vst [vmem:[%s204 + $0x1420] sm:$0xff] %v2914
        %3939 = vst [vmem:[%s204 + $0x1428] sm:$0xff] %v2915
        %3940 = vst [vmem:[%s204 + $0x1430] sm:$0xff] %v2916
        %3941 = vst [vmem:[%s204 + $0x1438] sm:$0xff] %v2917
        %3942 = vst [vmem:[%s204 + $0x1440] sm:$0xff] %v2918
        %3943 = vst [vmem:[%s204 + $0x1448] sm:$0xff] %v2919
        %3944 = vst [vmem:[%s204 + $0x1450] sm:$0xff] %v2920
        %3945 = vst [vmem:[%s204 + $0x1458] sm:$0xff] %v2921
        %3946 = vst [vmem:[%s204 + $0x1460] sm:$0xff] %v2922
        %3947 = vst [vmem:[%s204 + $0x1468] sm:$0xff] %v2923
        %3948 = vst [vmem:[%s204 + $0x1470] sm:$0xff] %v2924
        %3949 = vst [vmem:[%s204 + $0x1478] sm:$0xff] %v2925
        %3950 = vst [vmem:[%s204 + $0x1480] sm:$0xff] %v2926
        %3951 = vst [vmem:[%s204 + $0x1488] sm:$0xff] %v2927
        %3952 = vst [vmem:[%s204 + $0x1490] sm:$0xff] %v2928
        %3953 = vst [vmem:[%s204 + $0x1498] sm:$0xff] %v2929
        %3954 = vst [vmem:[%s204 + $0x14a0] sm:$0xff] %v2930
        %3955 = vst [vmem:[%s204 + $0x14a8] sm:$0xff] %v2931
        %3956 = vst [vmem:[%s204 + $0x14b0] sm:$0xff] %v2932
        %3957 = vst [vmem:[%s204 + $0x14b8] sm:$0xff] %v2933
        %3958 = vst [vmem:[%s204 + $0x14c0] sm:$0xff] %v2934
        %3959 = vst [vmem:[%s204 + $0x14c8] sm:$0xff] %v2935
        %3960 = vst [vmem:[%s204 + $0x14d0] sm:$0xff] %v2936
        %3961 = vst [vmem:[%s204 + $0x14d8] sm:$0xff] %v2937
        %3962 = vst [vmem:[%s204 + $0x14e0] sm:$0xff] %v2938
        %3963 = vst [vmem:[%s204 + $0x14e8] sm:$0xff] %v2939
        %3964 = vst [vmem:[%s204 + $0x14f0] sm:$0xff] %v2940
        %3965 = vst [vmem:[%s204 + $0x14f8] sm:$0xff] %v2941
        %3966 = vst [vmem:[%s204 + $0x1500] sm:$0xff] %v2942
        %3967 = vst [vmem:[%s204 + $0x1508] sm:$0xff] %v2943
        %3968 = vst [vmem:[%s204 + $0x1510] sm:$0xff] %v2944
        %3969 = vst [vmem:[%s204 + $0x1518] sm:$0xff] %v2945
        %3970 = vst [vmem:[%s204 + $0x1520] sm:$0xff] %v2946
        %3971 = vst [vmem:[%s204 + $0x1528] sm:$0xff] %v2947
        %3972 = vst [vmem:[%s204 + $0x1530] sm:$0xff] %v2948
        %3973 = vst [vmem:[%s204 + $0x1538] sm:$0xff] %v2949
        %3974 = vst [vmem:[%s204 + $0x1540] sm:$0xff] %v2950
        %3975 = vst [vmem:[%s204 + $0x1548] sm:$0xff] %v2951
        %3976 = vst [vmem:[%s204 + $0x1550] sm:$0xff] %v2952
        %3977 = vst [vmem:[%s204 + $0x1558] sm:$0xff] %v2953
        %3978 = vst [vmem:[%s204 + $0x1560] sm:$0xff] %v2954
        %3979 = vst [vmem:[%s204 + $0x1568] sm:$0xff] %v2955
        %3980 = vst [vmem:[%s204 + $0x1570] sm:$0xff] %v2956
        %3981 = vst [vmem:[%s204 + $0x1578] sm:$0xff] %v2957
        %3982 = vst [vmem:[%s204 + $0x1580] sm:$0xff] %v2958
        %3983 = vst [vmem:[%s204 + $0x1588] sm:$0xff] %v2959
        %3984 = vst [vmem:[%s204 + $0x1590] sm:$0xff] %v2960
        %3985 = vst [vmem:[%s204 + $0x1598] sm:$0xff] %v2961
        %3986 = vst [vmem:[%s204 + $0x15a0] sm:$0xff] %v2962
        %3987 = vst [vmem:[%s204 + $0x15a8] sm:$0xff] %v2963
        %3988 = vst [vmem:[%s204 + $0x15b0] sm:$0xff] %v2964
        %3989 = vst [vmem:[%s204 + $0x15b8] sm:$0xff] %v2965
        %3990 = vst [vmem:[%s204 + $0x15c0] sm:$0xff] %v2966
        %3991 = vst [vmem:[%s204 + $0x15c8] sm:$0xff] %v2967
        %3992 = vst [vmem:[%s204 + $0x15d0] sm:$0xff] %v2968
        %3993 = vst [vmem:[%s204 + $0x15d8] sm:$0xff] %v2969
        %3994 = vst [vmem:[%s204 + $0x15e0] sm:$0xff] %v2970
        %3995 = vst [vmem:[%s204 + $0x15e8] sm:$0xff] %v2971
        %3996 = vst [vmem:[%s204 + $0x15f0] sm:$0xff] %v2972
        %3997 = vst [vmem:[%s204 + $0x15f8] sm:$0xff] %v2973
        %3998 = vst [vmem:[%s204 + $0x1600] sm:$0xff] %v2974
        %3999 = vst [vmem:[%s204 + $0x1608] sm:$0xff] %v2975
        %4000 = vst [vmem:[%s204 + $0x1610] sm:$0xff] %v2976
        %4001 = vst [vmem:[%s204 + $0x1618] sm:$0xff] %v2977
        %4002 = vst [vmem:[%s204 + $0x1620] sm:$0xff] %v2978
        %4003 = vst [vmem:[%s204 + $0x1628] sm:$0xff] %v2979
        %4004 = vst [vmem:[%s204 + $0x1630] sm:$0xff] %v2980
        %4005 = vst [vmem:[%s204 + $0x1638] sm:$0xff] %v2981
        %4006 = vst [vmem:[%s204 + $0x1640] sm:$0xff] %v2982
        %4007 = vst [vmem:[%s204 + $0x1648] sm:$0xff] %v2983
        %4008 = vst [vmem:[%s204 + $0x1650] sm:$0xff] %v2984
        %4009 = vst [vmem:[%s204 + $0x1658] sm:$0xff] %v2985
        %4010 = vst [vmem:[%s204 + $0x1660] sm:$0xff] %v2986
        %4011 = vst [vmem:[%s204 + $0x1668] sm:$0xff] %v2987
        %4012 = vst [vmem:[%s204 + $0x1670] sm:$0xff] %v2988
        %4013 = vst [vmem:[%s204 + $0x1678] sm:$0xff] %v2989
        %4014 = vst [vmem:[%s204 + $0x1680] sm:$0xff] %v2990
        %4015 = vst [vmem:[%s204 + $0x1688] sm:$0xff] %v2991
        %4016 = vst [vmem:[%s204 + $0x1690] sm:$0xff] %v2992
        %4017 = vst [vmem:[%s204 + $0x1698] sm:$0xff] %v2993
        %4018 = vst [vmem:[%s204 + $0x16a0] sm:$0xff] %v2994
        %4019 = vst [vmem:[%s204 + $0x16a8] sm:$0xff] %v2995
        %4020 = vst [vmem:[%s204 + $0x16b0] sm:$0xff] %v2996
        %4021 = vst [vmem:[%s204 + $0x16b8] sm:$0xff] %v2997
        %4022 = vst [vmem:[%s204 + $0x16c0] sm:$0xff] %v2998
        %4023 = vst [vmem:[%s204 + $0x16c8] sm:$0xff] %v2999
        %4024 = vst [vmem:[%s204 + $0x16d0] sm:$0xff] %v3000
        %4025 = vst [vmem:[%s204 + $0x16d8] sm:$0xff] %v3001
        %4026 = vst [vmem:[%s204 + $0x16e0] sm:$0xff] %v3002
        %4027 = vst [vmem:[%s204 + $0x16e8] sm:$0xff] %v3003
        %4028 = vst [vmem:[%s204 + $0x16f0] sm:$0xff] %v3004
        %4029 = vst [vmem:[%s204 + $0x16f8] sm:$0xff] %v3005
        %4030 = vst [vmem:[%s204 + $0x1700] sm:$0xff] %v3006
        %4031 = vst [vmem:[%s204 + $0x1708] sm:$0xff] %v3007
        %4032 = vst [vmem:[%s204 + $0x1710] sm:$0xff] %v3008
        %4033 = vst [vmem:[%s204 + $0x1718] sm:$0xff] %v3009
        %4034 = vst [vmem:[%s204 + $0x1720] sm:$0xff] %v3010
        %4035 = vst [vmem:[%s204 + $0x1728] sm:$0xff] %v3011
        %4036 = vst [vmem:[%s204 + $0x1730] sm:$0xff] %v3012
        %4037 = vst [vmem:[%s204 + $0x1738] sm:$0xff] %v3013
        %4038 = vst [vmem:[%s204 + $0x1740] sm:$0xff] %v3014
        %4039 = vst [vmem:[%s204 + $0x1748] sm:$0xff] %v3015
        %4040 = vst [vmem:[%s204 + $0x1750] sm:$0xff] %v3016
        %4041 = vst [vmem:[%s204 + $0x1758] sm:$0xff] %v3017
        %4042 = vst [vmem:[%s204 + $0x1760] sm:$0xff] %v3018
        %4043 = vst [vmem:[%s204 + $0x1768] sm:$0xff] %v3019
        %4044 = vst [vmem:[%s204 + $0x1770] sm:$0xff] %v3020
        %4045 = vst [vmem:[%s204 + $0x1778] sm:$0xff] %v3021
        %4046 = vst [vmem:[%s204 + $0x1780] sm:$0xff] %v3022
        %4047 = vst [vmem:[%s204 + $0x1788] sm:$0xff] %v3023
        %4048 = vst [vmem:[%s204 + $0x1790] sm:$0xff] %v3024
        %4049 = vst [vmem:[%s204 + $0x1798] sm:$0xff] %v3025
        %4050 = vst [vmem:[%s204 + $0x17a0] sm:$0xff] %v3026
        %4051 = vst [vmem:[%s204 + $0x17a8] sm:$0xff] %v3027
        %4052 = vst [vmem:[%s204 + $0x17b0] sm:$0xff] %v3028
        %4053 = vst [vmem:[%s204 + $0x17b8] sm:$0xff] %v3029
        %4054 = vst [vmem:[%s204 + $0x17c0] sm:$0xff] %v3030
        %4055 = vst [vmem:[%s204 + $0x17c8] sm:$0xff] %v3031
        %4056 = vst [vmem:[%s204 + $0x17d0] sm:$0xff] %v3032
        %4057 = vst [vmem:[%s204 + $0x17d8] sm:$0xff] %v3033
        %4058 = vst [vmem:[%s204 + $0x17e0] sm:$0xff] %v3034
        %4059 = vst [vmem:[%s204 + $0x17e8] sm:$0xff] %v3035
        %4060 = vst [vmem:[%s204 + $0x17f0] sm:$0xff] %v3036
        %4061 = vst [vmem:[%s204 + $0x17f8] sm:$0xff] %v3037
        %4062 = vst [vmem:[%s204 + $0x1800] sm:$0xff] %v3038
        %4063 = vst [vmem:[%s204 + $0x1808] sm:$0xff] %v3039
        %4064 = vst [vmem:[%s204 + $0x1810] sm:$0xff] %v3040
        %4065 = vst [vmem:[%s204 + $0x1818] sm:$0xff] %v3041
        %4066 = vst [vmem:[%s204 + $0x1820] sm:$0xff] %v3042
        %4067 = vst [vmem:[%s204 + $0x1828] sm:$0xff] %v3043
        %4068 = vst [vmem:[%s204 + $0x1830] sm:$0xff] %v3044
        %4069 = vst [vmem:[%s204 + $0x1838] sm:$0xff] %v3045
        %4070 = vst [vmem:[%s204 + $0x1840] sm:$0xff] %v3046
        %4071 = vst [vmem:[%s204 + $0x1848] sm:$0xff] %v3047
        %4072 = vst [vmem:[%s204 + $0x1850] sm:$0xff] %v3048
        %4073 = vst [vmem:[%s204 + $0x1858] sm:$0xff] %v3049
        %4074 = vst [vmem:[%s204 + $0x1860] sm:$0xff] %v3050
        %4075 = vst [vmem:[%s204 + $0x1868] sm:$0xff] %v3051
        %4076 = vst [vmem:[%s204 + $0x1870] sm:$0xff] %v3052
        %4077 = vst [vmem:[%s204 + $0x1878] sm:$0xff] %v3053
        %4078 = vst [vmem:[%s204 + $0x1880] sm:$0xff] %v3054
        %4079 = vst [vmem:[%s204 + $0x1888] sm:$0xff] %v3055
        %4080 = vst [vmem:[%s204 + $0x1890] sm:$0xff] %v3056
        %4081 = vst [vmem:[%s204 + $0x1898] sm:$0xff] %v3057
        %4082 = vst [vmem:[%s204 + $0x18a0] sm:$0xff] %v3058
        %4083 = vst [vmem:[%s204 + $0x18a8] sm:$0xff] %v3059
        %4084 = vst [vmem:[%s204 + $0x18b0] sm:$0xff] %v3060
        %4085 = vst [vmem:[%s204 + $0x18b8] sm:$0xff] %v3061
        %4086 = vst [vmem:[%s204 + $0x18c0] sm:$0xff] %v3062
        %4087 = vst [vmem:[%s204 + $0x18c8] sm:$0xff] %v3063
        %4088 = vst [vmem:[%s204 + $0x18d0] sm:$0xff] %v3064
        %4089 = vst [vmem:[%s204 + $0x18d8] sm:$0xff] %v3065
        %4090 = vst [vmem:[%s204 + $0x18e0] sm:$0xff] %v3066
        %4091 = vst [vmem:[%s204 + $0x18e8] sm:$0xff] %v3067
        %4092 = vst [vmem:[%s204 + $0x18f0] sm:$0xff] %v3068
        %4093 = vst [vmem:[%s204 + $0x18f8] sm:$0xff] %v3069
        %4094 = vst [vmem:[%s204 + $0x1900] sm:$0xff] %v3070
        %4095 = vst [vmem:[%s204 + $0x1908] sm:$0xff] %v3071
        %4096 = vst [vmem:[%s204 + $0x1910] sm:$0xff] %v3072
        %4097 = vst [vmem:[%s204 + $0x1918] sm:$0xff] %v3073
        %4098 = vst [vmem:[%s204 + $0x1920] sm:$0xff] %v3074
        %4099 = vst [vmem:[%s204 + $0x1928] sm:$0xff] %v3075
        %4100 = vst [vmem:[%s204 + $0x1930] sm:$0xff] %v3076
        %4101 = vst [vmem:[%s204 + $0x1938] sm:$0xff] %v3077
        %4102 = vst [vmem:[%s204 + $0x1940] sm:$0xff] %v3078
        %4103 = vst [vmem:[%s204 + $0x1948] sm:$0xff] %v3079
        %4104 = vst [vmem:[%s204 + $0x1950] sm:$0xff] %v3080
        %4105 = vst [vmem:[%s204 + $0x1958] sm:$0xff] %v3081
        %4106 = vst [vmem:[%s204 + $0x1960] sm:$0xff] %v3082
        %4107 = vst [vmem:[%s204 + $0x1968] sm:$0xff] %v3083
        %4108 = vst [vmem:[%s204 + $0x1970] sm:$0xff] %v3084
        %4109 = vst [vmem:[%s204 + $0x1978] sm:$0xff] %v3085
        %4110 = vst [vmem:[%s204 + $0x1980] sm:$0xff] %v3086
        %4111 = vst [vmem:[%s204 + $0x1988] sm:$0xff] %v3087
        %4112 = vst [vmem:[%s204 + $0x1990] sm:$0xff] %v3088
        %4113 = vst [vmem:[%s204 + $0x1998] sm:$0xff] %v3089
        %4114 = vst [vmem:[%s204 + $0x19a0] sm:$0xff] %v3090
        %4115 = vst [vmem:[%s204 + $0x19a8] sm:$0xff] %v3091
        %4116 = vst [vmem:[%s204 + $0x19b0] sm:$0xff] %v3092
        %4117 = vst [vmem:[%s204 + $0x19b8] sm:$0xff] %v3093
        %4118 = vst [vmem:[%s204 + $0x19c0] sm:$0xff] %v3094
        %4119 = vst [vmem:[%s204 + $0x19c8] sm:$0xff] %v3095
        %4120 = vst [vmem:[%s204 + $0x19d0] sm:$0xff] %v3096
        %4121 = vst [vmem:[%s204 + $0x19d8] sm:$0xff] %v3097
        %4122 = vst [vmem:[%s204 + $0x19e0] sm:$0xff] %v3098
        %4123 = vst [vmem:[%s204 + $0x19e8] sm:$0xff] %v3099
        %4124 = vst [vmem:[%s204 + $0x19f0] sm:$0xff] %v3100
        %4125 = vst [vmem:[%s204 + $0x19f8] sm:$0xff] %v3101
        %4126 = vst [vmem:[%s204 + $0x1a00] sm:$0xff] %v3102
        %4127 = vst [vmem:[%s204 + $0x1a08] sm:$0xff] %v3103
        %4128 = vst [vmem:[%s204 + $0x1a10] sm:$0xff] %v3104
        %4129 = vst [vmem:[%s204 + $0x1a18] sm:$0xff] %v3105
        %4130 = vst [vmem:[%s204 + $0x1a20] sm:$0xff] %v3106
        %4131 = vst [vmem:[%s204 + $0x1a28] sm:$0xff] %v3107
        %4132 = vst [vmem:[%s204 + $0x1a30] sm:$0xff] %v3108
        %4133 = vst [vmem:[%s204 + $0x1a38] sm:$0xff] %v3109
        %4134 = vst [vmem:[%s204 + $0x1a40] sm:$0xff] %v3110
        %4135 = vst [vmem:[%s204 + $0x1a48] sm:$0xff] %v3111
        %4136 = vst [vmem:[%s204 + $0x1a50] sm:$0xff] %v3112
        %4137 = vst [vmem:[%s204 + $0x1a58] sm:$0xff] %v3113
        %4138 = vst [vmem:[%s204 + $0x1a60] sm:$0xff] %v3114
        %4139 = vst [vmem:[%s204 + $0x1a68] sm:$0xff] %v3115
        %4140 = vst [vmem:[%s204 + $0x1a70] sm:$0xff] %v3116
        %4141 = vst [vmem:[%s204 + $0x1a78] sm:$0xff] %v3117
        %4142 = vst [vmem:[%s204 + $0x1a80] sm:$0xff] %v3118
        %4143 = vst [vmem:[%s204 + $0x1a88] sm:$0xff] %v3119
        %4144 = vst [vmem:[%s204 + $0x1a90] sm:$0xff] %v3120
        %4145 = vst [vmem:[%s204 + $0x1a98] sm:$0xff] %v3121
        %4146 = vst [vmem:[%s204 + $0x1aa0] sm:$0xff] %v3122
        %4147 = vst [vmem:[%s204 + $0x1aa8] sm:$0xff] %v3123
        %4148 = vst [vmem:[%s204 + $0x1ab0] sm:$0xff] %v3124
        %4149 = vst [vmem:[%s204 + $0x1ab8] sm:$0xff] %v3125
        %4150 = vst [vmem:[%s204 + $0x1ac0] sm:$0xff] %v3126
        %4151 = vst [vmem:[%s204 + $0x1ac8] sm:$0xff] %v3127
        %4152 = vst [vmem:[%s204 + $0x1ad0] sm:$0xff] %v3128
        %4153 = vst [vmem:[%s204 + $0x1ad8] sm:$0xff] %v3129
        %4154 = vst [vmem:[%s204 + $0x1ae0] sm:$0xff] %v3130
        %4155 = vst [vmem:[%s204 + $0x1ae8] sm:$0xff] %v3131
        %4156 = vst [vmem:[%s204 + $0x1af0] sm:$0xff] %v3132
        %4157 = vst [vmem:[%s204 + $0x1af8] sm:$0xff] %v3133
        %4158 = vst [vmem:[%s204 + $0x1b00] sm:$0xff] %v3134
        %4159 = vst [vmem:[%s204 + $0x1b08] sm:$0xff] %v3135
        %4160 = vst [vmem:[%s204 + $0x1b10] sm:$0xff] %v3136
        %4161 = vst [vmem:[%s204 + $0x1b18] sm:$0xff] %v3137
        %4162 = vst [vmem:[%s204 + $0x1b20] sm:$0xff] %v3138
        %4163 = vst [vmem:[%s204 + $0x1b28] sm:$0xff] %v3139
        %4164 = vst [vmem:[%s204 + $0x1b30] sm:$0xff] %v3140
        %4165 = vst [vmem:[%s204 + $0x1b38] sm:$0xff] %v3141
        %4166 = vst [vmem:[%s204 + $0x1b40] sm:$0xff] %v3142
        %4167 = vst [vmem:[%s204 + $0x1b48] sm:$0xff] %v3143
        %4168 = vst [vmem:[%s204 + $0x1b50] sm:$0xff] %v3144
        %4169 = vst [vmem:[%s204 + $0x1b58] sm:$0xff] %v3145
        %4170 = vst [vmem:[%s204 + $0x1b60] sm:$0xff] %v3146
        %4171 = vst [vmem:[%s204 + $0x1b68] sm:$0xff] %v3147
        %4172 = vst [vmem:[%s204 + $0x1b70] sm:$0xff] %v3148
        %4173 = vst [vmem:[%s204 + $0x1b78] sm:$0xff] %v3149
        %4174 = vst [vmem:[%s204 + $0x1b80] sm:$0xff] %v3150
        %4175 = vst [vmem:[%s204 + $0x1b88] sm:$0xff] %v3151
        %4176 = vst [vmem:[%s204 + $0x1b90] sm:$0xff] %v3152
        %4177 = vst [vmem:[%s204 + $0x1b98] sm:$0xff] %v3153
        %4178 = vst [vmem:[%s204 + $0x1ba0] sm:$0xff] %v3154
        %4179 = vst [vmem:[%s204 + $0x1ba8] sm:$0xff] %v3155
        %4180 = vst [vmem:[%s204 + $0x1bb0] sm:$0xff] %v3156
        %4181 = vst [vmem:[%s204 + $0x1bb8] sm:$0xff] %v3157
        %4182 = vst [vmem:[%s204 + $0x1bc0] sm:$0xff] %v3158
        %4183 = vst [vmem:[%s204 + $0x1bc8] sm:$0xff] %v3159
        %4184 = vst [vmem:[%s204 + $0x1bd0] sm:$0xff] %v3160
        %4185 = vst [vmem:[%s204 + $0x1bd8] sm:$0xff] %v3161
        %4186 = vst [vmem:[%s204 + $0x1be0] sm:$0xff] %v3162
        %4187 = vst [vmem:[%s204 + $0x1be8] sm:$0xff] %v3163
        %4188 = vst [vmem:[%s204 + $0x1bf0] sm:$0xff] %v3164
        %4189 = vst [vmem:[%s204 + $0x1bf8] sm:$0xff] %v3165
        %4190 = vst [vmem:[%s204 + $0x1c00] sm:$0xff] %v3166
        %4191 = vst [vmem:[%s204 + $0x1c08] sm:$0xff] %v3167
        %4192 = vst [vmem:[%s204 + $0x1c10] sm:$0xff] %v3168
        %4193 = vst [vmem:[%s204 + $0x1c18] sm:$0xff] %v3169
        %4194 = vst [vmem:[%s204 + $0x1c20] sm:$0xff] %v3170
        %4195 = vst [vmem:[%s204 + $0x1c28] sm:$0xff] %v3171
        %4196 = vst [vmem:[%s204 + $0x1c30] sm:$0xff] %v3172
        %4197 = vst [vmem:[%s204 + $0x1c38] sm:$0xff] %v3173
        %4198 = vst [vmem:[%s204 + $0x1c40] sm:$0xff] %v3174
        %4199 = vst [vmem:[%s204 + $0x1c48] sm:$0xff] %v3175
        %4200 = vst [vmem:[%s204 + $0x1c50] sm:$0xff] %v3176
        %4201 = vst [vmem:[%s204 + $0x1c58] sm:$0xff] %v3177
        %4202 = vst [vmem:[%s204 + $0x1c60] sm:$0xff] %v3178
        %4203 = vst [vmem:[%s204 + $0x1c68] sm:$0xff] %v3179
        %4204 = vst [vmem:[%s204 + $0x1c70] sm:$0xff] %v3180
        %4205 = vst [vmem:[%s204 + $0x1c78] sm:$0xff] %v3181
        %4206 = vst [vmem:[%s204 + $0x1c80] sm:$0xff] %v3182
        %4207 = vst [vmem:[%s204 + $0x1c88] sm:$0xff] %v3183
        %4208 = vst [vmem:[%s204 + $0x1c90] sm:$0xff] %v3184
        %4209 = vst [vmem:[%s204 + $0x1c98] sm:$0xff] %v3185
        %4210 = vst [vmem:[%s204 + $0x1ca0] sm:$0xff] %v3186
        %4211 = vst [vmem:[%s204 + $0x1ca8] sm:$0xff] %v3187
        %4212 = vst [vmem:[%s204 + $0x1cb0] sm:$0xff] %v3188
        %4213 = vst [vmem:[%s204 + $0x1cb8] sm:$0xff] %v3189
        %4214 = vst [vmem:[%s204 + $0x1cc0] sm:$0xff] %v3190
        %4215 = vst [vmem:[%s204 + $0x1cc8] sm:$0xff] %v3191
        %4216 = vst [vmem:[%s204 + $0x1cd0] sm:$0xff] %v3192
        %4217 = vst [vmem:[%s204 + $0x1cd8] sm:$0xff] %v3193
        %4218 = vst [vmem:[%s204 + $0x1ce0] sm:$0xff] %v3194
        %4219 = vst [vmem:[%s204 + $0x1ce8] sm:$0xff] %v3195
        %4220 = vst [vmem:[%s204 + $0x1cf0] sm:$0xff] %v3196
        %4221 = vst [vmem:[%s204 + $0x1cf8] sm:$0xff] %v3197
        %4222 = vst [vmem:[%s204 + $0x1d00] sm:$0xff] %v3198
        %4223 = vst [vmem:[%s204 + $0x1d08] sm:$0xff] %v3199
        %4224 = vst [vmem:[%s204 + $0x1d10] sm:$0xff] %v3200
        %4225 = vst [vmem:[%s204 + $0x1d18] sm:$0xff] %v3201
        %4226 = vst [vmem:[%s204 + $0x1d20] sm:$0xff] %v3202
        %4227 = vst [vmem:[%s204 + $0x1d28] sm:$0xff] %v3203
        %4228 = vst [vmem:[%s204 + $0x1d30] sm:$0xff] %v3204
        %4229 = vst [vmem:[%s204 + $0x1d38] sm:$0xff] %v3205
        %4230 = vst [vmem:[%s204 + $0x1d40] sm:$0xff] %v3206
        %4231 = vst [vmem:[%s204 + $0x1d48] sm:$0xff] %v3207
        %4232 = vst [vmem:[%s204 + $0x1d50] sm:$0xff] %v3208
        %4233 = vst [vmem:[%s204 + $0x1d58] sm:$0xff] %v3209
        %4234 = vst [vmem:[%s204 + $0x1d60] sm:$0xff] %v3210
        %4235 = vst [vmem:[%s204 + $0x1d68] sm:$0xff] %v3211
        %4236 = vst [vmem:[%s204 + $0x1d70] sm:$0xff] %v3212
        %4237 = vst [vmem:[%s204 + $0x1d78] sm:$0xff] %v3213
        %4238 = vst [vmem:[%s204 + $0x1d80] sm:$0xff] %v3214
        %4239 = vst [vmem:[%s204 + $0x1d88] sm:$0xff] %v3215
        %4240 = vst [vmem:[%s204 + $0x1d90] sm:$0xff] %v3216
        %4241 = vst [vmem:[%s204 + $0x1d98] sm:$0xff] %v3217
        %4242 = vst [vmem:[%s204 + $0x1da0] sm:$0xff] %v3218
        %4243 = vst [vmem:[%s204 + $0x1da8] sm:$0xff] %v3219
        %4244 = vst [vmem:[%s204 + $0x1db0] sm:$0xff] %v3220
        %4245 = vst [vmem:[%s204 + $0x1db8] sm:$0xff] %v3221
        %4246 = vst [vmem:[%s204 + $0x1dc0] sm:$0xff] %v3222
        %4247 = vst [vmem:[%s204 + $0x1dc8] sm:$0xff] %v3223
        %4248 = vst [vmem:[%s204 + $0x1dd0] sm:$0xff] %v3224
        %4249 = vst [vmem:[%s204 + $0x1dd8] sm:$0xff] %v3225
        %4250 = vst [vmem:[%s204 + $0x1de0] sm:$0xff] %v3226
        %4251 = vst [vmem:[%s204 + $0x1de8] sm:$0xff] %v3227
        %4252 = vst [vmem:[%s204 + $0x1df0] sm:$0xff] %v3228
        %4253 = vst [vmem:[%s204 + $0x1df8] sm:$0xff] %v3229
        %4254 = vst [vmem:[%s204 + $0x1e00] sm:$0xff] %v3230
        %4255 = vst [vmem:[%s204 + $0x1e08] sm:$0xff] %v3231
        %4256 = vst [vmem:[%s204 + $0x1e10] sm:$0xff] %v3232
        %4257 = vst [vmem:[%s204 + $0x1e18] sm:$0xff] %v3233
        %4258 = vst [vmem:[%s204 + $0x1e20] sm:$0xff] %v3234
        %4259 = vst [vmem:[%s204 + $0x1e28] sm:$0xff] %v3235
        %4260 = vst [vmem:[%s204 + $0x1e30] sm:$0xff] %v3236
        %4261 = vst [vmem:[%s204 + $0x1e38] sm:$0xff] %v3237
        %4262 = vst [vmem:[%s204 + $0x1e40] sm:$0xff] %v3238
        %4263 = vst [vmem:[%s204 + $0x1e48] sm:$0xff] %v3239
        %4264 = vst [vmem:[%s204 + $0x1e50] sm:$0xff] %v3240
        %4265 = vst [vmem:[%s204 + $0x1e58] sm:$0xff] %v3241
        %4266 = vst [vmem:[%s204 + $0x1e60] sm:$0xff] %v3242
        %4267 = vst [vmem:[%s204 + $0x1e68] sm:$0xff] %v3243
        %4268 = vst [vmem:[%s204 + $0x1e70] sm:$0xff] %v3244
        %4269 = vst [vmem:[%s204 + $0x1e78] sm:$0xff] %v3245
        %4270 = vst [vmem:[%s204 + $0x1e80] sm:$0xff] %v3246
        %4271 = vst [vmem:[%s204 + $0x1e88] sm:$0xff] %v3247
        %4272 = vst [vmem:[%s204 + $0x1e90] sm:$0xff] %v3248
        %4273 = vst [vmem:[%s204 + $0x1e98] sm:$0xff] %v3249
        %4274 = vst [vmem:[%s204 + $0x1ea0] sm:$0xff] %v3250
        %4275 = vst [vmem:[%s204 + $0x1ea8] sm:$0xff] %v3251
        %4276 = vst [vmem:[%s204 + $0x1eb0] sm:$0xff] %v3252
        %4277 = vst [vmem:[%s204 + $0x1eb8] sm:$0xff] %v3253
        %4278 = vst [vmem:[%s204 + $0x1ec0] sm:$0xff] %v3254
        %4279 = vst [vmem:[%s204 + $0x1ec8] sm:$0xff] %v3255
        %4280 = vst [vmem:[%s204 + $0x1ed0] sm:$0xff] %v3256
        %4281 = vst [vmem:[%s204 + $0x1ed8] sm:$0xff] %v3257
        %4282 = vst [vmem:[%s204 + $0x1ee0] sm:$0xff] %v3258
        %4283 = vst [vmem:[%s204 + $0x1ee8] sm:$0xff] %v3259
        %4284 = vst [vmem:[%s204 + $0x1ef0] sm:$0xff] %v3260
        %4285 = vst [vmem:[%s204 + $0x1ef8] sm:$0xff] %v3261
        %4286 = vst [vmem:[%s204 + $0x1f00] sm:$0xff] %v3262
        %4287 = vst [vmem:[%s204 + $0x1f08] sm:$0xff] %v3263
        %4288 = vst [vmem:[%s204 + $0x1f10] sm:$0xff] %v3264
        %4289 = vst [vmem:[%s204 + $0x1f18] sm:$0xff] %v3265
        %4290 = vst [vmem:[%s204 + $0x1f20] sm:$0xff] %v3266
        %4291 = vst [vmem:[%s204 + $0x1f28] sm:$0xff] %v3267
        %4292 = vst [vmem:[%s204 + $0x1f30] sm:$0xff] %v3268
        %4293 = vst [vmem:[%s204 + $0x1f38] sm:$0xff] %v3269
        %4294 = vst [vmem:[%s204 + $0x1f40] sm:$0xff] %v3270
        %4295 = vst [vmem:[%s204 + $0x1f48] sm:$0xff] %v3271
        %4296 = vst [vmem:[%s204 + $0x1f50] sm:$0xff] %v3272
        %4297 = vst [vmem:[%s204 + $0x1f58] sm:$0xff] %v3273
        %4298 = vst [vmem:[%s204 + $0x1f60] sm:$0xff] %v3274
        %4299 = vst [vmem:[%s204 + $0x1f68] sm:$0xff] %v3275
        %4300 = vst [vmem:[%s204 + $0x1f70] sm:$0xff] %v3276
        %4301 = vst [vmem:[%s204 + $0x1f78] sm:$0xff] %v3277
        %4302 = vst [vmem:[%s204 + $0x1f80] sm:$0xff] %v3278
        %4303 = vst [vmem:[%s204 + $0x1f88] sm:$0xff] %v3279
        %4304 = vst [vmem:[%s204 + $0x1f90] sm:$0xff] %v3280
        %4305 = vst [vmem:[%s204 + $0x1f98] sm:$0xff] %v3281
        %4306 = vst [vmem:[%s204 + $0x1fa0] sm:$0xff] %v3282
        %4307 = vst [vmem:[%s204 + $0x1fa8] sm:$0xff] %v3283
        %4308 = vst [vmem:[%s204 + $0x1fb0] sm:$0xff] %v3284
        %4309 = vst [vmem:[%s204 + $0x1fb8] sm:$0xff] %v3285
        %4310 = vst [vmem:[%s204 + $0x1fc0] sm:$0xff] %v3286
        %4311 = vst [vmem:[%s204 + $0x1fc8] sm:$0xff] %v3287
        %4312 = vst [vmem:[%s204 + $0x1fd0] sm:$0xff] %v3288
        %4313 = vst [vmem:[%s204 + $0x1fd8] sm:$0xff] %v3289
        %4314 = vst [vmem:[%s204 + $0x1fe0] sm:$0xff] %v3290
        %4315 = vst [vmem:[%s204 + $0x1fe8] sm:$0xff] %v3291
        %4316 = vst [vmem:[%s204 + $0x1ff0] sm:$0xff] %v3292
        %4317 = vst [vmem:[%s204 + $0x1ff8] sm:$0xff] %v3293
        %s4318 = sand.u32 %s96, 1
        %s4319 = scalar_lea.sflag [#allocation4], %s4318
        %s4320 = sand.u32 %s96, 1
        %s4321 = smul.addr %s4320, 8192
        %s4322 = scalar_lea.vmem [#allocation7], %s4321
        // Predicated region
        $region37: #{tpu_custom_call.1} parent=27 // pred_check
          %p4323 = pneg %p106
        $region38: #{tpu_custom_call.1} parent=27 // pred_check_branch
          %4325 = sbr.rel (%p4323) target = $region40
        $region39: #{tpu_custom_call.1} parent=27 // pred_region
          %s4326 = smul.u32 1024, %s24
          %s4327 = ssub.s32 1280, %s4326
          %p4328 = scmp.lt.s32.totalorder %s4327, 1024
          %s4329 = scalar_select %p4328, %s4327, 1024
          %s4330 = smul.u32 128, %s4329
          %s4332 = ssub.s32 131072, %s4330
          %4333 = vsyncadd %s4319, %s4332
          %p4334 = scmp.ne.s32.totalorder 0, %s4330
          %s4335 = sadd.s32 %s25, %s4326
          %s4336 = smul.addr %s4335, 128
          %s4337 = scalar_lea.hbm %s2, %s4336
          %s4338 = smul.u32 8, %s4329
          %s4339 = sshll.u32 %s4322, 4
          %s4340 = int_to_ptr.vmem [resolvable:$true] %s4339
          %s4341 = sshll.u32 %s4338, 4
          %4345 = dma.vmem_to_hbm [thread:$0]  (%p4334), %s4340, %s4341, %s4337, %s4319, 128, 128, 8
        $region40: #{tpu_custom_call.1} parent=27 // pred_fallthru
          _
      $region28: #{tpu_custom_call.1} parent=5 // pred_fallthru
        _
      %p4346 = scmp.le.s32.totalorder 2, %s15
      // Predicated region
      $region41: #{tpu_custom_call.1} parent=5 // pred_check
        %p4347 = pneg %p4346
      $region42: #{tpu_custom_call.1} parent=5 // pred_check_branch
        %4349 = sbr.rel (%p4347) target = $region44
      $region43: #{tpu_custom_call.1} parent=5 // pred_region
        %s4350 = ssub.s32 %s15, 2
        // Predicated region
        $region45: #{tpu_custom_call.1} parent=43 // pred_check
          %p4351 = pneg %p112
        $region46: #{tpu_custom_call.1} parent=43 // pred_check_branch
          %4353 = sbr.rel (%p4351) target = $region48
        $region47: #{tpu_custom_call.1} parent=43 // pred_region
          %s4354 = sand.u32 %s97, 1
          %s4355 = scalar_lea.sflag [#allocation4], %s4354
          %s4356 = sand.u32 %s97, 1
          %s4357 = smul.addr %s4356, 8192
          %s4358 = scalar_lea.vmem [#allocation7], %s4357
          %4359 = dma.done %s4355, 131072
        $region48: #{tpu_custom_call.1} parent=43 // pred_fallthru
          _
      $region44: #{tpu_custom_call.1} parent=5 // pred_fallthru
        _
    $region6: #{tpu_custom_call.1} parent=1 // loop_footer
      %s19 = sadd.s32 1, %s15
    $region7: #{tpu_custom_call.1} parent=1 // loop_footer_branch
      %14 = sbr.rel target = $region3
    $region8: #{tpu_custom_call.1} parent=1 // loop_exit
      _
    %4360 = vsyncpa [#allocation3], 1
    %s4361 = scalar_lea.sflag [#allocation3], 1
    %4362 = vsyncpa %s4361, 1
    %4363 = vsyncpa [#allocation6], 1
    %4364 = vsyncpa [#allocation4], 1
    %s4365 = scalar_lea.sflag [#allocation4], 1
    %4366 = vsyncpa %s4365, 1

</llo_original>
